<compile_context>
chip_gen: v6e
topology: v6e:2x2x1
jax: 0.10.0
libtpu: 0.0.40
codegen_flags: <defaults>
</compile_context>

<pallas_src>
import functools

import jax
import jax.numpy as jnp
from jax.experimental import pallas as pl
from jax.experimental.pallas import tpu as pltpu

LANES = 128  # TPU lane width -> final-output channel padding target


def _round_up(x, m):
    return (x + m - 1) // m * m


# ---------------------------------------------------------------------------
# Fused kernel: conv1 (im2col matmul) + ReLU + in-kernel im2col of the VMEM
# resident intermediate + conv2 (ONE big matmul) + ReLU.
# ---------------------------------------------------------------------------
def make_fused_kernel(bb, oh1, ow1, kh2, kw2, oh2, ow2, k1):
    m1 = bb * oh1 * ow1
    m2 = bb * oh2 * ow2

    def kernel(p1_ref, w1_ref, b1_ref, w2_ref, b2_ref, o_ref, h1_ref, im2_ref):
        c1p = h1_ref.shape[-1]

        # ---- layer 1: single im2col matmul + bias + ReLU -------------------
        # p1_ref: (bb, oh1*ow1, k1)   w1_ref: (k1, c1p)
        h1 = jnp.dot(p1_ref[...].reshape(m1, k1), w1_ref[...],
                     preferred_element_type=jnp.float32)
        h1 = jnp.maximum(h1 + b1_ref[...], 0.0)
        # Intermediate stays resident in VMEM; padded channels (c1..c1p) are
        # exactly zero (zero weight columns + zero bias -> ReLU(0) = 0).
        h1_ref[...] = h1.reshape(bb, oh1, ow1, c1p)

        # ---- layer 2: in-kernel im2col (K = kh2*kw2*c1p) + ONE matmul ------
        # Build the (m2, K2) patch matrix in a VMEM scratch, then stream one
        # large-K matmul through the MXU (accumulation stays inside the MXU;
        # no per-tap result pops / VPU adds).
        for kh in range(kh2):
            for kw in range(kw2):
                t = kh * kw2 + kw
                patch = h1_ref[:, kh:kh + oh2, kw:kw + ow2, :]
                im2_ref[:, t * c1p:(t + 1) * c1p] = patch.reshape(m2, c1p)

        out = jnp.dot(im2_ref[...], w2_ref[...],
                      preferred_element_type=jnp.float32)
        out = jnp.maximum(out + b2_ref[...], 0.0)
        o_ref[...] = out.reshape(o_ref.shape)

    return kernel


# ---------------------------------------------------------------------------
# One-time parameter preparation (hoisted out of the hot path).
# ---------------------------------------------------------------------------
def prepare_params(params):
    """params: [(w1 OIHW, b1), (w2 OIHW, b2)] -> padded kernel layouts."""
    (w1, b1), (w2, b2) = params
    c1, cin1, kh1, kw1 = w1.shape
    c2, cin2, kh2, kw2 = w2.shape
    assert cin2 == c1

    k1 = cin1 * kh1 * kw1            # layer-1 contraction (im2col patch len)
    c1p = _round_up(c1, 32)          # intermediate channels: pad 20 -> 32
    c2p = _round_up(c2, LANES)       # output channels -> lane-dense (128)
    k2 = kh2 * kw2 * c1p             # layer-2 contraction (in-kernel im2col)

    # layer-1 weight: OIHW -> (cin, kh, kw, cout) to match the channel-major
    # patch ordering of lax.conv_general_dilated_patches (cin == 1 here so
    # the ordering is trivially consistent anyway).
    w1p = jnp.transpose(w1, (1, 2, 3, 0)).reshape(k1, c1)
    w1p = jnp.pad(w1p, ((0, 0), (0, c1p - c1))).astype(jnp.float32)
    b1p = jnp.pad(b1, (0, c1p - c1)).reshape(1, c1p).astype(jnp.float32)

    # layer-2 weight: OIHW -> (kh, kw, cin_padded, cout_padded) flattened to
    # (kh*kw*c1p, c2p); matches the kernel's (kh, kw, channel) column order.
    w2p = jnp.transpose(w2, (2, 3, 1, 0))
    w2p = jnp.pad(w2p, ((0, 0), (0, 0), (0, c1p - cin2), (0, c2p - c2)))
    w2p = w2p.reshape(k2, c2p).astype(jnp.float32)
    b2p = jnp.pad(b2, (0, c2p - c2)).reshape(1, c2p).astype(jnp.float32)

    meta = dict(kh1=kh1, kw1=kw1, cin1=cin1, c1=c1, c2=c2,
                kh2=kh2, kw2=kw2, k1=k1, k2=k2, c1p=c1p, c2p=c2p)
    return (w1p, b1p, w2p, b2p), meta


# ---------------------------------------------------------------------------
# Forward: one fused pallas_call; only a single im2col HLO and the final
# layout fixup remain outside the kernel.
# ---------------------------------------------------------------------------
def sequential_forward(x_nchw, prepped, meta, batch_block=None):
    w1p, b1p, w2p, b2p = prepped
    kh1, kw1, cin1 = meta["kh1"], meta["kw1"], meta["cin1"]
    kh2, kw2 = meta["kh2"], meta["kw2"]
    k1, k2, c1p, c2p, c2 = (meta["k1"], meta["k2"], meta["c1p"],
                            meta["c2p"], meta["c2"])

    n, cin, h, w = x_nchw.shape
    assert cin == cin1
    oh1, ow1 = h - kh1 + 1, w - kw1 + 1
    oh2, ow2 = oh1 - kh2 + 1, ow1 - kw2 + 1

    # Default: fold the whole batch into the matmul M dimension (one grid
    # step -> best on single-TC v5e/v6e).  Pass batch_block=1 to keep a
    # "parallel" batch axis for v7x megacore sharding.
    bb = n if batch_block is None else min(batch_block, n)
    assert n % bb == 0, "batch must be divisible by batch_block"

    # Layer-1 im2col as ONE XLA op (replaces 25 slice + concat + pad HLOs).
    # HIGHEST precision keeps the identity-filter gather exact in f32.
    x_nhwc = jnp.transpose(x_nchw, (0, 2, 3, 1)).astype(jnp.float32)
    patches1 = jax.lax.conv_general_dilated_patches(
        x_nhwc, filter_shape=(kh1, kw1), window_strides=(1, 1),
        padding='VALID', dimension_numbers=('NHWC', 'HWIO', 'NHWC'),
        precision=jax.lax.Precision.HIGHEST)
    patches1 = patches1.reshape(n, oh1 * ow1, k1)

    kernel = make_fused_kernel(bb, oh1, ow1, kh2, kw2, oh2, ow2, k1)

    flops = 2 * n * (oh1 * ow1 * k1 * c1p + oh2 * ow2 * k2 * c2p)
    bytes_accessed = 4 * (patches1.size + w1p.size + b1p.size + w2p.size
                          + b2p.size + n * oh2 * ow2 * c2p)

    out = pl.pallas_call(
        kernel,
        out_shape=jax.ShapeDtypeStruct((n, oh2 * ow2, c2p), jnp.float32),
        grid_spec=pltpu.PrefetchScalarGridSpec(
            num_scalar_prefetch=0,
            grid=(n // bb,),
            in_specs=[
                pl.BlockSpec((bb, oh1 * ow1, k1), lambda i: (i, 0, 0)),
                pl.BlockSpec((k1, c1p), lambda i: (0, 0)),
                pl.BlockSpec((1, c1p), lambda i: (0, 0)),
                pl.BlockSpec((k2, c2p), lambda i: (0, 0)),
                pl.BlockSpec((1, c2p), lambda i: (0, 0)),
            ],
            out_specs=pl.BlockSpec((bb, oh2 * ow2, c2p), lambda i: (i, 0, 0)),
            scratch_shapes=[
                pltpu.VMEM((bb, oh1, ow1, c1p), jnp.float32),      # h1
                pltpu.VMEM((bb * oh2 * ow2, k2), jnp.float32),     # im2col
            ],
        ),
        compiler_params=pltpu.CompilerParams(
            dimension_semantics=("parallel",),
        ),
        cost_estimate=pl.CostEstimate(flops=flops, transcendentals=0,
                                      bytes_accessed=bytes_accessed),
    )(patches1, w1p, b1p, w2p, b2p)

    # Lane-dense (n, oh2*ow2, 128) -> NCHW (n, c2, oh2, ow2).
    out = out[:, :, :c2].reshape(n, oh2, ow2, c2)
    return jnp.transpose(out, (0, 3, 1, 2))


# ---------------------------------------------------------------------------
# Reference / init helpers.
# ---------------------------------------------------------------------------
def init_conv_params(key, cout, cin, k):
    kw_, kb_ = jax.random.split(key)
    bound = 1.0 / jnp.sqrt(cin * k * k)
    w = jax.random.uniform(kw_, (cout, cin, k, k), jnp.float32, -bound, bound)
    b = jax.random.uniform(kb_, (cout,), jnp.float32, -bound, bound)
    return w, b


def reference_forward(x_nchw, params):
    x = jnp.transpose(x_nchw, (0, 2, 3, 1))
    for (w_oihw, b) in params:
        w_hwio = jnp.transpose(w_oihw, (2, 3, 1, 0))
        x = jax.lax.conv_general_dilated(
            x, w_hwio, window_strides=(1, 1), padding='VALID',
            dimension_numbers=('NHWC', 'HWIO', 'NHWC'),
            precision=jax.lax.Precision.HIGHEST)
        x = jnp.maximum(x + b[None, None, None, :], 0.0)
    return jnp.transpose(x, (0, 3, 1, 2))


if __name__ == "__main__":
    key = jax.random.PRNGKey(0)
    kx, k1, k2 = jax.random.split(key, 3)

    # Input matching Conv2d(1, 20, 5): NCHW = (2, 1, 16, 16)
    x = jax.random.normal(kx, (2, 1, 16, 16), dtype=jnp.float32)

    params = [
        init_conv_params(k1, cout=20, cin=1, k=5),    # Conv2d(1, 20, 5)
        init_conv_params(k2, cout=64, cin=20, k=5),   # Conv2d(20, 64, 5)
    ]

    # One-time parameter prep (transposes / padding hoisted off the hot path).
    prepped, meta = prepare_params(params)

    fwd = jax.jit(functools.partial(sequential_forward, meta=meta))
    out = jax.block_until_ready(fwd(x, prepped))
    assert out.shape == (2, 64, 8, 8), out.shape

    ref = jax.block_until_ready(reference_forward(x, params))
    err = float(jnp.max(jnp.abs(out - ref)))
    if err > 1e-4:
        raise AssertionError(f"mismatch vs reference, max abs err = {err}")

    print("KERNEL_OK")
</pallas_src>

<mosaic_0001>
module attributes {stable_mosaic.version = 11 : i64} {
  func.func @kernel(%arg0: i32, %arg1: memref<2x144x25xf32, #tpu.memory_space<vmem>>, %arg2: memref<25x32xf32, #tpu.memory_space<vmem>>, %arg3: memref<1x32xf32, #tpu.memory_space<vmem>>, %arg4: memref<800x128xf32, #tpu.memory_space<vmem>>, %arg5: memref<1x128xf32, #tpu.memory_space<vmem>>, %arg6: memref<2x64x128xf32, #tpu.memory_space<vmem>>, %arg7: memref<2x12x12x32xf32, #tpu.memory_space<vmem>>, %arg8: memref<128x800xf32, #tpu.memory_space<vmem>>) attributes {dimension_semantics = [#tpu.dimension_semantics<parallel>], iteration_bounds = array<i64: 1>, scalar_prefetch = 0 : i64, scratch_operands = 2 : i64, tpu.core_type = #tpu.core_type<tc>, window_params = [{transform_indices = @transform_0, window_bounds = array<i64: 2, 144, 25>}, {pipeline_mode = #tpu.pipeline_mode<synchronous>, transform_indices = @transform_1, window_bounds = array<i64: 25, 32>}, {pipeline_mode = #tpu.pipeline_mode<synchronous>, transform_indices = @transform_2, window_bounds = array<i64: 1, 32>}, {pipeline_mode = #tpu.pipeline_mode<synchronous>, transform_indices = @transform_3, window_bounds = array<i64: 800, 128>}, {pipeline_mode = #tpu.pipeline_mode<synchronous>, transform_indices = @transform_4, window_bounds = array<i64: 1, 128>}, {transform_indices = @transform_5, window_bounds = array<i64: 2, 64, 128>}]} {
    %c0 = arith.constant 0 : index
    %c0_0 = arith.constant 0 : index
    %c0_1 = arith.constant 0 : index
    %0 = vector.load %arg1[%c0, %c0_0, %c0_1] : memref<2x144x25xf32, #tpu.memory_space<vmem>>, vector<2x144x25xf32>
    %1 = vector.shape_cast %0 : vector<2x144x25xf32> to vector<288x25xf32>
    %c0_2 = arith.constant 0 : index
    %c0_3 = arith.constant 0 : index
    %2 = vector.load %arg2[%c0_2, %c0_3] : memref<25x32xf32, #tpu.memory_space<vmem>>, vector<25x32xf32>
    %cst = arith.constant dense<0.000000e+00> : vector<288x32xf32>
    %3 = tpu.matmul %1, %2, %cst {dimension_numbers = #tpu.dot_dimension_numbers<[1], [0], [0], [1], [0, 0, 1, 1], [], []>} : vector<288x25xf32>, vector<25x32xf32>, vector<288x32xf32> -> vector<288x32xf32>
    %c0_4 = arith.constant 0 : index
    %c0_5 = arith.constant 0 : index
    %4 = vector.load %arg3[%c0_4, %c0_5] : memref<1x32xf32, #tpu.memory_space<vmem>>, vector<1x32xf32>
    %5 = vector.broadcast %4 : vector<1x32xf32> to vector<288x32xf32>
    %6 = arith.addf %3, %5 : vector<288x32xf32>
    %cst_6 = arith.constant 0.000000e+00 : f32
    %7 = vector.broadcast %cst_6 : f32 to vector<288x32xf32>
    %8 = arith.maximumf %6, %7 : vector<288x32xf32>
    %9 = vector.shape_cast %8 : vector<288x32xf32> to vector<2x12x12x32xf32>
    %c0_7 = arith.constant 0 : index
    %c0_8 = arith.constant 0 : index
    %c0_9 = arith.constant 0 : index
    %c0_10 = arith.constant 0 : index
    %10 = vector.load %arg7[%c0_7, %c0_8, %c0_9, %c0_10] : memref<2x12x12x32xf32, #tpu.memory_space<vmem>>, vector<2x12x12x32xf32>
    tpu.vector_store %arg7[%c0_7, %c0_8, %c0_9, %c0_10], %9 {strides = array<i32>} : memref<2x12x12x32xf32, #tpu.memory_space<vmem>>, vector<2x12x12x32xf32>,
    %c0_11 = arith.constant 0 : index
    %c0_12 = arith.constant 0 : index
    %c0_13 = arith.constant 0 : index
    %c0_14 = arith.constant 0 : index
    %11 = vector.load %arg7[%c0_11, %c0_12, %c0_13, %c0_14] : memref<2x12x12x32xf32, #tpu.memory_space<vmem>>, vector<2x8x8x32xf32>
    %12 = vector.shape_cast %11 : vector<2x8x8x32xf32> to vector<128x32xf32>
    %c0_15 = arith.constant 0 : index
    %c0_16 = arith.constant 0 : index
    %13 = vector.load %arg8[%c0_15, %c0_16] : memref<128x800xf32, #tpu.memory_space<vmem>>, vector<128x32xf32>
    tpu.vector_store %arg8[%c0_15, %c0_16], %12 {strides = array<i32>} : memref<128x800xf32, #tpu.memory_space<vmem>>, vector<128x32xf32>,
    %c0_17 = arith.constant 0 : index
    %c0_18 = arith.constant 0 : index
    %c1 = arith.constant 1 : index
    %c0_19 = arith.constant 0 : index
    %14 = vector.load %arg7[%c0_17, %c0_18, %c1, %c0_19] : memref<2x12x12x32xf32, #tpu.memory_space<vmem>>, vector<2x8x8x32xf32>
    %15 = vector.shape_cast %14 : vector<2x8x8x32xf32> to vector<128x32xf32>
    %c0_20 = arith.constant 0 : index
    %c32 = arith.constant 32 : index
    %16 = vector.load %arg8[%c0_20, %c32] : memref<128x800xf32, #tpu.memory_space<vmem>>, vector<128x32xf32>
    tpu.vector_store %arg8[%c0_20, %c32], %15 {strides = array<i32>} : memref<128x800xf32, #tpu.memory_space<vmem>>, vector<128x32xf32>,
    %c0_21 = arith.constant 0 : index
    %c0_22 = arith.constant 0 : index
    %c2 = arith.constant 2 : index
    %c0_23 = arith.constant 0 : index
    %17 = vector.load %arg7[%c0_21, %c0_22, %c2, %c0_23] : memref<2x12x12x32xf32, #tpu.memory_space<vmem>>, vector<2x8x8x32xf32>
    %18 = vector.shape_cast %17 : vector<2x8x8x32xf32> to vector<128x32xf32>
    %c0_24 = arith.constant 0 : index
    %c64 = arith.constant 64 : index
    %19 = vector.load %arg8[%c0_24, %c64] : memref<128x800xf32, #tpu.memory_space<vmem>>, vector<128x32xf32>
    tpu.vector_store %arg8[%c0_24, %c64], %18 {strides = array<i32>} : memref<128x800xf32, #tpu.memory_space<vmem>>, vector<128x32xf32>,
    %c0_25 = arith.constant 0 : index
    %c0_26 = arith.constant 0 : index
    %c3 = arith.constant 3 : index
    %c0_27 = arith.constant 0 : index
    %20 = vector.load %arg7[%c0_25, %c0_26, %c3, %c0_27] : memref<2x12x12x32xf32, #tpu.memory_space<vmem>>, vector<2x8x8x32xf32>
    %21 = vector.shape_cast %20 : vector<2x8x8x32xf32> to vector<128x32xf32>
    %c0_28 = arith.constant 0 : index
    %c96 = arith.constant 96 : index
    %22 = vector.load %arg8[%c0_28, %c96] : memref<128x800xf32, #tpu.memory_space<vmem>>, vector<128x32xf32>
    tpu.vector_store %arg8[%c0_28, %c96], %21 {strides = array<i32>} : memref<128x800xf32, #tpu.memory_space<vmem>>, vector<128x32xf32>,
    %c0_29 = arith.constant 0 : index
    %c0_30 = arith.constant 0 : index
    %c4 = arith.constant 4 : index
    %c0_31 = arith.constant 0 : index
    %23 = vector.load %arg7[%c0_29, %c0_30, %c4, %c0_31] : memref<2x12x12x32xf32, #tpu.memory_space<vmem>>, vector<2x8x8x32xf32>
    %24 = vector.shape_cast %23 : vector<2x8x8x32xf32> to vector<128x32xf32>
    %c0_32 = arith.constant 0 : index
    %c128 = arith.constant 128 : index
    %25 = vector.load %arg8[%c0_32, %c128] : memref<128x800xf32, #tpu.memory_space<vmem>>, vector<128x32xf32>
    tpu.vector_store %arg8[%c0_32, %c128], %24 {strides = array<i32>} : memref<128x800xf32, #tpu.memory_space<vmem>>, vector<128x32xf32>,
    %c0_33 = arith.constant 0 : index
    %c1_34 = arith.constant 1 : index
    %c0_35 = arith.constant 0 : index
    %c0_36 = arith.constant 0 : index
    %26 = vector.load %arg7[%c0_33, %c1_34, %c0_35, %c0_36] : memref<2x12x12x32xf32, #tpu.memory_space<vmem>>, vector<2x8x8x32xf32>
    %27 = vector.shape_cast %26 : vector<2x8x8x32xf32> to vector<128x32xf32>
    %c0_37 = arith.constant 0 : index
    %c160 = arith.constant 160 : index
    %28 = vector.load %arg8[%c0_37, %c160] : memref<128x800xf32, #tpu.memory_space<vmem>>, vector<128x32xf32>
    tpu.vector_store %arg8[%c0_37, %c160], %27 {strides = array<i32>} : memref<128x800xf32, #tpu.memory_space<vmem>>, vector<128x32xf32>,
    %c0_38 = arith.constant 0 : index
    %c1_39 = arith.constant 1 : index
    %c1_40 = arith.constant 1 : index
    %c0_41 = arith.constant 0 : index
    %29 = vector.load %arg7[%c0_38, %c1_39, %c1_40, %c0_41] : memref<2x12x12x32xf32, #tpu.memory_space<vmem>>, vector<2x8x8x32xf32>
    %30 = vector.shape_cast %29 : vector<2x8x8x32xf32> to vector<128x32xf32>
    %c0_42 = arith.constant 0 : index
    %c192 = arith.constant 192 : index
    %31 = vector.load %arg8[%c0_42, %c192] : memref<128x800xf32, #tpu.memory_space<vmem>>, vector<128x32xf32>
    tpu.vector_store %arg8[%c0_42, %c192], %30 {strides = array<i32>} : memref<128x800xf32, #tpu.memory_space<vmem>>, vector<128x32xf32>,
    %c0_43 = arith.constant 0 : index
    %c1_44 = arith.constant 1 : index
    %c2_45 = arith.constant 2 : index
    %c0_46 = arith.constant 0 : index
    %32 = vector.load %arg7[%c0_43, %c1_44, %c2_45, %c0_46] : memref<2x12x12x32xf32, #tpu.memory_space<vmem>>, vector<2x8x8x32xf32>
    %33 = vector.shape_cast %32 : vector<2x8x8x32xf32> to vector<128x32xf32>
    %c0_47 = arith.constant 0 : index
    %c224 = arith.constant 224 : index
    %34 = vector.load %arg8[%c0_47, %c224] : memref<128x800xf32, #tpu.memory_space<vmem>>, vector<128x32xf32>
    tpu.vector_store %arg8[%c0_47, %c224], %33 {strides = array<i32>} : memref<128x800xf32, #tpu.memory_space<vmem>>, vector<128x32xf32>,
    %c0_48 = arith.constant 0 : index
    %c1_49 = arith.constant 1 : index
    %c3_50 = arith.constant 3 : index
    %c0_51 = arith.constant 0 : index
    %35 = vector.load %arg7[%c0_48, %c1_49, %c3_50, %c0_51] : memref<2x12x12x32xf32, #tpu.memory_space<vmem>>, vector<2x8x8x32xf32>
    %36 = vector.shape_cast %35 : vector<2x8x8x32xf32> to vector<128x32xf32>
    %c0_52 = arith.constant 0 : index
    %c256 = arith.constant 256 : index
    %37 = vector.load %arg8[%c0_52, %c256] : memref<128x800xf32, #tpu.memory_space<vmem>>, vector<128x32xf32>
    tpu.vector_store %arg8[%c0_52, %c256], %36 {strides = array<i32>} : memref<128x800xf32, #tpu.memory_space<vmem>>, vector<128x32xf32>,
    %c0_53 = arith.constant 0 : index
    %c1_54 = arith.constant 1 : index
    %c4_55 = arith.constant 4 : index
    %c0_56 = arith.constant 0 : index
    %38 = vector.load %arg7[%c0_53, %c1_54, %c4_55, %c0_56] : memref<2x12x12x32xf32, #tpu.memory_space<vmem>>, vector<2x8x8x32xf32>
    %39 = vector.shape_cast %38 : vector<2x8x8x32xf32> to vector<128x32xf32>
    %c0_57 = arith.constant 0 : index
    %c288 = arith.constant 288 : index
    %40 = vector.load %arg8[%c0_57, %c288] : memref<128x800xf32, #tpu.memory_space<vmem>>, vector<128x32xf32>
    tpu.vector_store %arg8[%c0_57, %c288], %39 {strides = array<i32>} : memref<128x800xf32, #tpu.memory_space<vmem>>, vector<128x32xf32>,
    %c0_58 = arith.constant 0 : index
    %c2_59 = arith.constant 2 : index
    %c0_60 = arith.constant 0 : index
    %c0_61 = arith.constant 0 : index
    %41 = vector.load %arg7[%c0_58, %c2_59, %c0_60, %c0_61] : memref<2x12x12x32xf32, #tpu.memory_space<vmem>>, vector<2x8x8x32xf32>
    %42 = vector.shape_cast %41 : vector<2x8x8x32xf32> to vector<128x32xf32>
    %c0_62 = arith.constant 0 : index
    %c320 = arith.constant 320 : index
    %43 = vector.load %arg8[%c0_62, %c320] : memref<128x800xf32, #tpu.memory_space<vmem>>, vector<128x32xf32>
    tpu.vector_store %arg8[%c0_62, %c320], %42 {strides = array<i32>} : memref<128x800xf32, #tpu.memory_space<vmem>>, vector<128x32xf32>,
    %c0_63 = arith.constant 0 : index
    %c2_64 = arith.constant 2 : index
    %c1_65 = arith.constant 1 : index
    %c0_66 = arith.constant 0 : index
    %44 = vector.load %arg7[%c0_63, %c2_64, %c1_65, %c0_66] : memref<2x12x12x32xf32, #tpu.memory_space<vmem>>, vector<2x8x8x32xf32>
    %45 = vector.shape_cast %44 : vector<2x8x8x32xf32> to vector<128x32xf32>
    %c0_67 = arith.constant 0 : index
    %c352 = arith.constant 352 : index
    %46 = vector.load %arg8[%c0_67, %c352] : memref<128x800xf32, #tpu.memory_space<vmem>>, vector<128x32xf32>
    tpu.vector_store %arg8[%c0_67, %c352], %45 {strides = array<i32>} : memref<128x800xf32, #tpu.memory_space<vmem>>, vector<128x32xf32>,
    %c0_68 = arith.constant 0 : index
    %c2_69 = arith.constant 2 : index
    %c2_70 = arith.constant 2 : index
    %c0_71 = arith.constant 0 : index
    %47 = vector.load %arg7[%c0_68, %c2_69, %c2_70, %c0_71] : memref<2x12x12x32xf32, #tpu.memory_space<vmem>>, vector<2x8x8x32xf32>
    %48 = vector.shape_cast %47 : vector<2x8x8x32xf32> to vector<128x32xf32>
    %c0_72 = arith.constant 0 : index
    %c384 = arith.constant 384 : index
    %49 = vector.load %arg8[%c0_72, %c384] : memref<128x800xf32, #tpu.memory_space<vmem>>, vector<128x32xf32>
    tpu.vector_store %arg8[%c0_72, %c384], %48 {strides = array<i32>} : memref<128x800xf32, #tpu.memory_space<vmem>>, vector<128x32xf32>,
    %c0_73 = arith.constant 0 : index
    %c2_74 = arith.constant 2 : index
    %c3_75 = arith.constant 3 : index
    %c0_76 = arith.constant 0 : index
    %50 = vector.load %arg7[%c0_73, %c2_74, %c3_75, %c0_76] : memref<2x12x12x32xf32, #tpu.memory_space<vmem>>, vector<2x8x8x32xf32>
    %51 = vector.shape_cast %50 : vector<2x8x8x32xf32> to vector<128x32xf32>
    %c0_77 = arith.constant 0 : index
    %c416 = arith.constant 416 : index
    %52 = vector.load %arg8[%c0_77, %c416] : memref<128x800xf32, #tpu.memory_space<vmem>>, vector<128x32xf32>
    tpu.vector_store %arg8[%c0_77, %c416], %51 {strides = array<i32>} : memref<128x800xf32, #tpu.memory_space<vmem>>, vector<128x32xf32>,
    %c0_78 = arith.constant 0 : index
    %c2_79 = arith.constant 2 : index
    %c4_80 = arith.constant 4 : index
    %c0_81 = arith.constant 0 : index
    %53 = vector.load %arg7[%c0_78, %c2_79, %c4_80, %c0_81] : memref<2x12x12x32xf32, #tpu.memory_space<vmem>>, vector<2x8x8x32xf32>
    %54 = vector.shape_cast %53 : vector<2x8x8x32xf32> to vector<128x32xf32>
    %c0_82 = arith.constant 0 : index
    %c448 = arith.constant 448 : index
    %55 = vector.load %arg8[%c0_82, %c448] : memref<128x800xf32, #tpu.memory_space<vmem>>, vector<128x32xf32>
    tpu.vector_store %arg8[%c0_82, %c448], %54 {strides = array<i32>} : memref<128x800xf32, #tpu.memory_space<vmem>>, vector<128x32xf32>,
    %c0_83 = arith.constant 0 : index
    %c3_84 = arith.constant 3 : index
    %c0_85 = arith.constant 0 : index
    %c0_86 = arith.constant 0 : index
    %56 = vector.load %arg7[%c0_83, %c3_84, %c0_85, %c0_86] : memref<2x12x12x32xf32, #tpu.memory_space<vmem>>, vector<2x8x8x32xf32>
    %57 = vector.shape_cast %56 : vector<2x8x8x32xf32> to vector<128x32xf32>
    %c0_87 = arith.constant 0 : index
    %c480 = arith.constant 480 : index
    %58 = vector.load %arg8[%c0_87, %c480] : memref<128x800xf32, #tpu.memory_space<vmem>>, vector<128x32xf32>
    tpu.vector_store %arg8[%c0_87, %c480], %57 {strides = array<i32>} : memref<128x800xf32, #tpu.memory_space<vmem>>, vector<128x32xf32>,
    %c0_88 = arith.constant 0 : index
    %c3_89 = arith.constant 3 : index
    %c1_90 = arith.constant 1 : index
    %c0_91 = arith.constant 0 : index
    %59 = vector.load %arg7[%c0_88, %c3_89, %c1_90, %c0_91] : memref<2x12x12x32xf32, #tpu.memory_space<vmem>>, vector<2x8x8x32xf32>
    %60 = vector.shape_cast %59 : vector<2x8x8x32xf32> to vector<128x32xf32>
    %c0_92 = arith.constant 0 : index
    %c512 = arith.constant 512 : index
    %61 = vector.load %arg8[%c0_92, %c512] : memref<128x800xf32, #tpu.memory_space<vmem>>, vector<128x32xf32>
    tpu.vector_store %arg8[%c0_92, %c512], %60 {strides = array<i32>} : memref<128x800xf32, #tpu.memory_space<vmem>>, vector<128x32xf32>,
    %c0_93 = arith.constant 0 : index
    %c3_94 = arith.constant 3 : index
    %c2_95 = arith.constant 2 : index
    %c0_96 = arith.constant 0 : index
    %62 = vector.load %arg7[%c0_93, %c3_94, %c2_95, %c0_96] : memref<2x12x12x32xf32, #tpu.memory_space<vmem>>, vector<2x8x8x32xf32>
    %63 = vector.shape_cast %62 : vector<2x8x8x32xf32> to vector<128x32xf32>
    %c0_97 = arith.constant 0 : index
    %c544 = arith.constant 544 : index
    %64 = vector.load %arg8[%c0_97, %c544] : memref<128x800xf32, #tpu.memory_space<vmem>>, vector<128x32xf32>
    tpu.vector_store %arg8[%c0_97, %c544], %63 {strides = array<i32>} : memref<128x800xf32, #tpu.memory_space<vmem>>, vector<128x32xf32>,
    %c0_98 = arith.constant 0 : index
    %c3_99 = arith.constant 3 : index
    %c3_100 = arith.constant 3 : index
    %c0_101 = arith.constant 0 : index
    %65 = vector.load %arg7[%c0_98, %c3_99, %c3_100, %c0_101] : memref<2x12x12x32xf32, #tpu.memory_space<vmem>>, vector<2x8x8x32xf32>
    %66 = vector.shape_cast %65 : vector<2x8x8x32xf32> to vector<128x32xf32>
    %c0_102 = arith.constant 0 : index
    %c576 = arith.constant 576 : index
    %67 = vector.load %arg8[%c0_102, %c576] : memref<128x800xf32, #tpu.memory_space<vmem>>, vector<128x32xf32>
    tpu.vector_store %arg8[%c0_102, %c576], %66 {strides = array<i32>} : memref<128x800xf32, #tpu.memory_space<vmem>>, vector<128x32xf32>,
    %c0_103 = arith.constant 0 : index
    %c3_104 = arith.constant 3 : index
    %c4_105 = arith.constant 4 : index
    %c0_106 = arith.constant 0 : index
    %68 = vector.load %arg7[%c0_103, %c3_104, %c4_105, %c0_106] : memref<2x12x12x32xf32, #tpu.memory_space<vmem>>, vector<2x8x8x32xf32>
    %69 = vector.shape_cast %68 : vector<2x8x8x32xf32> to vector<128x32xf32>
    %c0_107 = arith.constant 0 : index
    %c608 = arith.constant 608 : index
    %70 = vector.load %arg8[%c0_107, %c608] : memref<128x800xf32, #tpu.memory_space<vmem>>, vector<128x32xf32>
    tpu.vector_store %arg8[%c0_107, %c608], %69 {strides = array<i32>} : memref<128x800xf32, #tpu.memory_space<vmem>>, vector<128x32xf32>,
    %c0_108 = arith.constant 0 : index
    %c4_109 = arith.constant 4 : index
    %c0_110 = arith.constant 0 : index
    %c0_111 = arith.constant 0 : index
    %71 = vector.load %arg7[%c0_108, %c4_109, %c0_110, %c0_111] : memref<2x12x12x32xf32, #tpu.memory_space<vmem>>, vector<2x8x8x32xf32>
    %72 = vector.shape_cast %71 : vector<2x8x8x32xf32> to vector<128x32xf32>
    %c0_112 = arith.constant 0 : index
    %c640 = arith.constant 640 : index
    %73 = vector.load %arg8[%c0_112, %c640] : memref<128x800xf32, #tpu.memory_space<vmem>>, vector<128x32xf32>
    tpu.vector_store %arg8[%c0_112, %c640], %72 {strides = array<i32>} : memref<128x800xf32, #tpu.memory_space<vmem>>, vector<128x32xf32>,
    %c0_113 = arith.constant 0 : index
    %c4_114 = arith.constant 4 : index
    %c1_115 = arith.constant 1 : index
    %c0_116 = arith.constant 0 : index
    %74 = vector.load %arg7[%c0_113, %c4_114, %c1_115, %c0_116] : memref<2x12x12x32xf32, #tpu.memory_space<vmem>>, vector<2x8x8x32xf32>
    %75 = vector.shape_cast %74 : vector<2x8x8x32xf32> to vector<128x32xf32>
    %c0_117 = arith.constant 0 : index
    %c672 = arith.constant 672 : index
    %76 = vector.load %arg8[%c0_117, %c672] : memref<128x800xf32, #tpu.memory_space<vmem>>, vector<128x32xf32>
    tpu.vector_store %arg8[%c0_117, %c672], %75 {strides = array<i32>} : memref<128x800xf32, #tpu.memory_space<vmem>>, vector<128x32xf32>,
    %c0_118 = arith.constant 0 : index
    %c4_119 = arith.constant 4 : index
    %c2_120 = arith.constant 2 : index
    %c0_121 = arith.constant 0 : index
    %77 = vector.load %arg7[%c0_118, %c4_119, %c2_120, %c0_121] : memref<2x12x12x32xf32, #tpu.memory_space<vmem>>, vector<2x8x8x32xf32>
    %78 = vector.shape_cast %77 : vector<2x8x8x32xf32> to vector<128x32xf32>
    %c0_122 = arith.constant 0 : index
    %c704 = arith.constant 704 : index
    %79 = vector.load %arg8[%c0_122, %c704] : memref<128x800xf32, #tpu.memory_space<vmem>>, vector<128x32xf32>
    tpu.vector_store %arg8[%c0_122, %c704], %78 {strides = array<i32>} : memref<128x800xf32, #tpu.memory_space<vmem>>, vector<128x32xf32>,
    %c0_123 = arith.constant 0 : index
    %c4_124 = arith.constant 4 : index
    %c3_125 = arith.constant 3 : index
    %c0_126 = arith.constant 0 : index
    %80 = vector.load %arg7[%c0_123, %c4_124, %c3_125, %c0_126] : memref<2x12x12x32xf32, #tpu.memory_space<vmem>>, vector<2x8x8x32xf32>
    %81 = vector.shape_cast %80 : vector<2x8x8x32xf32> to vector<128x32xf32>
    %c0_127 = arith.constant 0 : index
    %c736 = arith.constant 736 : index
    %82 = vector.load %arg8[%c0_127, %c736] : memref<128x800xf32, #tpu.memory_space<vmem>>, vector<128x32xf32>
    tpu.vector_store %arg8[%c0_127, %c736], %81 {strides = array<i32>} : memref<128x800xf32, #tpu.memory_space<vmem>>, vector<128x32xf32>,
    %c0_128 = arith.constant 0 : index
    %c4_129 = arith.constant 4 : index
    %c4_130 = arith.constant 4 : index
    %c0_131 = arith.constant 0 : index
    %83 = vector.load %arg7[%c0_128, %c4_129, %c4_130, %c0_131] : memref<2x12x12x32xf32, #tpu.memory_space<vmem>>, vector<2x8x8x32xf32>
    %84 = vector.shape_cast %83 : vector<2x8x8x32xf32> to vector<128x32xf32>
    %c0_132 = arith.constant 0 : index
    %c768 = arith.constant 768 : index
    %85 = vector.load %arg8[%c0_132, %c768] : memref<128x800xf32, #tpu.memory_space<vmem>>, vector<128x32xf32>
    tpu.vector_store %arg8[%c0_132, %c768], %84 {strides = array<i32>} : memref<128x800xf32, #tpu.memory_space<vmem>>, vector<128x32xf32>,
    %c0_133 = arith.constant 0 : index
    %c0_134 = arith.constant 0 : index
    %86 = vector.load %arg8[%c0_133, %c0_134] : memref<128x800xf32, #tpu.memory_space<vmem>>, vector<128x800xf32>
    %c0_135 = arith.constant 0 : index
    %c0_136 = arith.constant 0 : index
    %87 = vector.load %arg4[%c0_135, %c0_136] : memref<800x128xf32, #tpu.memory_space<vmem>>, vector<800x128xf32>
    %cst_137 = arith.constant dense<0.000000e+00> : vector<128x128xf32>
    %88 = tpu.matmul %86, %87, %cst_137 {dimension_numbers = #tpu.dot_dimension_numbers<[1], [0], [0], [1], [0, 0, 1, 1], [], []>} : vector<128x800xf32>, vector<800x128xf32>, vector<128x128xf32> -> vector<128x128xf32>
    %c0_138 = arith.constant 0 : index
    %c0_139 = arith.constant 0 : index
    %89 = vector.load %arg5[%c0_138, %c0_139] : memref<1x128xf32, #tpu.memory_space<vmem>>, vector<1x128xf32>
    %90 = vector.broadcast %89 : vector<1x128xf32> to vector<128x128xf32>
    %91 = arith.addf %88, %90 : vector<128x128xf32>
    %cst_140 = arith.constant 0.000000e+00 : f32
    %92 = vector.broadcast %cst_140 : f32 to vector<128x128xf32>
    %93 = arith.maximumf %91, %92 : vector<128x128xf32>
    %94 = vector.shape_cast %93 : vector<128x128xf32> to vector<2x64x128xf32>
    %c0_141 = arith.constant 0 : index
    %c0_142 = arith.constant 0 : index
    %c0_143 = arith.constant 0 : index
    %95 = vector.load %arg6[%c0_141, %c0_142, %c0_143] : memref<2x64x128xf32, #tpu.memory_space<vmem>>, vector<2x64x128xf32>
    tpu.vector_store %arg6[%c0_141, %c0_142, %c0_143], %94 {strides = array<i32>} : memref<2x64x128xf32, #tpu.memory_space<vmem>>, vector<2x64x128xf32>,
    return
  }
  func.func @transform_0(%arg0: i32) -> (i32, i32, i32) {
    %c0_i32 = arith.constant 0 : i32
    %c0_i32_0 = arith.constant 0 : i32
    %c0_i32_1 = arith.constant 0 : i32
    return %arg0, %c0_i32, %c0_i32_0 : i32, i32, i32
  }
  func.func @transform_1(%arg0: i32) -> (i32, i32) {
    %c0_i32 = arith.constant 0 : i32
    %c0_i32_0 = arith.constant 0 : i32
    %c0_i32_1 = arith.constant 0 : i32
    return %c0_i32, %c0_i32_0 : i32, i32
  }
  func.func @transform_2(%arg0: i32) -> (i32, i32) {
    %c0_i32 = arith.constant 0 : i32
    %c0_i32_0 = arith.constant 0 : i32
    %c0_i32_1 = arith.constant 0 : i32
    return %c0_i32, %c0_i32_0 : i32, i32
  }
  func.func @transform_3(%arg0: i32) -> (i32, i32) {
    %c0_i32 = arith.constant 0 : i32
    %c0_i32_0 = arith.constant 0 : i32
    %c0_i32_1 = arith.constant 0 : i32
    return %c0_i32, %c0_i32_0 : i32, i32
  }
  func.func @transform_4(%arg0: i32) -> (i32, i32) {
    %c0_i32 = arith.constant 0 : i32
    %c0_i32_0 = arith.constant 0 : i32
    %c0_i32_1 = arith.constant 0 : i32
    return %c0_i32, %c0_i32_0 : i32, i32
  }
  func.func @transform_5(%arg0: i32) -> (i32, i32, i32) {
    %c0_i32 = arith.constant 0 : i32
    %c0_i32_0 = arith.constant 0 : i32
    %c0_i32_1 = arith.constant 0 : i32
    return %arg0, %c0_i32, %c0_i32_0 : i32, i32, i32
  }
}

</mosaic_0001>

<llo_original>
// kernel: sequential_forward.1
$region0: #{sequential_forward.1}
  #allocation0 [shape = 'u32[]', space=smem, size = 0x4, offset = 0x4, fixed_abs, tag = 'smem constant byte address 0x4 - core index']
  #allocation1 [shape = 'u32[144,128]{1,0:T(1,128)}', space=vmem, size = 0x12000, scoped, tag = 'internal scratch']
  #allocation2 [shape = 'f32[2,12,12,32]{3,2,1,0:T(8,128)}', space=vmem, size = 0x30000, scoped, tag = 'scratch operand']
  #allocation3 [shape = 'f32[128,800]{1,0:T(8,128)}', space=vmem, size = 0x70000, scoped, tag = 'scratch operand']
  %s0 = inlined_call_operand.vmem [shape: f32[2,144,25], index: 0, kind: input, shape index: {}]
  %s1 = inlined_call_operand.vmem [shape: f32[25,32], index: 1, kind: input, shape index: {}]
  %s2 = inlined_call_operand.vmem [shape: f32[1,32], index: 2, kind: input, shape index: {}]
  %s3 = inlined_call_operand.vmem [shape: f32[800,128], index: 3, kind: input, shape index: {}]
  %s4 = inlined_call_operand.vmem [shape: f32[1,128], index: 4, kind: input, shape index: {}]
  %s5 = inlined_call_operand.vmem [shape: f32[2,64,128], index: 5, kind: output, shape index: {}]
  %s6 = sld [smem:[#allocation0]]
  $region30: #{sequential_forward.1} parent=0
    _
  %s8 = ssub.s32 1, %s6
  %s9 = scalar_select 0, %s8, %s6
  // Predicated region
  $region2: #{sequential_forward.1} parent=0 // pred_check
    _
  $region3: #{sequential_forward.1} parent=0 // pred_check_branch
    %11 = sbr.rel (0) target = $region5
  $region4: #{sequential_forward.1} parent=0 // pred_region
    _
  $region5: #{sequential_forward.1} parent=0 // pred_fallthru
    _
  // Predicated region
  $region6: #{sequential_forward.1} parent=0 // pred_check
    _
  $region7: #{sequential_forward.1} parent=0 // pred_check_branch
    %13 = sbr.rel (0) target = $region9
  $region8: #{sequential_forward.1} parent=0 // pred_region
    _
  $region9: #{sequential_forward.1} parent=0 // pred_fallthru
    _
  // Predicated region
  $region10: #{sequential_forward.1} parent=0 // pred_check
    _
  $region11: #{sequential_forward.1} parent=0 // pred_check_branch
    %15 = sbr.rel (0) target = $region13
  $region12: #{sequential_forward.1} parent=0 // pred_region
    _
  $region13: #{sequential_forward.1} parent=0 // pred_fallthru
    _
  // Predicated region
  $region14: #{sequential_forward.1} parent=0 // pred_check
    _
  $region15: #{sequential_forward.1} parent=0 // pred_check_branch
    %17 = sbr.rel (0) target = $region17
  $region16: #{sequential_forward.1} parent=0 // pred_region
    _
  $region17: #{sequential_forward.1} parent=0 // pred_fallthru
    _
  // Predicated region
  $region18: #{sequential_forward.1} parent=0 // pred_check
    _
  $region19: #{sequential_forward.1} parent=0 // pred_check_branch
    %19 = sbr.rel (0) target = $region21
  $region20: #{sequential_forward.1} parent=0 // pred_region
    _
  $region21: #{sequential_forward.1} parent=0 // pred_fallthru
    _
  %v20 = vld [vmem:[%s0] sm:$0xff]
  %v21 = vld [vmem:[%s0 + $0x8] sm:$0xff]
  %v22 = vld [vmem:[%s0 + $0x10] sm:$0xff]
  %v23 = vld [vmem:[%s0 + $0x18] sm:$0xff]
  %v24 = vld [vmem:[%s0 + $0x20] sm:$0xff]
  %v25 = vld [vmem:[%s0 + $0x28] sm:$0xff]
  %v26 = vld [vmem:[%s0 + $0x30] sm:$0xff]
  %v27 = vld [vmem:[%s0 + $0x38] sm:$0xff]
  %v28 = vld [vmem:[%s0 + $0x40] sm:$0xff]
  %v29 = vld [vmem:[%s0 + $0x48] sm:$0xff]
  %v30 = vld [vmem:[%s0 + $0x50] sm:$0xff]
  %v31 = vld [vmem:[%s0 + $0x58] sm:$0xff]
  %v32 = vld [vmem:[%s0 + $0x60] sm:$0xff]
  %v33 = vld [vmem:[%s0 + $0x68] sm:$0xff]
  %v34 = vld [vmem:[%s0 + $0x70] sm:$0xff]
  %v35 = vld [vmem:[%s0 + $0x78] sm:$0xff]
  %v36 = vld [vmem:[%s0 + $0x80] sm:$0xff]
  %v37 = vld [vmem:[%s0 + $0x88] sm:$0xff]
  %v38 = vld [vmem:[%s0 + $0x90] sm:$0xff]
  %v39 = vld [vmem:[%s0 + $0x98] sm:$0xff]
  %v40 = vld [vmem:[%s0 + $0xa0] sm:$0xff]
  %v41 = vld [vmem:[%s0 + $0xa8] sm:$0xff]
  %v42 = vld [vmem:[%s0 + $0xb0] sm:$0xff]
  %v43 = vld [vmem:[%s0 + $0xb8] sm:$0xff]
  %v44 = vld [vmem:[%s0 + $0xc0] sm:$0xff]
  %v45 = vld [vmem:[%s0 + $0xc8] sm:$0xff]
  %v46 = vld [vmem:[%s0 + $0xd0] sm:$0xff]
  %v47 = vld [vmem:[%s0 + $0xd8] sm:$0xff]
  %v48 = vld [vmem:[%s0 + $0xe0] sm:$0xff]
  %v49 = vld [vmem:[%s0 + $0xe8] sm:$0xff]
  %v50 = vld [vmem:[%s0 + $0xf0] sm:$0xff]
  %v51 = vld [vmem:[%s0 + $0xf8] sm:$0xff]
  %v52 = vld [vmem:[%s0 + $0x100] sm:$0xff]
  %v53 = vld [vmem:[%s0 + $0x108] sm:$0xff]
  %v54 = vld [vmem:[%s0 + $0x110] sm:$0xff]
  %v55 = vld [vmem:[%s0 + $0x118] sm:$0xff]
  %v56 = vld [vmem:[%s1] sm:$0xff]
  %v57 = vld [vmem:[%s1 + $0x8] sm:$0xff]
  %v58 = vld [vmem:[%s1 + $0x10] sm:$0xff]
  %v59 = vld [vmem:[%s1 + $0x18] sm:$0x1]
  %v60 = vld [vmem:[%s2] sm:$0x1]
  %v62 = vlaneseq
  %v63 = vshrl.u32 %v62, 7
  %v64 = vsub.s32 0, %v63
  %v65 = vrot.slane %v60, %v64
  %vm67 = vcmask 203776
  %v69 = vsel %vm67, %v20, 0
  %v72 = vsel %vm67, %v21, 0
  %v75 = vsel %vm67, %v22, 0
  %v78 = vsel %vm67, %v23, 0
  %v81 = vsel %vm67, %v24, 0
  %v84 = vsel %vm67, %v25, 0
  %v87 = vsel %vm67, %v26, 0
  %v90 = vsel %vm67, %v27, 0
  %v93 = vsel %vm67, %v28, 0
  %v96 = vsel %vm67, %v29, 0
  %v99 = vsel %vm67, %v30, 0
  %v102 = vsel %vm67, %v31, 0
  %v105 = vsel %vm67, %v32, 0
  %v108 = vsel %vm67, %v33, 0
  %v111 = vsel %vm67, %v34, 0
  %v114 = vsel %vm67, %v35, 0
  %v117 = vsel %vm67, %v36, 0
  %v120 = vsel %vm67, %v37, 0
  %v123 = vsel %vm67, %v38, 0
  %v126 = vsel %vm67, %v39, 0
  %v129 = vsel %vm67, %v40, 0
  %v132 = vsel %vm67, %v41, 0
  %v135 = vsel %vm67, %v42, 0
  %v138 = vsel %vm67, %v43, 0
  %v141 = vsel %vm67, %v44, 0
  %v144 = vsel %vm67, %v45, 0
  %v147 = vsel %vm67, %v46, 0
  %v150 = vsel %vm67, %v47, 0
  %v153 = vsel %vm67, %v48, 0
  %v156 = vsel %vm67, %v49, 0
  %v159 = vsel %vm67, %v50, 0
  %v162 = vsel %vm67, %v51, 0
  %v165 = vsel %vm67, %v52, 0
  %v168 = vsel %vm67, %v53, 0
  %v171 = vsel %vm67, %v54, 0
  %v174 = vsel %vm67, %v55, 0
  %vm176 = vcmask 1040384
  %v178 = vsel %vm176, %v59, 0
  %180 = vmatprep.subr.mxu0 0.0
  %181 = vmatpush1.msra.mxu0 0.0
  %182 = vmatprep.subr.mxu0 0.0
  %183 = vmatpush1.msra.mxu0 0.0
  %184 = vmatprep.subr.mxu0 0.0
  %185 = vmatpush1.msra.mxu0 0.0
  %186 = vmatprep.subr.mxu0 0.0
  %187 = vmatpush1.msra.mxu0 0.0
  %188 = vmatprep.subr.mxu0 0.0
  %189 = vmatpush1.msra.mxu0 0.0
  %190 = vmatprep.subr.mxu0 0.0
  %191 = vmatpush1.msra.mxu0 0.0
  %192 = vmatprep.subr.mxu0 0.0
  %193 = vmatpush1.msra.mxu0 0.0
  %194 = vmatprep.subr.mxu0 0.0
  %195 = vmatpush1.msra.mxu0 0.0
  %196 = vmatprep.subr.mxu0 0.0
  %197 = vmatpush1.msra.mxu0 0.0
  %198 = vmatprep.subr.mxu0 0.0
  %199 = vmatpush1.msra.mxu0 0.0
  %200 = vmatprep.subr.mxu0 0.0
  %201 = vmatpush1.msra.mxu0 0.0
  %202 = vmatprep.subr.mxu0 0.0
  %203 = vmatpush1.msra.mxu0 0.0
  %204 = vmatprep.subr.mxu0 0.0
  %205 = vmatpush1.msra.mxu0 %v178
  %206 = vmatprep.subr.mxu0 0.0
  %207 = vmatpush1.msra.mxu0 %v58
  %208 = vmatprep.subr.mxu0 0.0
  %209 = vmatpush1.msra.mxu0 %v57
  %210 = vmatprep.subr.mxu0 0.0
  %211 = vmatpush1.msra.mxu0 %v56
  %212 = vmatprep.subr.mxu0 0.0
  %213 = vmatpush2.msra.mxu0 0.0
  %214 = vmatprep.subr.mxu0 0.0
  %215 = vmatpush2.msra.mxu0 0.0
  %216 = vmatprep.subr.mxu0 0.0
  %217 = vmatpush2.msra.mxu0 0.0
  %218 = vmatprep.subr.mxu0 0.0
  %219 = vmatpush2.msra.mxu0 0.0
  %220 = vmatprep.subr.mxu0 0.0
  %221 = vmatpush2.msra.mxu0 0.0
  %222 = vmatprep.subr.mxu0 0.0
  %223 = vmatpush2.msra.mxu0 0.0
  %224 = vmatprep.subr.mxu0 0.0
  %225 = vmatpush2.msra.mxu0 0.0
  %226 = vmatprep.subr.mxu0 0.0
  %227 = vmatpush2.msra.mxu0 0.0
  %228 = vmatprep.subr.mxu0 0.0
  %229 = vmatpush2.msra.mxu0 0.0
  %230 = vmatprep.subr.mxu0 0.0
  %231 = vmatpush2.msra.mxu0 0.0
  %232 = vmatprep.subr.mxu0 0.0
  %233 = vmatpush2.msra.mxu0 0.0
  %234 = vmatprep.subr.mxu0 0.0
  %235 = vmatpush2.msra.mxu0 0.0
  %236 = vmatprep.subr.mxu0 0.0
  %237 = vmatpush2.msra.mxu0 0.0
  %238 = vmatprep.subr.mxu0 0.0
  %239 = vmatpush2.msra.mxu0 0.0
  %240 = vmatprep.subr.mxu0 0.0
  %241 = vmatpush2.msra.mxu0 0.0
  %242 = vmatprep.subr.mxu0 0.0
  %243 = vmatpush2.msra.mxu0 0.0
  %244 = vmatprep.mubr.f32.mxu0 0.0
  %245 = vmatmul.mubr.f32.gmra.mxu0 %v69
  %v246 = vpop.f32.mrf.mxu0
  %v247 = vadd.f32 %v65, %v246
  %v248 = vpop.f32.mrf.mxu0
  %249 = vmatprep.mubr.f32.mxu0 0.0
  %250 = vmatmul.mubr.f32.gmra.mxu0 %v72
  %v251 = vpop.f32.mrf.mxu0
  %v252 = vadd.f32 %v65, %v251
  %v253 = vpop.f32.mrf.mxu0
  %254 = vmatprep.mubr.f32.mxu0 0.0
  %255 = vmatmul.mubr.f32.gmra.mxu0 %v75
  %v256 = vpop.f32.mrf.mxu0
  %v257 = vadd.f32 %v65, %v256
  %v258 = vpop.f32.mrf.mxu0
  %259 = vmatprep.mubr.f32.mxu0 0.0
  %260 = vmatmul.mubr.f32.gmra.mxu0 %v78
  %v261 = vpop.f32.mrf.mxu0
  %v262 = vadd.f32 %v65, %v261
  %v263 = vpop.f32.mrf.mxu0
  %264 = vmatprep.mubr.f32.mxu0 0.0
  %265 = vmatmul.mubr.f32.gmra.mxu0 %v81
  %v266 = vpop.f32.mrf.mxu0
  %v267 = vadd.f32 %v65, %v266
  %v268 = vpop.f32.mrf.mxu0
  %269 = vmatprep.mubr.f32.mxu0 0.0
  %270 = vmatmul.mubr.f32.gmra.mxu0 %v84
  %v271 = vpop.f32.mrf.mxu0
  %v272 = vadd.f32 %v65, %v271
  %v273 = vpop.f32.mrf.mxu0
  %274 = vmatprep.mubr.f32.mxu0 0.0
  %275 = vmatmul.mubr.f32.gmra.mxu0 %v87
  %v276 = vpop.f32.mrf.mxu0
  %v277 = vadd.f32 %v65, %v276
  %v278 = vpop.f32.mrf.mxu0
  %279 = vmatprep.mubr.f32.mxu0 0.0
  %280 = vmatmul.mubr.f32.gmra.mxu0 %v90
  %v281 = vpop.f32.mrf.mxu0
  %v282 = vadd.f32 %v65, %v281
  %v283 = vpop.f32.mrf.mxu0
  %284 = vmatprep.mubr.f32.mxu0 0.0
  %285 = vmatmul.mubr.f32.gmra.mxu0 %v93
  %v286 = vpop.f32.mrf.mxu0
  %v287 = vadd.f32 %v65, %v286
  %v288 = vpop.f32.mrf.mxu0
  %289 = vmatprep.mubr.f32.mxu0 0.0
  %290 = vmatmul.mubr.f32.gmra.mxu0 %v96
  %v291 = vpop.f32.mrf.mxu0
  %v292 = vadd.f32 %v65, %v291
  %v293 = vpop.f32.mrf.mxu0
  %294 = vmatprep.mubr.f32.mxu0 0.0
  %295 = vmatmul.mubr.f32.gmra.mxu0 %v99
  %v296 = vpop.f32.mrf.mxu0
  %v297 = vadd.f32 %v65, %v296
  %v298 = vpop.f32.mrf.mxu0
  %299 = vmatprep.mubr.f32.mxu0 0.0
  %300 = vmatmul.mubr.f32.gmra.mxu0 %v102
  %v301 = vpop.f32.mrf.mxu0
  %v302 = vadd.f32 %v65, %v301
  %v303 = vpop.f32.mrf.mxu0
  %304 = vmatprep.mubr.f32.mxu0 0.0
  %305 = vmatmul.mubr.f32.gmra.mxu0 %v105
  %v306 = vpop.f32.mrf.mxu0
  %v307 = vadd.f32 %v65, %v306
  %v308 = vpop.f32.mrf.mxu0
  %309 = vmatprep.mubr.f32.mxu0 0.0
  %310 = vmatmul.mubr.f32.gmra.mxu0 %v108
  %v311 = vpop.f32.mrf.mxu0
  %v312 = vadd.f32 %v65, %v311
  %v313 = vpop.f32.mrf.mxu0
  %314 = vmatprep.mubr.f32.mxu0 0.0
  %315 = vmatmul.mubr.f32.gmra.mxu0 %v111
  %v316 = vpop.f32.mrf.mxu0
  %v317 = vadd.f32 %v65, %v316
  %v318 = vpop.f32.mrf.mxu0
  %319 = vmatprep.mubr.f32.mxu0 0.0
  %320 = vmatmul.mubr.f32.gmra.mxu0 %v114
  %v321 = vpop.f32.mrf.mxu0
  %v322 = vadd.f32 %v65, %v321
  %v323 = vpop.f32.mrf.mxu0
  %324 = vmatprep.mubr.f32.mxu0 0.0
  %325 = vmatmul.mubr.f32.gmra.mxu0 %v117
  %v326 = vpop.f32.mrf.mxu0
  %v327 = vadd.f32 %v65, %v326
  %v328 = vpop.f32.mrf.mxu0
  %329 = vmatprep.mubr.f32.mxu0 0.0
  %330 = vmatmul.mubr.f32.gmra.mxu0 %v120
  %v331 = vpop.f32.mrf.mxu0
  %v332 = vadd.f32 %v65, %v331
  %v333 = vpop.f32.mrf.mxu0
  %334 = vmatprep.mubr.f32.mxu0 0.0
  %335 = vmatmul.mubr.f32.gmra.mxu0 %v123
  %v336 = vpop.f32.mrf.mxu0
  %v337 = vadd.f32 %v65, %v336
  %v338 = vpop.f32.mrf.mxu0
  %339 = vmatprep.mubr.f32.mxu0 0.0
  %340 = vmatmul.mubr.f32.gmra.mxu0 %v126
  %v341 = vpop.f32.mrf.mxu0
  %v342 = vadd.f32 %v65, %v341
  %v343 = vpop.f32.mrf.mxu0
  %344 = vmatprep.mubr.f32.mxu0 0.0
  %345 = vmatmul.mubr.f32.gmra.mxu0 %v129
  %v346 = vpop.f32.mrf.mxu0
  %v347 = vadd.f32 %v65, %v346
  %v348 = vpop.f32.mrf.mxu0
  %349 = vmatprep.mubr.f32.mxu0 0.0
  %350 = vmatmul.mubr.f32.gmra.mxu0 %v132
  %v351 = vpop.f32.mrf.mxu0
  %v352 = vadd.f32 %v65, %v351
  %v353 = vpop.f32.mrf.mxu0
  %354 = vmatprep.mubr.f32.mxu0 0.0
  %355 = vmatmul.mubr.f32.gmra.mxu0 %v135
  %v356 = vpop.f32.mrf.mxu0
  %v357 = vadd.f32 %v65, %v356
  %v358 = vpop.f32.mrf.mxu0
  %359 = vmatprep.mubr.f32.mxu0 0.0
  %360 = vmatmul.mubr.f32.gmra.mxu0 %v138
  %v361 = vpop.f32.mrf.mxu0
  %v362 = vadd.f32 %v65, %v361
  %v363 = vpop.f32.mrf.mxu0
  %364 = vmatprep.mubr.f32.mxu0 0.0
  %365 = vmatmul.mubr.f32.gmra.mxu0 %v141
  %v366 = vpop.f32.mrf.mxu0
  %v367 = vadd.f32 %v65, %v366
  %v368 = vpop.f32.mrf.mxu0
  %369 = vmatprep.mubr.f32.mxu0 0.0
  %370 = vmatmul.mubr.f32.gmra.mxu0 %v144
  %v371 = vpop.f32.mrf.mxu0
  %v372 = vadd.f32 %v65, %v371
  %v373 = vpop.f32.mrf.mxu0
  %374 = vmatprep.mubr.f32.mxu0 0.0
  %375 = vmatmul.mubr.f32.gmra.mxu0 %v147
  %v376 = vpop.f32.mrf.mxu0
  %v377 = vadd.f32 %v65, %v376
  %v378 = vpop.f32.mrf.mxu0
  %379 = vmatprep.mubr.f32.mxu0 0.0
  %380 = vmatmul.mubr.f32.gmra.mxu0 %v150
  %v381 = vpop.f32.mrf.mxu0
  %v382 = vadd.f32 %v65, %v381
  %v383 = vpop.f32.mrf.mxu0
  %384 = vmatprep.mubr.f32.mxu0 0.0
  %385 = vmatmul.mubr.f32.gmra.mxu0 %v153
  %v386 = vpop.f32.mrf.mxu0
  %v387 = vadd.f32 %v65, %v386
  %v388 = vpop.f32.mrf.mxu0
  %389 = vmatprep.mubr.f32.mxu0 0.0
  %390 = vmatmul.mubr.f32.gmra.mxu0 %v156
  %v391 = vpop.f32.mrf.mxu0
  %v392 = vadd.f32 %v65, %v391
  %v393 = vpop.f32.mrf.mxu0
  %394 = vmatprep.mubr.f32.mxu0 0.0
  %395 = vmatmul.mubr.f32.gmra.mxu0 %v159
  %v396 = vpop.f32.mrf.mxu0
  %v397 = vadd.f32 %v65, %v396
  %v398 = vpop.f32.mrf.mxu0
  %399 = vmatprep.mubr.f32.mxu0 0.0
  %400 = vmatmul.mubr.f32.gmra.mxu0 %v162
  %v401 = vpop.f32.mrf.mxu0
  %v402 = vadd.f32 %v65, %v401
  %v403 = vpop.f32.mrf.mxu0
  %404 = vmatprep.mubr.f32.mxu0 0.0
  %405 = vmatmul.mubr.f32.gmra.mxu0 %v165
  %v406 = vpop.f32.mrf.mxu0
  %v407 = vadd.f32 %v65, %v406
  %v408 = vpop.f32.mrf.mxu0
  %409 = vmatprep.mubr.f32.mxu0 0.0
  %410 = vmatmul.mubr.f32.gmra.mxu0 %v168
  %v411 = vpop.f32.mrf.mxu0
  %v412 = vadd.f32 %v65, %v411
  %v413 = vpop.f32.mrf.mxu0
  %414 = vmatprep.mubr.f32.mxu0 0.0
  %415 = vmatmul.mubr.f32.gmra.mxu0 %v171
  %v416 = vpop.f32.mrf.mxu0
  %v417 = vadd.f32 %v65, %v416
  %v418 = vpop.f32.mrf.mxu0
  %419 = vmatprep.mubr.f32.mxu0 0.0
  %420 = vmatmul.mubr.f32.gmra.mxu0 %v174
  %v421 = vpop.f32.mrf.mxu0
  %v422 = vadd.f32 %v65, %v421
  %v423 = vpop.f32.mrf.mxu0
  %424 = vdwg.mxu0
  %v425 = vmax.f32 %v247, 0.0
  %v426 = vmax.f32 %v252, 0.0
  %v427 = vmax.f32 %v257, 0.0
  %v428 = vmax.f32 %v262, 0.0
  %v429 = vmax.f32 %v267, 0.0
  %v430 = vmax.f32 %v272, 0.0
  %v431 = vmax.f32 %v277, 0.0
  %v432 = vmax.f32 %v282, 0.0
  %v433 = vmax.f32 %v287, 0.0
  %v434 = vmax.f32 %v292, 0.0
  %v435 = vmax.f32 %v297, 0.0
  %v436 = vmax.f32 %v302, 0.0
  %v437 = vmax.f32 %v307, 0.0
  %v438 = vmax.f32 %v312, 0.0
  %v439 = vmax.f32 %v317, 0.0
  %v440 = vmax.f32 %v322, 0.0
  %v441 = vmax.f32 %v327, 0.0
  %v442 = vmax.f32 %v332, 0.0
  %v443 = vmax.f32 %v337, 0.0
  %v444 = vmax.f32 %v342, 0.0
  %v445 = vmax.f32 %v347, 0.0
  %v446 = vmax.f32 %v352, 0.0
  %v447 = vmax.f32 %v357, 0.0
  %v448 = vmax.f32 %v362, 0.0
  %v449 = vmax.f32 %v367, 0.0
  %v450 = vmax.f32 %v372, 0.0
  %v451 = vmax.f32 %v377, 0.0
  %v452 = vmax.f32 %v382, 0.0
  %v453 = vmax.f32 %v387, 0.0
  %v454 = vmax.f32 %v392, 0.0
  %v455 = vmax.f32 %v397, 0.0
  %v456 = vmax.f32 %v402, 0.0
  %v457 = vmax.f32 %v407, 0.0
  %v458 = vmax.f32 %v412, 0.0
  %v459 = vmax.f32 %v417, 0.0
  %v460 = vmax.f32 %v422, 0.0
  %v497 = vcombine.high %v425, %v425
  %v498 = vcombine.high %v426, %v426
  %v499 = vcombine.high %v427, %v427
  %v500 = vcombine.high %v428, %v428
  %v501 = vcombine.high %v429, %v429
  %v502 = vcombine.high %v430, %v430
  %v503 = vcombine.high %v431, %v431
  %v504 = vcombine.high %v432, %v432
  %v505 = vcombine.high %v433, %v433
  %v506 = vcombine.high %v434, %v434
  %v507 = vcombine.high %v435, %v435
  %v508 = vcombine.high %v436, %v436
  %v509 = vcombine.high %v437, %v437
  %v510 = vcombine.high %v438, %v438
  %v511 = vcombine.high %v439, %v439
  %v512 = vcombine.high %v440, %v440
  %v513 = vcombine.high %v441, %v441
  %v514 = vcombine.high %v442, %v442
  %v515 = vcombine.high %v443, %v443
  %v516 = vcombine.high %v444, %v444
  %v517 = vcombine.high %v445, %v445
  %v518 = vcombine.high %v446, %v446
  %v519 = vcombine.high %v447, %v447
  %v520 = vcombine.high %v448, %v448
  %v521 = vcombine.high %v449, %v449
  %v522 = vcombine.high %v450, %v450
  %v523 = vcombine.high %v451, %v451
  %v524 = vcombine.high %v452, %v452
  %v525 = vcombine.high %v453, %v453
  %v526 = vcombine.high %v454, %v454
  %v527 = vcombine.high %v455, %v455
  %v528 = vcombine.high %v456, %v456
  %v529 = vcombine.high %v457, %v457
  %v530 = vcombine.high %v458, %v458
  %v531 = vcombine.high %v459, %v459
  %v532 = vcombine.high %v460, %v460
  %v545 = vcombine.low %v425, %v497
  %v546 = vcombine.low %v498, %v427
  %v547 = vcombine.low %v428, %v500
  %v548 = vcombine.low %v501, %v430
  %v549 = vcombine.low %v431, %v503
  %v550 = vcombine.low %v504, %v433
  %v551 = vcombine.low %v434, %v506
  %v552 = vcombine.low %v507, %v436
  %v553 = vcombine.low %v437, %v509
  %v554 = vcombine.low %v510, %v439
  %v555 = vcombine.low %v440, %v512
  %v556 = vcombine.low %v513, %v442
  %v557 = vcombine.low %v443, %v515
  %v558 = vcombine.low %v516, %v445
  %v559 = vcombine.low %v446, %v518
  %v560 = vcombine.low %v519, %v448
  %v561 = vcombine.low %v449, %v521
  %v562 = vcombine.low %v522, %v451
  %v563 = vcombine.low %v452, %v524
  %v564 = vcombine.low %v525, %v454
  %v565 = vcombine.low %v455, %v527
  %v566 = vcombine.low %v528, %v457
  %v567 = vcombine.low %v458, %v530
  %v568 = vcombine.low %v531, %v460
  %vm593 = vcmask 261120
  %594 = vst.msk [vmem:[#allocation2] sm:$0xff] %vm593, %v545
  %vm595 = vcmask 257024
  %596 = vst.msk [vmem:[#allocation2 + $0x8] sm:$0xf] %vm595, %v426
  %597 = vst.msk [vmem:[#allocation2 + $0x10] sm:$0xff] %vm593, %v546
  %598 = vst.msk [vmem:[#allocation2 + $0x18] sm:$0xf] %vm595, %v499
  %599 = vst.msk [vmem:[#allocation2 + $0x20] sm:$0xff] %vm593, %v547
  %600 = vst.msk [vmem:[#allocation2 + $0x28] sm:$0xf] %vm595, %v429
  %601 = vst.msk [vmem:[#allocation2 + $0x30] sm:$0xff] %vm593, %v548
  %602 = vst.msk [vmem:[#allocation2 + $0x38] sm:$0xf] %vm595, %v502
  %603 = vst.msk [vmem:[#allocation2 + $0x40] sm:$0xff] %vm593, %v549
  %604 = vst.msk [vmem:[#allocation2 + $0x48] sm:$0xf] %vm595, %v432
  %605 = vst.msk [vmem:[#allocation2 + $0x50] sm:$0xff] %vm593, %v550
  %606 = vst.msk [vmem:[#allocation2 + $0x58] sm:$0xf] %vm595, %v505
  %607 = vst.msk [vmem:[#allocation2 + $0x60] sm:$0xff] %vm593, %v551
  %608 = vst.msk [vmem:[#allocation2 + $0x68] sm:$0xf] %vm595, %v435
  %609 = vst.msk [vmem:[#allocation2 + $0x70] sm:$0xff] %vm593, %v552
  %610 = vst.msk [vmem:[#allocation2 + $0x78] sm:$0xf] %vm595, %v508
  %611 = vst.msk [vmem:[#allocation2 + $0x80] sm:$0xff] %vm593, %v553
  %612 = vst.msk [vmem:[#allocation2 + $0x88] sm:$0xf] %vm595, %v438
  %613 = vst.msk [vmem:[#allocation2 + $0x90] sm:$0xff] %vm593, %v554
  %614 = vst.msk [vmem:[#allocation2 + $0x98] sm:$0xf] %vm595, %v511
  %615 = vst.msk [vmem:[#allocation2 + $0xa0] sm:$0xff] %vm593, %v555
  %616 = vst.msk [vmem:[#allocation2 + $0xa8] sm:$0xf] %vm595, %v441
  %617 = vst.msk [vmem:[#allocation2 + $0xb0] sm:$0xff] %vm593, %v556
  %618 = vst.msk [vmem:[#allocation2 + $0xb8] sm:$0xf] %vm595, %v514
  %619 = vst.msk [vmem:[#allocation2 + $0xc0] sm:$0xff] %vm593, %v557
  %620 = vst.msk [vmem:[#allocation2 + $0xc8] sm:$0xf] %vm595, %v444
  %621 = vst.msk [vmem:[#allocation2 + $0xd0] sm:$0xff] %vm593, %v558
  %622 = vst.msk [vmem:[#allocation2 + $0xd8] sm:$0xf] %vm595, %v517
  %623 = vst.msk [vmem:[#allocation2 + $0xe0] sm:$0xff] %vm593, %v559
  %624 = vst.msk [vmem:[#allocation2 + $0xe8] sm:$0xf] %vm595, %v447
  %625 = vst.msk [vmem:[#allocation2 + $0xf0] sm:$0xff] %vm593, %v560
  %626 = vst.msk [vmem:[#allocation2 + $0xf8] sm:$0xf] %vm595, %v520
  %627 = vst.msk [vmem:[#allocation2 + $0x100] sm:$0xff] %vm593, %v561
  %628 = vst.msk [vmem:[#allocation2 + $0x108] sm:$0xf] %vm595, %v450
  %629 = vst.msk [vmem:[#allocation2 + $0x110] sm:$0xff] %vm593, %v562
  %630 = vst.msk [vmem:[#allocation2 + $0x118] sm:$0xf] %vm595, %v523
  %631 = vst.msk [vmem:[#allocation2 + $0x120] sm:$0xff] %vm593, %v563
  %632 = vst.msk [vmem:[#allocation2 + $0x128] sm:$0xf] %vm595, %v453
  %633 = vst.msk [vmem:[#allocation2 + $0x130] sm:$0xff] %vm593, %v564
  %634 = vst.msk [vmem:[#allocation2 + $0x138] sm:$0xf] %vm595, %v526
  %635 = vst.msk [vmem:[#allocation2 + $0x140] sm:$0xff] %vm593, %v565
  %636 = vst.msk [vmem:[#allocation2 + $0x148] sm:$0xf] %vm595, %v456
  %637 = vst.msk [vmem:[#allocation2 + $0x150] sm:$0xff] %vm593, %v566
  %638 = vst.msk [vmem:[#allocation2 + $0x158] sm:$0xf] %vm595, %v529
  %639 = vst.msk [vmem:[#allocation2 + $0x160] sm:$0xff] %vm593, %v567
  %640 = vst.msk [vmem:[#allocation2 + $0x168] sm:$0xf] %vm595, %v459
  %641 = vst.msk [vmem:[#allocation2 + $0x170] sm:$0xff] %vm593, %v568
  %642 = vst.msk [vmem:[#allocation2 + $0x178] sm:$0xf] %vm595, %v532
  %v643 = vld [vmem:[#allocation2] sm:$0xff]
  %v644 = vld [vmem:[#allocation2 + $0x10] sm:$0xff]
  %v645 = vld [vmem:[#allocation2 + $0x20] sm:$0xff]
  %v646 = vld [vmem:[#allocation2 + $0x30] sm:$0xff]
  %v647 = vld [vmem:[#allocation2 + $0x40] sm:$0xff]
  %v648 = vld [vmem:[#allocation2 + $0x50] sm:$0xff]
  %v649 = vld [vmem:[#allocation2 + $0x60] sm:$0xff]
  %v650 = vld [vmem:[#allocation2 + $0x70] sm:$0xff]
  %v651 = vld [vmem:[#allocation2 + $0xc0] sm:$0xff]
  %v652 = vld [vmem:[#allocation2 + $0xd0] sm:$0xff]
  %v653 = vld [vmem:[#allocation2 + $0xe0] sm:$0xff]
  %v654 = vld [vmem:[#allocation2 + $0xf0] sm:$0xff]
  %v655 = vld [vmem:[#allocation2 + $0x100] sm:$0xff]
  %v656 = vld [vmem:[#allocation2 + $0x110] sm:$0xff]
  %v657 = vld [vmem:[#allocation2 + $0x120] sm:$0xff]
  %v658 = vld [vmem:[#allocation2 + $0x130] sm:$0xff]
  %659 = vst.msk [vmem:[#allocation3] sm:$0xff] %vm593, %v643
  %660 = vst.msk [vmem:[#allocation3 + $0x38] sm:$0xff] %vm593, %v644
  %661 = vst.msk [vmem:[#allocation3 + $0x70] sm:$0xff] %vm593, %v645
  %662 = vst.msk [vmem:[#allocation3 + $0xa8] sm:$0xff] %vm593, %v646
  %663 = vst.msk [vmem:[#allocation3 + $0xe0] sm:$0xff] %vm593, %v647
  %664 = vst.msk [vmem:[#allocation3 + $0x118] sm:$0xff] %vm593, %v648
  %665 = vst.msk [vmem:[#allocation3 + $0x150] sm:$0xff] %vm593, %v649
  %666 = vst.msk [vmem:[#allocation3 + $0x188] sm:$0xff] %vm593, %v650
  %667 = vst.msk [vmem:[#allocation3 + $0x1c0] sm:$0xff] %vm593, %v651
  %668 = vst.msk [vmem:[#allocation3 + $0x1f8] sm:$0xff] %vm593, %v652
  %669 = vst.msk [vmem:[#allocation3 + $0x230] sm:$0xff] %vm593, %v653
  %670 = vst.msk [vmem:[#allocation3 + $0x268] sm:$0xff] %vm593, %v654
  %671 = vst.msk [vmem:[#allocation3 + $0x2a0] sm:$0xff] %vm593, %v655
  %672 = vst.msk [vmem:[#allocation3 + $0x2d8] sm:$0xff] %vm593, %v656
  %673 = vst.msk [vmem:[#allocation3 + $0x310] sm:$0xff] %vm593, %v657
  %674 = vst.msk [vmem:[#allocation3 + $0x348] sm:$0xff] %vm593, %v658
  %v675 = vld [vmem:[#allocation2 + $0x1] sm:$0xff]
  %v676 = vld [vmem:[#allocation2 + $0x11] sm:$0xff]
  %v677 = vld [vmem:[#allocation2 + $0x21] sm:$0xff]
  %v678 = vld [vmem:[#allocation2 + $0x31] sm:$0xff]
  %v679 = vld [vmem:[#allocation2 + $0x41] sm:$0xff]
  %v680 = vld [vmem:[#allocation2 + $0x51] sm:$0xff]
  %v681 = vld [vmem:[#allocation2 + $0x61] sm:$0xff]
  %v682 = vld [vmem:[#allocation2 + $0x71] sm:$0xff]
  %v683 = vld [vmem:[#allocation2 + $0xc1] sm:$0xff]
  %v684 = vld [vmem:[#allocation2 + $0xd1] sm:$0xff]
  %v685 = vld [vmem:[#allocation2 + $0xe1] sm:$0xff]
  %v686 = vld [vmem:[#allocation2 + $0xf1] sm:$0xff]
  %v687 = vld [vmem:[#allocation2 + $0x101] sm:$0xff]
  %v688 = vld [vmem:[#allocation2 + $0x111] sm:$0xff]
  %v689 = vld [vmem:[#allocation2 + $0x121] sm:$0xff]
  %v690 = vld [vmem:[#allocation2 + $0x131] sm:$0xff]
  %707 = vrot.lane.b32.xlu0 %v675, 32
  %v708 = vpop.permute.xlu0 %707
  %709 = vrot.lane.b32.xlu0 %v676, 32
  %v710 = vpop.permute.xlu0 %709
  %711 = vrot.lane.b32.xlu0 %v677, 32
  %v712 = vpop.permute.xlu0 %711
  %713 = vrot.lane.b32.xlu0 %v678, 32
  %v714 = vpop.permute.xlu0 %713
  %715 = vrot.lane.b32.xlu0 %v679, 32
  %v716 = vpop.permute.xlu0 %715
  %717 = vrot.lane.b32.xlu0 %v680, 32
  %v718 = vpop.permute.xlu0 %717
  %719 = vrot.lane.b32.xlu0 %v681, 32
  %v720 = vpop.permute.xlu0 %719
  %721 = vrot.lane.b32.xlu0 %v682, 32
  %v722 = vpop.permute.xlu0 %721
  %723 = vrot.lane.b32.xlu0 %v683, 32
  %v724 = vpop.permute.xlu0 %723
  %725 = vrot.lane.b32.xlu0 %v684, 32
  %v726 = vpop.permute.xlu0 %725
  %727 = vrot.lane.b32.xlu0 %v685, 32
  %v728 = vpop.permute.xlu0 %727
  %729 = vrot.lane.b32.xlu0 %v686, 32
  %v730 = vpop.permute.xlu0 %729
  %731 = vrot.lane.b32.xlu0 %v687, 32
  %v732 = vpop.permute.xlu0 %731
  %733 = vrot.lane.b32.xlu0 %v688, 32
  %v734 = vpop.permute.xlu0 %733
  %735 = vrot.lane.b32.xlu0 %v689, 32
  %v736 = vpop.permute.xlu0 %735
  %737 = vrot.lane.b32.xlu0 %v690, 32
  %v738 = vpop.permute.xlu0 %737
  %vm755 = vcmask 523520
  %756 = vst.msk [vmem:[#allocation3] sm:$0xff] %vm755, %v708
  %757 = vst.msk [vmem:[#allocation3 + $0x38] sm:$0xff] %vm755, %v710
  %758 = vst.msk [vmem:[#allocation3 + $0x70] sm:$0xff] %vm755, %v712
  %759 = vst.msk [vmem:[#allocation3 + $0xa8] sm:$0xff] %vm755, %v714
  %760 = vst.msk [vmem:[#allocation3 + $0xe0] sm:$0xff] %vm755, %v716
  %761 = vst.msk [vmem:[#allocation3 + $0x118] sm:$0xff] %vm755, %v718
  %762 = vst.msk [vmem:[#allocation3 + $0x150] sm:$0xff] %vm755, %v720
  %763 = vst.msk [vmem:[#allocation3 + $0x188] sm:$0xff] %vm755, %v722
  %764 = vst.msk [vmem:[#allocation3 + $0x1c0] sm:$0xff] %vm755, %v724
  %765 = vst.msk [vmem:[#allocation3 + $0x1f8] sm:$0xff] %vm755, %v726
  %766 = vst.msk [vmem:[#allocation3 + $0x230] sm:$0xff] %vm755, %v728
  %767 = vst.msk [vmem:[#allocation3 + $0x268] sm:$0xff] %vm755, %v730
  %768 = vst.msk [vmem:[#allocation3 + $0x2a0] sm:$0xff] %vm755, %v732
  %769 = vst.msk [vmem:[#allocation3 + $0x2d8] sm:$0xff] %vm755, %v734
  %770 = vst.msk [vmem:[#allocation3 + $0x310] sm:$0xff] %vm755, %v736
  %771 = vst.msk [vmem:[#allocation3 + $0x348] sm:$0xff] %vm755, %v738
  %v772 = vld [vmem:[#allocation2 + $0x2] sm:$0xff]
  %v773 = vld [vmem:[#allocation2 + $0x12] sm:$0xff]
  %v774 = vld [vmem:[#allocation2 + $0x22] sm:$0xff]
  %v775 = vld [vmem:[#allocation2 + $0x32] sm:$0xff]
  %v776 = vld [vmem:[#allocation2 + $0x42] sm:$0xff]
  %v777 = vld [vmem:[#allocation2 + $0x52] sm:$0xff]
  %v778 = vld [vmem:[#allocation2 + $0x62] sm:$0xff]
  %v779 = vld [vmem:[#allocation2 + $0x72] sm:$0xff]
  %v780 = vld [vmem:[#allocation2 + $0xc2] sm:$0xff]
  %v781 = vld [vmem:[#allocation2 + $0xd2] sm:$0xff]
  %v782 = vld [vmem:[#allocation2 + $0xe2] sm:$0xff]
  %v783 = vld [vmem:[#allocation2 + $0xf2] sm:$0xff]
  %v784 = vld [vmem:[#allocation2 + $0x102] sm:$0xff]
  %v785 = vld [vmem:[#allocation2 + $0x112] sm:$0xff]
  %v786 = vld [vmem:[#allocation2 + $0x122] sm:$0xff]
  %v787 = vld [vmem:[#allocation2 + $0x132] sm:$0xff]
  %804 = vrot.lane.b32.xlu0 %v772, 64
  %v805 = vpop.permute.xlu0 %804
  %806 = vrot.lane.b32.xlu0 %v773, 64
  %v807 = vpop.permute.xlu0 %806
  %808 = vrot.lane.b32.xlu0 %v774, 64
  %v809 = vpop.permute.xlu0 %808
  %810 = vrot.lane.b32.xlu0 %v775, 64
  %v811 = vpop.permute.xlu0 %810
  %812 = vrot.lane.b32.xlu0 %v776, 64
  %v813 = vpop.permute.xlu0 %812
  %814 = vrot.lane.b32.xlu0 %v777, 64
  %v815 = vpop.permute.xlu0 %814
  %816 = vrot.lane.b32.xlu0 %v778, 64
  %v817 = vpop.permute.xlu0 %816
  %818 = vrot.lane.b32.xlu0 %v779, 64
  %v819 = vpop.permute.xlu0 %818
  %820 = vrot.lane.b32.xlu0 %v780, 64
  %v821 = vpop.permute.xlu0 %820
  %822 = vrot.lane.b32.xlu0 %v781, 64
  %v823 = vpop.permute.xlu0 %822
  %824 = vrot.lane.b32.xlu0 %v782, 64
  %v825 = vpop.permute.xlu0 %824
  %826 = vrot.lane.b32.xlu0 %v783, 64
  %v827 = vpop.permute.xlu0 %826
  %828 = vrot.lane.b32.xlu0 %v784, 64
  %v829 = vpop.permute.xlu0 %828
  %830 = vrot.lane.b32.xlu0 %v785, 64
  %v831 = vpop.permute.xlu0 %830
  %832 = vrot.lane.b32.xlu0 %v786, 64
  %v833 = vpop.permute.xlu0 %832
  %834 = vrot.lane.b32.xlu0 %v787, 64
  %v835 = vpop.permute.xlu0 %834
  %vm852 = vcmask 785920
  %853 = vst.msk [vmem:[#allocation3] sm:$0xff] %vm852, %v805
  %854 = vst.msk [vmem:[#allocation3 + $0x38] sm:$0xff] %vm852, %v807
  %855 = vst.msk [vmem:[#allocation3 + $0x70] sm:$0xff] %vm852, %v809
  %856 = vst.msk [vmem:[#allocation3 + $0xa8] sm:$0xff] %vm852, %v811
  %857 = vst.msk [vmem:[#allocation3 + $0xe0] sm:$0xff] %vm852, %v813
  %858 = vst.msk [vmem:[#allocation3 + $0x118] sm:$0xff] %vm852, %v815
  %859 = vst.msk [vmem:[#allocation3 + $0x150] sm:$0xff] %vm852, %v817
  %860 = vst.msk [vmem:[#allocation3 + $0x188] sm:$0xff] %vm852, %v819
  %861 = vst.msk [vmem:[#allocation3 + $0x1c0] sm:$0xff] %vm852, %v821
  %862 = vst.msk [vmem:[#allocation3 + $0x1f8] sm:$0xff] %vm852, %v823
  %863 = vst.msk [vmem:[#allocation3 + $0x230] sm:$0xff] %vm852, %v825
  %864 = vst.msk [vmem:[#allocation3 + $0x268] sm:$0xff] %vm852, %v827
  %865 = vst.msk [vmem:[#allocation3 + $0x2a0] sm:$0xff] %vm852, %v829
  %866 = vst.msk [vmem:[#allocation3 + $0x2d8] sm:$0xff] %vm852, %v831
  %867 = vst.msk [vmem:[#allocation3 + $0x310] sm:$0xff] %vm852, %v833
  %868 = vst.msk [vmem:[#allocation3 + $0x348] sm:$0xff] %vm852, %v835
  %v869 = vld [vmem:[#allocation2 + $0x3] sm:$0xff]
  %v870 = vld [vmem:[#allocation2 + $0x13] sm:$0xff]
  %v871 = vld [vmem:[#allocation2 + $0x23] sm:$0xff]
  %v872 = vld [vmem:[#allocation2 + $0x33] sm:$0xff]
  %v873 = vld [vmem:[#allocation2 + $0x43] sm:$0xff]
  %v874 = vld [vmem:[#allocation2 + $0x53] sm:$0xff]
  %v875 = vld [vmem:[#allocation2 + $0x63] sm:$0xff]
  %v876 = vld [vmem:[#allocation2 + $0x73] sm:$0xff]
  %v877 = vld [vmem:[#allocation2 + $0xc3] sm:$0xff]
  %v878 = vld [vmem:[#allocation2 + $0xd3] sm:$0xff]
  %v879 = vld [vmem:[#allocation2 + $0xe3] sm:$0xff]
  %v880 = vld [vmem:[#allocation2 + $0xf3] sm:$0xff]
  %v881 = vld [vmem:[#allocation2 + $0x103] sm:$0xff]
  %v882 = vld [vmem:[#allocation2 + $0x113] sm:$0xff]
  %v883 = vld [vmem:[#allocation2 + $0x123] sm:$0xff]
  %v884 = vld [vmem:[#allocation2 + $0x133] sm:$0xff]
  %901 = vrot.lane.b32.xlu0 %v869, 96
  %v902 = vpop.permute.xlu0 %901
  %903 = vrot.lane.b32.xlu0 %v870, 96
  %v904 = vpop.permute.xlu0 %903
  %905 = vrot.lane.b32.xlu0 %v871, 96
  %v906 = vpop.permute.xlu0 %905
  %907 = vrot.lane.b32.xlu0 %v872, 96
  %v908 = vpop.permute.xlu0 %907
  %909 = vrot.lane.b32.xlu0 %v873, 96
  %v910 = vpop.permute.xlu0 %909
  %911 = vrot.lane.b32.xlu0 %v874, 96
  %v912 = vpop.permute.xlu0 %911
  %913 = vrot.lane.b32.xlu0 %v875, 96
  %v914 = vpop.permute.xlu0 %913
  %915 = vrot.lane.b32.xlu0 %v876, 96
  %v916 = vpop.permute.xlu0 %915
  %917 = vrot.lane.b32.xlu0 %v877, 96
  %v918 = vpop.permute.xlu0 %917
  %919 = vrot.lane.b32.xlu0 %v878, 96
  %v920 = vpop.permute.xlu0 %919
  %921 = vrot.lane.b32.xlu0 %v879, 96
  %v922 = vpop.permute.xlu0 %921
  %923 = vrot.lane.b32.xlu0 %v880, 96
  %v924 = vpop.permute.xlu0 %923
  %925 = vrot.lane.b32.xlu0 %v881, 96
  %v926 = vpop.permute.xlu0 %925
  %927 = vrot.lane.b32.xlu0 %v882, 96
  %v928 = vpop.permute.xlu0 %927
  %929 = vrot.lane.b32.xlu0 %v883, 96
  %v930 = vpop.permute.xlu0 %929
  %931 = vrot.lane.b32.xlu0 %v884, 96
  %v932 = vpop.permute.xlu0 %931
  %vm949 = vcmask 1048320
  %950 = vst.msk [vmem:[#allocation3] sm:$0xff] %vm949, %v902
  %951 = vst.msk [vmem:[#allocation3 + $0x38] sm:$0xff] %vm949, %v904
  %952 = vst.msk [vmem:[#allocation3 + $0x70] sm:$0xff] %vm949, %v906
  %953 = vst.msk [vmem:[#allocation3 + $0xa8] sm:$0xff] %vm949, %v908
  %954 = vst.msk [vmem:[#allocation3 + $0xe0] sm:$0xff] %vm949, %v910
  %955 = vst.msk [vmem:[#allocation3 + $0x118] sm:$0xff] %vm949, %v912
  %956 = vst.msk [vmem:[#allocation3 + $0x150] sm:$0xff] %vm949, %v914
  %957 = vst.msk [vmem:[#allocation3 + $0x188] sm:$0xff] %vm949, %v916
  %958 = vst.msk [vmem:[#allocation3 + $0x1c0] sm:$0xff] %vm949, %v918
  %959 = vst.msk [vmem:[#allocation3 + $0x1f8] sm:$0xff] %vm949, %v920
  %960 = vst.msk [vmem:[#allocation3 + $0x230] sm:$0xff] %vm949, %v922
  %961 = vst.msk [vmem:[#allocation3 + $0x268] sm:$0xff] %vm949, %v924
  %962 = vst.msk [vmem:[#allocation3 + $0x2a0] sm:$0xff] %vm949, %v926
  %963 = vst.msk [vmem:[#allocation3 + $0x2d8] sm:$0xff] %vm949, %v928
  %964 = vst.msk [vmem:[#allocation3 + $0x310] sm:$0xff] %vm949, %v930
  %965 = vst.msk [vmem:[#allocation3 + $0x348] sm:$0xff] %vm949, %v932
  %v966 = vld [vmem:[#allocation2 + $0x4] sm:$0xff]
  %v967 = vld [vmem:[#allocation2 + $0x14] sm:$0xff]
  %v968 = vld [vmem:[#allocation2 + $0x24] sm:$0xff]
  %v969 = vld [vmem:[#allocation2 + $0x34] sm:$0xff]
  %v970 = vld [vmem:[#allocation2 + $0x44] sm:$0xff]
  %v971 = vld [vmem:[#allocation2 + $0x54] sm:$0xff]
  %v972 = vld [vmem:[#allocation2 + $0x64] sm:$0xff]
  %v973 = vld [vmem:[#allocation2 + $0x74] sm:$0xff]
  %v974 = vld [vmem:[#allocation2 + $0xc4] sm:$0xff]
  %v975 = vld [vmem:[#allocation2 + $0xd4] sm:$0xff]
  %v976 = vld [vmem:[#allocation2 + $0xe4] sm:$0xff]
  %v977 = vld [vmem:[#allocation2 + $0xf4] sm:$0xff]
  %v978 = vld [vmem:[#allocation2 + $0x104] sm:$0xff]
  %v979 = vld [vmem:[#allocation2 + $0x114] sm:$0xff]
  %v980 = vld [vmem:[#allocation2 + $0x124] sm:$0xff]
  %v981 = vld [vmem:[#allocation2 + $0x134] sm:$0xff]
  %982 = vst.msk [vmem:[#allocation3 + $0x8] sm:$0xff] %vm593, %v966
  %983 = vst.msk [vmem:[#allocation3 + $0x40] sm:$0xff] %vm593, %v967
  %984 = vst.msk [vmem:[#allocation3 + $0x78] sm:$0xff] %vm593, %v968
  %985 = vst.msk [vmem:[#allocation3 + $0xb0] sm:$0xff] %vm593, %v969
  %986 = vst.msk [vmem:[#allocation3 + $0xe8] sm:$0xff] %vm593, %v970
  %987 = vst.msk [vmem:[#allocation3 + $0x120] sm:$0xff] %vm593, %v971
  %988 = vst.msk [vmem:[#allocation3 + $0x158] sm:$0xff] %vm593, %v972
  %989 = vst.msk [vmem:[#allocation3 + $0x190] sm:$0xff] %vm593, %v973
  %990 = vst.msk [vmem:[#allocation3 + $0x1c8] sm:$0xff] %vm593, %v974
  %991 = vst.msk [vmem:[#allocation3 + $0x200] sm:$0xff] %vm593, %v975
  %992 = vst.msk [vmem:[#allocation3 + $0x238] sm:$0xff] %vm593, %v976
  %993 = vst.msk [vmem:[#allocation3 + $0x270] sm:$0xff] %vm593, %v977
  %994 = vst.msk [vmem:[#allocation3 + $0x2a8] sm:$0xff] %vm593, %v978
  %995 = vst.msk [vmem:[#allocation3 + $0x2e0] sm:$0xff] %vm593, %v979
  %996 = vst.msk [vmem:[#allocation3 + $0x318] sm:$0xff] %vm593, %v980
  %997 = vst.msk [vmem:[#allocation3 + $0x350] sm:$0xff] %vm593, %v981
  %s998 = scalar_lea.vmem [#allocation2], 16
  %v999 = vld [vmem:[%s998] sm:$0xff]
  %v1000 = vld [vmem:[%s998 + $0x10] sm:$0xff]
  %v1001 = vld [vmem:[%s998 + $0x20] sm:$0xff]
  %v1002 = vld [vmem:[%s998 + $0x30] sm:$0xff]
  %v1003 = vld [vmem:[%s998 + $0x40] sm:$0xff]
  %v1004 = vld [vmem:[%s998 + $0x50] sm:$0xff]
  %v1005 = vld [vmem:[%s998 + $0x60] sm:$0xff]
  %v1006 = vld [vmem:[%s998 + $0x70] sm:$0xff]
  %v1007 = vld [vmem:[%s998 + $0xc0] sm:$0xff]
  %v1008 = vld [vmem:[%s998 + $0xd0] sm:$0xff]
  %v1009 = vld [vmem:[%s998 + $0xe0] sm:$0xff]
  %v1010 = vld [vmem:[%s998 + $0xf0] sm:$0xff]
  %v1011 = vld [vmem:[%s998 + $0x100] sm:$0xff]
  %v1012 = vld [vmem:[%s998 + $0x110] sm:$0xff]
  %v1013 = vld [vmem:[%s998 + $0x120] sm:$0xff]
  %v1014 = vld [vmem:[%s998 + $0x130] sm:$0xff]
  %1031 = vrot.lane.b32.xlu0 %v999, 32
  %v1032 = vpop.permute.xlu0 %1031
  %1033 = vrot.lane.b32.xlu0 %v1000, 32
  %v1034 = vpop.permute.xlu0 %1033
  %1035 = vrot.lane.b32.xlu0 %v1001, 32
  %v1036 = vpop.permute.xlu0 %1035
  %1037 = vrot.lane.b32.xlu0 %v1002, 32
  %v1038 = vpop.permute.xlu0 %1037
  %1039 = vrot.lane.b32.xlu0 %v1003, 32
  %v1040 = vpop.permute.xlu0 %1039
  %1041 = vrot.lane.b32.xlu0 %v1004, 32
  %v1042 = vpop.permute.xlu0 %1041
  %1043 = vrot.lane.b32.xlu0 %v1005, 32
  %v1044 = vpop.permute.xlu0 %1043
  %1045 = vrot.lane.b32.xlu0 %v1006, 32
  %v1046 = vpop.permute.xlu0 %1045
  %1047 = vrot.lane.b32.xlu0 %v1007, 32
  %v1048 = vpop.permute.xlu0 %1047
  %1049 = vrot.lane.b32.xlu0 %v1008, 32
  %v1050 = vpop.permute.xlu0 %1049
  %1051 = vrot.lane.b32.xlu0 %v1009, 32
  %v1052 = vpop.permute.xlu0 %1051
  %1053 = vrot.lane.b32.xlu0 %v1010, 32
  %v1054 = vpop.permute.xlu0 %1053
  %1055 = vrot.lane.b32.xlu0 %v1011, 32
  %v1056 = vpop.permute.xlu0 %1055
  %1057 = vrot.lane.b32.xlu0 %v1012, 32
  %v1058 = vpop.permute.xlu0 %1057
  %1059 = vrot.lane.b32.xlu0 %v1013, 32
  %v1060 = vpop.permute.xlu0 %1059
  %1061 = vrot.lane.b32.xlu0 %v1014, 32
  %v1062 = vpop.permute.xlu0 %1061
  %1079 = vst.msk [vmem:[#allocation3 + $0x8] sm:$0xff] %vm755, %v1032
  %1080 = vst.msk [vmem:[#allocation3 + $0x40] sm:$0xff] %vm755, %v1034
  %1081 = vst.msk [vmem:[#allocation3 + $0x78] sm:$0xff] %vm755, %v1036
  %1082 = vst.msk [vmem:[#allocation3 + $0xb0] sm:$0xff] %vm755, %v1038
  %1083 = vst.msk [vmem:[#allocation3 + $0xe8] sm:$0xff] %vm755, %v1040
  %1084 = vst.msk [vmem:[#allocation3 + $0x120] sm:$0xff] %vm755, %v1042
  %1085 = vst.msk [vmem:[#allocation3 + $0x158] sm:$0xff] %vm755, %v1044
  %1086 = vst.msk [vmem:[#allocation3 + $0x190] sm:$0xff] %vm755, %v1046
  %1087 = vst.msk [vmem:[#allocation3 + $0x1c8] sm:$0xff] %vm755, %v1048
  %1088 = vst.msk [vmem:[#allocation3 + $0x200] sm:$0xff] %vm755, %v1050
  %1089 = vst.msk [vmem:[#allocation3 + $0x238] sm:$0xff] %vm755, %v1052
  %1090 = vst.msk [vmem:[#allocation3 + $0x270] sm:$0xff] %vm755, %v1054
  %1091 = vst.msk [vmem:[#allocation3 + $0x2a8] sm:$0xff] %vm755, %v1056
  %1092 = vst.msk [vmem:[#allocation3 + $0x2e0] sm:$0xff] %vm755, %v1058
  %1093 = vst.msk [vmem:[#allocation3 + $0x318] sm:$0xff] %vm755, %v1060
  %1094 = vst.msk [vmem:[#allocation3 + $0x350] sm:$0xff] %vm755, %v1062
  %v1095 = vld [vmem:[%s998 + $0x1] sm:$0xff]
  %v1096 = vld [vmem:[%s998 + $0x11] sm:$0xff]
  %v1097 = vld [vmem:[%s998 + $0x21] sm:$0xff]
  %v1098 = vld [vmem:[%s998 + $0x31] sm:$0xff]
  %v1099 = vld [vmem:[%s998 + $0x41] sm:$0xff]
  %v1100 = vld [vmem:[%s998 + $0x51] sm:$0xff]
  %v1101 = vld [vmem:[%s998 + $0x61] sm:$0xff]
  %v1102 = vld [vmem:[%s998 + $0x71] sm:$0xff]
  %v1103 = vld [vmem:[%s998 + $0xc1] sm:$0xff]
  %v1104 = vld [vmem:[%s998 + $0xd1] sm:$0xff]
  %v1105 = vld [vmem:[%s998 + $0xe1] sm:$0xff]
  %v1106 = vld [vmem:[%s998 + $0xf1] sm:$0xff]
  %v1107 = vld [vmem:[%s998 + $0x101] sm:$0xff]
  %v1108 = vld [vmem:[%s998 + $0x111] sm:$0xff]
  %v1109 = vld [vmem:[%s998 + $0x121] sm:$0xff]
  %v1110 = vld [vmem:[%s998 + $0x131] sm:$0xff]
  %1127 = vrot.lane.b32.xlu0 %v1095, 64
  %v1128 = vpop.permute.xlu0 %1127
  %1129 = vrot.lane.b32.xlu0 %v1096, 64
  %v1130 = vpop.permute.xlu0 %1129
  %1131 = vrot.lane.b32.xlu0 %v1097, 64
  %v1132 = vpop.permute.xlu0 %1131
  %1133 = vrot.lane.b32.xlu0 %v1098, 64
  %v1134 = vpop.permute.xlu0 %1133
  %1135 = vrot.lane.b32.xlu0 %v1099, 64
  %v1136 = vpop.permute.xlu0 %1135
  %1137 = vrot.lane.b32.xlu0 %v1100, 64
  %v1138 = vpop.permute.xlu0 %1137
  %1139 = vrot.lane.b32.xlu0 %v1101, 64
  %v1140 = vpop.permute.xlu0 %1139
  %1141 = vrot.lane.b32.xlu0 %v1102, 64
  %v1142 = vpop.permute.xlu0 %1141
  %1143 = vrot.lane.b32.xlu0 %v1103, 64
  %v1144 = vpop.permute.xlu0 %1143
  %1145 = vrot.lane.b32.xlu0 %v1104, 64
  %v1146 = vpop.permute.xlu0 %1145
  %1147 = vrot.lane.b32.xlu0 %v1105, 64
  %v1148 = vpop.permute.xlu0 %1147
  %1149 = vrot.lane.b32.xlu0 %v1106, 64
  %v1150 = vpop.permute.xlu0 %1149
  %1151 = vrot.lane.b32.xlu0 %v1107, 64
  %v1152 = vpop.permute.xlu0 %1151
  %1153 = vrot.lane.b32.xlu0 %v1108, 64
  %v1154 = vpop.permute.xlu0 %1153
  %1155 = vrot.lane.b32.xlu0 %v1109, 64
  %v1156 = vpop.permute.xlu0 %1155
  %1157 = vrot.lane.b32.xlu0 %v1110, 64
  %v1158 = vpop.permute.xlu0 %1157
  %1175 = vst.msk [vmem:[#allocation3 + $0x8] sm:$0xff] %vm852, %v1128
  %1176 = vst.msk [vmem:[#allocation3 + $0x40] sm:$0xff] %vm852, %v1130
  %1177 = vst.msk [vmem:[#allocation3 + $0x78] sm:$0xff] %vm852, %v1132
  %1178 = vst.msk [vmem:[#allocation3 + $0xb0] sm:$0xff] %vm852, %v1134
  %1179 = vst.msk [vmem:[#allocation3 + $0xe8] sm:$0xff] %vm852, %v1136
  %1180 = vst.msk [vmem:[#allocation3 + $0x120] sm:$0xff] %vm852, %v1138
  %1181 = vst.msk [vmem:[#allocation3 + $0x158] sm:$0xff] %vm852, %v1140
  %1182 = vst.msk [vmem:[#allocation3 + $0x190] sm:$0xff] %vm852, %v1142
  %1183 = vst.msk [vmem:[#allocation3 + $0x1c8] sm:$0xff] %vm852, %v1144
  %1184 = vst.msk [vmem:[#allocation3 + $0x200] sm:$0xff] %vm852, %v1146
  %1185 = vst.msk [vmem:[#allocation3 + $0x238] sm:$0xff] %vm852, %v1148
  %1186 = vst.msk [vmem:[#allocation3 + $0x270] sm:$0xff] %vm852, %v1150
  %1187 = vst.msk [vmem:[#allocation3 + $0x2a8] sm:$0xff] %vm852, %v1152
  %1188 = vst.msk [vmem:[#allocation3 + $0x2e0] sm:$0xff] %vm852, %v1154
  %1189 = vst.msk [vmem:[#allocation3 + $0x318] sm:$0xff] %vm852, %v1156
  %1190 = vst.msk [vmem:[#allocation3 + $0x350] sm:$0xff] %vm852, %v1158
  %v1191 = vld [vmem:[%s998 + $0x2] sm:$0xff]
  %v1192 = vld [vmem:[%s998 + $0x12] sm:$0xff]
  %v1193 = vld [vmem:[%s998 + $0x22] sm:$0xff]
  %v1194 = vld [vmem:[%s998 + $0x32] sm:$0xff]
  %v1195 = vld [vmem:[%s998 + $0x42] sm:$0xff]
  %v1196 = vld [vmem:[%s998 + $0x52] sm:$0xff]
  %v1197 = vld [vmem:[%s998 + $0x62] sm:$0xff]
  %v1198 = vld [vmem:[%s998 + $0x72] sm:$0xff]
  %v1199 = vld [vmem:[%s998 + $0xc2] sm:$0xff]
  %v1200 = vld [vmem:[%s998 + $0xd2] sm:$0xff]
  %v1201 = vld [vmem:[%s998 + $0xe2] sm:$0xff]
  %v1202 = vld [vmem:[%s998 + $0xf2] sm:$0xff]
  %v1203 = vld [vmem:[%s998 + $0x102] sm:$0xff]
  %v1204 = vld [vmem:[%s998 + $0x112] sm:$0xff]
  %v1205 = vld [vmem:[%s998 + $0x122] sm:$0xff]
  %v1206 = vld [vmem:[%s998 + $0x132] sm:$0xff]
  %1223 = vrot.lane.b32.xlu0 %v1191, 96
  %v1224 = vpop.permute.xlu0 %1223
  %1225 = vrot.lane.b32.xlu0 %v1192, 96
  %v1226 = vpop.permute.xlu0 %1225
  %1227 = vrot.lane.b32.xlu0 %v1193, 96
  %v1228 = vpop.permute.xlu0 %1227
  %1229 = vrot.lane.b32.xlu0 %v1194, 96
  %v1230 = vpop.permute.xlu0 %1229
  %1231 = vrot.lane.b32.xlu0 %v1195, 96
  %v1232 = vpop.permute.xlu0 %1231
  %1233 = vrot.lane.b32.xlu0 %v1196, 96
  %v1234 = vpop.permute.xlu0 %1233
  %1235 = vrot.lane.b32.xlu0 %v1197, 96
  %v1236 = vpop.permute.xlu0 %1235
  %1237 = vrot.lane.b32.xlu0 %v1198, 96
  %v1238 = vpop.permute.xlu0 %1237
  %1239 = vrot.lane.b32.xlu0 %v1199, 96
  %v1240 = vpop.permute.xlu0 %1239
  %1241 = vrot.lane.b32.xlu0 %v1200, 96
  %v1242 = vpop.permute.xlu0 %1241
  %1243 = vrot.lane.b32.xlu0 %v1201, 96
  %v1244 = vpop.permute.xlu0 %1243
  %1245 = vrot.lane.b32.xlu0 %v1202, 96
  %v1246 = vpop.permute.xlu0 %1245
  %1247 = vrot.lane.b32.xlu0 %v1203, 96
  %v1248 = vpop.permute.xlu0 %1247
  %1249 = vrot.lane.b32.xlu0 %v1204, 96
  %v1250 = vpop.permute.xlu0 %1249
  %1251 = vrot.lane.b32.xlu0 %v1205, 96
  %v1252 = vpop.permute.xlu0 %1251
  %1253 = vrot.lane.b32.xlu0 %v1206, 96
  %v1254 = vpop.permute.xlu0 %1253
  %1271 = vst.msk [vmem:[#allocation3 + $0x8] sm:$0xff] %vm949, %v1224
  %1272 = vst.msk [vmem:[#allocation3 + $0x40] sm:$0xff] %vm949, %v1226
  %1273 = vst.msk [vmem:[#allocation3 + $0x78] sm:$0xff] %vm949, %v1228
  %1274 = vst.msk [vmem:[#allocation3 + $0xb0] sm:$0xff] %vm949, %v1230
  %1275 = vst.msk [vmem:[#allocation3 + $0xe8] sm:$0xff] %vm949, %v1232
  %1276 = vst.msk [vmem:[#allocation3 + $0x120] sm:$0xff] %vm949, %v1234
  %1277 = vst.msk [vmem:[#allocation3 + $0x158] sm:$0xff] %vm949, %v1236
  %1278 = vst.msk [vmem:[#allocation3 + $0x190] sm:$0xff] %vm949, %v1238
  %1279 = vst.msk [vmem:[#allocation3 + $0x1c8] sm:$0xff] %vm949, %v1240
  %1280 = vst.msk [vmem:[#allocation3 + $0x200] sm:$0xff] %vm949, %v1242
  %1281 = vst.msk [vmem:[#allocation3 + $0x238] sm:$0xff] %vm949, %v1244
  %1282 = vst.msk [vmem:[#allocation3 + $0x270] sm:$0xff] %vm949, %v1246
  %1283 = vst.msk [vmem:[#allocation3 + $0x2a8] sm:$0xff] %vm949, %v1248
  %1284 = vst.msk [vmem:[#allocation3 + $0x2e0] sm:$0xff] %vm949, %v1250
  %1285 = vst.msk [vmem:[#allocation3 + $0x318] sm:$0xff] %vm949, %v1252
  %1286 = vst.msk [vmem:[#allocation3 + $0x350] sm:$0xff] %vm949, %v1254
  %v1287 = vld [vmem:[%s998 + $0x3] sm:$0xff]
  %v1288 = vld [vmem:[%s998 + $0x13] sm:$0xff]
  %v1289 = vld [vmem:[%s998 + $0x23] sm:$0xff]
  %v1290 = vld [vmem:[%s998 + $0x33] sm:$0xff]
  %v1291 = vld [vmem:[%s998 + $0x43] sm:$0xff]
  %v1292 = vld [vmem:[%s998 + $0x53] sm:$0xff]
  %v1293 = vld [vmem:[%s998 + $0x63] sm:$0xff]
  %v1294 = vld [vmem:[%s998 + $0x73] sm:$0xff]
  %v1295 = vld [vmem:[%s998 + $0xc3] sm:$0xff]
  %v1296 = vld [vmem:[%s998 + $0xd3] sm:$0xff]
  %v1297 = vld [vmem:[%s998 + $0xe3] sm:$0xff]
  %v1298 = vld [vmem:[%s998 + $0xf3] sm:$0xff]
  %v1299 = vld [vmem:[%s998 + $0x103] sm:$0xff]
  %v1300 = vld [vmem:[%s998 + $0x113] sm:$0xff]
  %v1301 = vld [vmem:[%s998 + $0x123] sm:$0xff]
  %v1302 = vld [vmem:[%s998 + $0x133] sm:$0xff]
  %1303 = vst.msk [vmem:[#allocation3 + $0x10] sm:$0xff] %vm593, %v1287
  %1304 = vst.msk [vmem:[#allocation3 + $0x48] sm:$0xff] %vm593, %v1288
  %1305 = vst.msk [vmem:[#allocation3 + $0x80] sm:$0xff] %vm593, %v1289
  %1306 = vst.msk [vmem:[#allocation3 + $0xb8] sm:$0xff] %vm593, %v1290
  %1307 = vst.msk [vmem:[#allocation3 + $0xf0] sm:$0xff] %vm593, %v1291
  %1308 = vst.msk [vmem:[#allocation3 + $0x128] sm:$0xff] %vm593, %v1292
  %1309 = vst.msk [vmem:[#allocation3 + $0x160] sm:$0xff] %vm593, %v1293
  %1310 = vst.msk [vmem:[#allocation3 + $0x198] sm:$0xff] %vm593, %v1294
  %1311 = vst.msk [vmem:[#allocation3 + $0x1d0] sm:$0xff] %vm593, %v1295
  %1312 = vst.msk [vmem:[#allocation3 + $0x208] sm:$0xff] %vm593, %v1296
  %1313 = vst.msk [vmem:[#allocation3 + $0x240] sm:$0xff] %vm593, %v1297
  %1314 = vst.msk [vmem:[#allocation3 + $0x278] sm:$0xff] %vm593, %v1298
  %1315 = vst.msk [vmem:[#allocation3 + $0x2b0] sm:$0xff] %vm593, %v1299
  %1316 = vst.msk [vmem:[#allocation3 + $0x2e8] sm:$0xff] %vm593, %v1300
  %1317 = vst.msk [vmem:[#allocation3 + $0x320] sm:$0xff] %vm593, %v1301
  %1318 = vst.msk [vmem:[#allocation3 + $0x358] sm:$0xff] %vm593, %v1302
  %v1319 = vld [vmem:[%s998 + $0x4] sm:$0xff]
  %v1320 = vld [vmem:[%s998 + $0x14] sm:$0xff]
  %v1321 = vld [vmem:[%s998 + $0x24] sm:$0xff]
  %v1322 = vld [vmem:[%s998 + $0x34] sm:$0xff]
  %v1323 = vld [vmem:[%s998 + $0x44] sm:$0xff]
  %v1324 = vld [vmem:[%s998 + $0x54] sm:$0xff]
  %v1325 = vld [vmem:[%s998 + $0x64] sm:$0xff]
  %v1326 = vld [vmem:[%s998 + $0x74] sm:$0xff]
  %v1327 = vld [vmem:[%s998 + $0xc4] sm:$0xff]
  %v1328 = vld [vmem:[%s998 + $0xd4] sm:$0xff]
  %v1329 = vld [vmem:[%s998 + $0xe4] sm:$0xff]
  %v1330 = vld [vmem:[%s998 + $0xf4] sm:$0xff]
  %v1331 = vld [vmem:[%s998 + $0x104] sm:$0xff]
  %v1332 = vld [vmem:[%s998 + $0x114] sm:$0xff]
  %v1333 = vld [vmem:[%s998 + $0x124] sm:$0xff]
  %v1334 = vld [vmem:[%s998 + $0x134] sm:$0xff]
  %1351 = vrot.lane.b32.xlu0 %v1319, 32
  %v1352 = vpop.permute.xlu0 %1351
  %1353 = vrot.lane.b32.xlu0 %v1320, 32
  %v1354 = vpop.permute.xlu0 %1353
  %1355 = vrot.lane.b32.xlu0 %v1321, 32
  %v1356 = vpop.permute.xlu0 %1355
  %1357 = vrot.lane.b32.xlu0 %v1322, 32
  %v1358 = vpop.permute.xlu0 %1357
  %1359 = vrot.lane.b32.xlu0 %v1323, 32
  %v1360 = vpop.permute.xlu0 %1359
  %1361 = vrot.lane.b32.xlu0 %v1324, 32
  %v1362 = vpop.permute.xlu0 %1361
  %1363 = vrot.lane.b32.xlu0 %v1325, 32
  %v1364 = vpop.permute.xlu0 %1363
  %1365 = vrot.lane.b32.xlu0 %v1326, 32
  %v1366 = vpop.permute.xlu0 %1365
  %1367 = vrot.lane.b32.xlu0 %v1327, 32
  %v1368 = vpop.permute.xlu0 %1367
  %1369 = vrot.lane.b32.xlu0 %v1328, 32
  %v1370 = vpop.permute.xlu0 %1369
  %1371 = vrot.lane.b32.xlu0 %v1329, 32
  %v1372 = vpop.permute.xlu0 %1371
  %1373 = vrot.lane.b32.xlu0 %v1330, 32
  %v1374 = vpop.permute.xlu0 %1373
  %1375 = vrot.lane.b32.xlu0 %v1331, 32
  %v1376 = vpop.permute.xlu0 %1375
  %1377 = vrot.lane.b32.xlu0 %v1332, 32
  %v1378 = vpop.permute.xlu0 %1377
  %1379 = vrot.lane.b32.xlu0 %v1333, 32
  %v1380 = vpop.permute.xlu0 %1379
  %1381 = vrot.lane.b32.xlu0 %v1334, 32
  %v1382 = vpop.permute.xlu0 %1381
  %1399 = vst.msk [vmem:[#allocation3 + $0x10] sm:$0xff] %vm755, %v1352
  %1400 = vst.msk [vmem:[#allocation3 + $0x48] sm:$0xff] %vm755, %v1354
  %1401 = vst.msk [vmem:[#allocation3 + $0x80] sm:$0xff] %vm755, %v1356
  %1402 = vst.msk [vmem:[#allocation3 + $0xb8] sm:$0xff] %vm755, %v1358
  %1403 = vst.msk [vmem:[#allocation3 + $0xf0] sm:$0xff] %vm755, %v1360
  %1404 = vst.msk [vmem:[#allocation3 + $0x128] sm:$0xff] %vm755, %v1362
  %1405 = vst.msk [vmem:[#allocation3 + $0x160] sm:$0xff] %vm755, %v1364
  %1406 = vst.msk [vmem:[#allocation3 + $0x198] sm:$0xff] %vm755, %v1366
  %1407 = vst.msk [vmem:[#allocation3 + $0x1d0] sm:$0xff] %vm755, %v1368
  %1408 = vst.msk [vmem:[#allocation3 + $0x208] sm:$0xff] %vm755, %v1370
  %1409 = vst.msk [vmem:[#allocation3 + $0x240] sm:$0xff] %vm755, %v1372
  %1410 = vst.msk [vmem:[#allocation3 + $0x278] sm:$0xff] %vm755, %v1374
  %1411 = vst.msk [vmem:[#allocation3 + $0x2b0] sm:$0xff] %vm755, %v1376
  %1412 = vst.msk [vmem:[#allocation3 + $0x2e8] sm:$0xff] %vm755, %v1378
  %1413 = vst.msk [vmem:[#allocation3 + $0x320] sm:$0xff] %vm755, %v1380
  %1414 = vst.msk [vmem:[#allocation3 + $0x358] sm:$0xff] %vm755, %v1382
  %s1415 = scalar_lea.vmem [#allocation2], 32
  %v1416 = vld [vmem:[%s1415] sm:$0xff]
  %v1417 = vld [vmem:[%s1415 + $0x10] sm:$0xff]
  %v1418 = vld [vmem:[%s1415 + $0x20] sm:$0xff]
  %v1419 = vld [vmem:[%s1415 + $0x30] sm:$0xff]
  %v1420 = vld [vmem:[%s1415 + $0x40] sm:$0xff]
  %v1421 = vld [vmem:[%s1415 + $0x50] sm:$0xff]
  %v1422 = vld [vmem:[%s1415 + $0x60] sm:$0xff]
  %v1423 = vld [vmem:[%s1415 + $0x70] sm:$0xff]
  %v1424 = vld [vmem:[%s1415 + $0xc0] sm:$0xff]
  %v1425 = vld [vmem:[%s1415 + $0xd0] sm:$0xff]
  %v1426 = vld [vmem:[%s1415 + $0xe0] sm:$0xff]
  %v1427 = vld [vmem:[%s1415 + $0xf0] sm:$0xff]
  %v1428 = vld [vmem:[%s1415 + $0x100] sm:$0xff]
  %v1429 = vld [vmem:[%s1415 + $0x110] sm:$0xff]
  %v1430 = vld [vmem:[%s1415 + $0x120] sm:$0xff]
  %v1431 = vld [vmem:[%s1415 + $0x130] sm:$0xff]
  %1448 = vrot.lane.b32.xlu0 %v1416, 64
  %v1449 = vpop.permute.xlu0 %1448
  %1450 = vrot.lane.b32.xlu0 %v1417, 64
  %v1451 = vpop.permute.xlu0 %1450
  %1452 = vrot.lane.b32.xlu0 %v1418, 64
  %v1453 = vpop.permute.xlu0 %1452
  %1454 = vrot.lane.b32.xlu0 %v1419, 64
  %v1455 = vpop.permute.xlu0 %1454
  %1456 = vrot.lane.b32.xlu0 %v1420, 64
  %v1457 = vpop.permute.xlu0 %1456
  %1458 = vrot.lane.b32.xlu0 %v1421, 64
  %v1459 = vpop.permute.xlu0 %1458
  %1460 = vrot.lane.b32.xlu0 %v1422, 64
  %v1461 = vpop.permute.xlu0 %1460
  %1462 = vrot.lane.b32.xlu0 %v1423, 64
  %v1463 = vpop.permute.xlu0 %1462
  %1464 = vrot.lane.b32.xlu0 %v1424, 64
  %v1465 = vpop.permute.xlu0 %1464
  %1466 = vrot.lane.b32.xlu0 %v1425, 64
  %v1467 = vpop.permute.xlu0 %1466
  %1468 = vrot.lane.b32.xlu0 %v1426, 64
  %v1469 = vpop.permute.xlu0 %1468
  %1470 = vrot.lane.b32.xlu0 %v1427, 64
  %v1471 = vpop.permute.xlu0 %1470
  %1472 = vrot.lane.b32.xlu0 %v1428, 64
  %v1473 = vpop.permute.xlu0 %1472
  %1474 = vrot.lane.b32.xlu0 %v1429, 64
  %v1475 = vpop.permute.xlu0 %1474
  %1476 = vrot.lane.b32.xlu0 %v1430, 64
  %v1477 = vpop.permute.xlu0 %1476
  %1478 = vrot.lane.b32.xlu0 %v1431, 64
  %v1479 = vpop.permute.xlu0 %1478
  %1496 = vst.msk [vmem:[#allocation3 + $0x10] sm:$0xff] %vm852, %v1449
  %1497 = vst.msk [vmem:[#allocation3 + $0x48] sm:$0xff] %vm852, %v1451
  %1498 = vst.msk [vmem:[#allocation3 + $0x80] sm:$0xff] %vm852, %v1453
  %1499 = vst.msk [vmem:[#allocation3 + $0xb8] sm:$0xff] %vm852, %v1455
  %1500 = vst.msk [vmem:[#allocation3 + $0xf0] sm:$0xff] %vm852, %v1457
  %1501 = vst.msk [vmem:[#allocation3 + $0x128] sm:$0xff] %vm852, %v1459
  %1502 = vst.msk [vmem:[#allocation3 + $0x160] sm:$0xff] %vm852, %v1461
  %1503 = vst.msk [vmem:[#allocation3 + $0x198] sm:$0xff] %vm852, %v1463
  %1504 = vst.msk [vmem:[#allocation3 + $0x1d0] sm:$0xff] %vm852, %v1465
  %1505 = vst.msk [vmem:[#allocation3 + $0x208] sm:$0xff] %vm852, %v1467
  %1506 = vst.msk [vmem:[#allocation3 + $0x240] sm:$0xff] %vm852, %v1469
  %1507 = vst.msk [vmem:[#allocation3 + $0x278] sm:$0xff] %vm852, %v1471
  %1508 = vst.msk [vmem:[#allocation3 + $0x2b0] sm:$0xff] %vm852, %v1473
  %1509 = vst.msk [vmem:[#allocation3 + $0x2e8] sm:$0xff] %vm852, %v1475
  %1510 = vst.msk [vmem:[#allocation3 + $0x320] sm:$0xff] %vm852, %v1477
  %1511 = vst.msk [vmem:[#allocation3 + $0x358] sm:$0xff] %vm852, %v1479
  %v1512 = vld [vmem:[%s1415 + $0x1] sm:$0xff]
  %v1513 = vld [vmem:[%s1415 + $0x11] sm:$0xff]
  %v1514 = vld [vmem:[%s1415 + $0x21] sm:$0xff]
  %v1515 = vld [vmem:[%s1415 + $0x31] sm:$0xff]
  %v1516 = vld [vmem:[%s1415 + $0x41] sm:$0xff]
  %v1517 = vld [vmem:[%s1415 + $0x51] sm:$0xff]
  %v1518 = vld [vmem:[%s1415 + $0x61] sm:$0xff]
  %v1519 = vld [vmem:[%s1415 + $0x71] sm:$0xff]
  %v1520 = vld [vmem:[%s1415 + $0xc1] sm:$0xff]
  %v1521 = vld [vmem:[%s1415 + $0xd1] sm:$0xff]
  %v1522 = vld [vmem:[%s1415 + $0xe1] sm:$0xff]
  %v1523 = vld [vmem:[%s1415 + $0xf1] sm:$0xff]
  %v1524 = vld [vmem:[%s1415 + $0x101] sm:$0xff]
  %v1525 = vld [vmem:[%s1415 + $0x111] sm:$0xff]
  %v1526 = vld [vmem:[%s1415 + $0x121] sm:$0xff]
  %v1527 = vld [vmem:[%s1415 + $0x131] sm:$0xff]
  %1544 = vrot.lane.b32.xlu0 %v1512, 96
  %v1545 = vpop.permute.xlu0 %1544
  %1546 = vrot.lane.b32.xlu0 %v1513, 96
  %v1547 = vpop.permute.xlu0 %1546
  %1548 = vrot.lane.b32.xlu0 %v1514, 96
  %v1549 = vpop.permute.xlu0 %1548
  %1550 = vrot.lane.b32.xlu0 %v1515, 96
  %v1551 = vpop.permute.xlu0 %1550
  %1552 = vrot.lane.b32.xlu0 %v1516, 96
  %v1553 = vpop.permute.xlu0 %1552
  %1554 = vrot.lane.b32.xlu0 %v1517, 96
  %v1555 = vpop.permute.xlu0 %1554
  %1556 = vrot.lane.b32.xlu0 %v1518, 96
  %v1557 = vpop.permute.xlu0 %1556
  %1558 = vrot.lane.b32.xlu0 %v1519, 96
  %v1559 = vpop.permute.xlu0 %1558
  %1560 = vrot.lane.b32.xlu0 %v1520, 96
  %v1561 = vpop.permute.xlu0 %1560
  %1562 = vrot.lane.b32.xlu0 %v1521, 96
  %v1563 = vpop.permute.xlu0 %1562
  %1564 = vrot.lane.b32.xlu0 %v1522, 96
  %v1565 = vpop.permute.xlu0 %1564
  %1566 = vrot.lane.b32.xlu0 %v1523, 96
  %v1567 = vpop.permute.xlu0 %1566
  %1568 = vrot.lane.b32.xlu0 %v1524, 96
  %v1569 = vpop.permute.xlu0 %1568
  %1570 = vrot.lane.b32.xlu0 %v1525, 96
  %v1571 = vpop.permute.xlu0 %1570
  %1572 = vrot.lane.b32.xlu0 %v1526, 96
  %v1573 = vpop.permute.xlu0 %1572
  %1574 = vrot.lane.b32.xlu0 %v1527, 96
  %v1575 = vpop.permute.xlu0 %1574
  %1592 = vst.msk [vmem:[#allocation3 + $0x10] sm:$0xff] %vm949, %v1545
  %1593 = vst.msk [vmem:[#allocation3 + $0x48] sm:$0xff] %vm949, %v1547
  %1594 = vst.msk [vmem:[#allocation3 + $0x80] sm:$0xff] %vm949, %v1549
  %1595 = vst.msk [vmem:[#allocation3 + $0xb8] sm:$0xff] %vm949, %v1551
  %1596 = vst.msk [vmem:[#allocation3 + $0xf0] sm:$0xff] %vm949, %v1553
  %1597 = vst.msk [vmem:[#allocation3 + $0x128] sm:$0xff] %vm949, %v1555
  %1598 = vst.msk [vmem:[#allocation3 + $0x160] sm:$0xff] %vm949, %v1557
  %1599 = vst.msk [vmem:[#allocation3 + $0x198] sm:$0xff] %vm949, %v1559
  %1600 = vst.msk [vmem:[#allocation3 + $0x1d0] sm:$0xff] %vm949, %v1561
  %1601 = vst.msk [vmem:[#allocation3 + $0x208] sm:$0xff] %vm949, %v1563
  %1602 = vst.msk [vmem:[#allocation3 + $0x240] sm:$0xff] %vm949, %v1565
  %1603 = vst.msk [vmem:[#allocation3 + $0x278] sm:$0xff] %vm949, %v1567
  %1604 = vst.msk [vmem:[#allocation3 + $0x2b0] sm:$0xff] %vm949, %v1569
  %1605 = vst.msk [vmem:[#allocation3 + $0x2e8] sm:$0xff] %vm949, %v1571
  %1606 = vst.msk [vmem:[#allocation3 + $0x320] sm:$0xff] %vm949, %v1573
  %1607 = vst.msk [vmem:[#allocation3 + $0x358] sm:$0xff] %vm949, %v1575
  %v1608 = vld [vmem:[%s1415 + $0x2] sm:$0xff]
  %v1609 = vld [vmem:[%s1415 + $0x12] sm:$0xff]
  %v1610 = vld [vmem:[%s1415 + $0x22] sm:$0xff]
  %v1611 = vld [vmem:[%s1415 + $0x32] sm:$0xff]
  %v1612 = vld [vmem:[%s1415 + $0x42] sm:$0xff]
  %v1613 = vld [vmem:[%s1415 + $0x52] sm:$0xff]
  %v1614 = vld [vmem:[%s1415 + $0x62] sm:$0xff]
  %v1615 = vld [vmem:[%s1415 + $0x72] sm:$0xff]
  %v1616 = vld [vmem:[%s1415 + $0xc2] sm:$0xff]
  %v1617 = vld [vmem:[%s1415 + $0xd2] sm:$0xff]
  %v1618 = vld [vmem:[%s1415 + $0xe2] sm:$0xff]
  %v1619 = vld [vmem:[%s1415 + $0xf2] sm:$0xff]
  %v1620 = vld [vmem:[%s1415 + $0x102] sm:$0xff]
  %v1621 = vld [vmem:[%s1415 + $0x112] sm:$0xff]
  %v1622 = vld [vmem:[%s1415 + $0x122] sm:$0xff]
  %v1623 = vld [vmem:[%s1415 + $0x132] sm:$0xff]
  %1624 = vst.msk [vmem:[#allocation3 + $0x18] sm:$0xff] %vm593, %v1608
  %1625 = vst.msk [vmem:[#allocation3 + $0x50] sm:$0xff] %vm593, %v1609
  %1626 = vst.msk [vmem:[#allocation3 + $0x88] sm:$0xff] %vm593, %v1610
  %1627 = vst.msk [vmem:[#allocation3 + $0xc0] sm:$0xff] %vm593, %v1611
  %1628 = vst.msk [vmem:[#allocation3 + $0xf8] sm:$0xff] %vm593, %v1612
  %1629 = vst.msk [vmem:[#allocation3 + $0x130] sm:$0xff] %vm593, %v1613
  %1630 = vst.msk [vmem:[#allocation3 + $0x168] sm:$0xff] %vm593, %v1614
  %1631 = vst.msk [vmem:[#allocation3 + $0x1a0] sm:$0xff] %vm593, %v1615
  %1632 = vst.msk [vmem:[#allocation3 + $0x1d8] sm:$0xff] %vm593, %v1616
  %1633 = vst.msk [vmem:[#allocation3 + $0x210] sm:$0xff] %vm593, %v1617
  %1634 = vst.msk [vmem:[#allocation3 + $0x248] sm:$0xff] %vm593, %v1618
  %1635 = vst.msk [vmem:[#allocation3 + $0x280] sm:$0xff] %vm593, %v1619
  %1636 = vst.msk [vmem:[#allocation3 + $0x2b8] sm:$0xff] %vm593, %v1620
  %1637 = vst.msk [vmem:[#allocation3 + $0x2f0] sm:$0xff] %vm593, %v1621
  %1638 = vst.msk [vmem:[#allocation3 + $0x328] sm:$0xff] %vm593, %v1622
  %1639 = vst.msk [vmem:[#allocation3 + $0x360] sm:$0xff] %vm593, %v1623
  %v1640 = vld [vmem:[%s1415 + $0x3] sm:$0xff]
  %v1641 = vld [vmem:[%s1415 + $0x13] sm:$0xff]
  %v1642 = vld [vmem:[%s1415 + $0x23] sm:$0xff]
  %v1643 = vld [vmem:[%s1415 + $0x33] sm:$0xff]
  %v1644 = vld [vmem:[%s1415 + $0x43] sm:$0xff]
  %v1645 = vld [vmem:[%s1415 + $0x53] sm:$0xff]
  %v1646 = vld [vmem:[%s1415 + $0x63] sm:$0xff]
  %v1647 = vld [vmem:[%s1415 + $0x73] sm:$0xff]
  %v1648 = vld [vmem:[%s1415 + $0xc3] sm:$0xff]
  %v1649 = vld [vmem:[%s1415 + $0xd3] sm:$0xff]
  %v1650 = vld [vmem:[%s1415 + $0xe3] sm:$0xff]
  %v1651 = vld [vmem:[%s1415 + $0xf3] sm:$0xff]
  %v1652 = vld [vmem:[%s1415 + $0x103] sm:$0xff]
  %v1653 = vld [vmem:[%s1415 + $0x113] sm:$0xff]
  %v1654 = vld [vmem:[%s1415 + $0x123] sm:$0xff]
  %v1655 = vld [vmem:[%s1415 + $0x133] sm:$0xff]
  %1672 = vrot.lane.b32.xlu0 %v1640, 32
  %v1673 = vpop.permute.xlu0 %1672
  %1674 = vrot.lane.b32.xlu0 %v1641, 32
  %v1675 = vpop.permute.xlu0 %1674
  %1676 = vrot.lane.b32.xlu0 %v1642, 32
  %v1677 = vpop.permute.xlu0 %1676
  %1678 = vrot.lane.b32.xlu0 %v1643, 32
  %v1679 = vpop.permute.xlu0 %1678
  %1680 = vrot.lane.b32.xlu0 %v1644, 32
  %v1681 = vpop.permute.xlu0 %1680
  %1682 = vrot.lane.b32.xlu0 %v1645, 32
  %v1683 = vpop.permute.xlu0 %1682
  %1684 = vrot.lane.b32.xlu0 %v1646, 32
  %v1685 = vpop.permute.xlu0 %1684
  %1686 = vrot.lane.b32.xlu0 %v1647, 32
  %v1687 = vpop.permute.xlu0 %1686
  %1688 = vrot.lane.b32.xlu0 %v1648, 32
  %v1689 = vpop.permute.xlu0 %1688
  %1690 = vrot.lane.b32.xlu0 %v1649, 32
  %v1691 = vpop.permute.xlu0 %1690
  %1692 = vrot.lane.b32.xlu0 %v1650, 32
  %v1693 = vpop.permute.xlu0 %1692
  %1694 = vrot.lane.b32.xlu0 %v1651, 32
  %v1695 = vpop.permute.xlu0 %1694
  %1696 = vrot.lane.b32.xlu0 %v1652, 32
  %v1697 = vpop.permute.xlu0 %1696
  %1698 = vrot.lane.b32.xlu0 %v1653, 32
  %v1699 = vpop.permute.xlu0 %1698
  %1700 = vrot.lane.b32.xlu0 %v1654, 32
  %v1701 = vpop.permute.xlu0 %1700
  %1702 = vrot.lane.b32.xlu0 %v1655, 32
  %v1703 = vpop.permute.xlu0 %1702
  %1720 = vst.msk [vmem:[#allocation3 + $0x18] sm:$0xff] %vm755, %v1673
  %1721 = vst.msk [vmem:[#allocation3 + $0x50] sm:$0xff] %vm755, %v1675
  %1722 = vst.msk [vmem:[#allocation3 + $0x88] sm:$0xff] %vm755, %v1677
  %1723 = vst.msk [vmem:[#allocation3 + $0xc0] sm:$0xff] %vm755, %v1679
  %1724 = vst.msk [vmem:[#allocation3 + $0xf8] sm:$0xff] %vm755, %v1681
  %1725 = vst.msk [vmem:[#allocation3 + $0x130] sm:$0xff] %vm755, %v1683
  %1726 = vst.msk [vmem:[#allocation3 + $0x168] sm:$0xff] %vm755, %v1685
  %1727 = vst.msk [vmem:[#allocation3 + $0x1a0] sm:$0xff] %vm755, %v1687
  %1728 = vst.msk [vmem:[#allocation3 + $0x1d8] sm:$0xff] %vm755, %v1689
  %1729 = vst.msk [vmem:[#allocation3 + $0x210] sm:$0xff] %vm755, %v1691
  %1730 = vst.msk [vmem:[#allocation3 + $0x248] sm:$0xff] %vm755, %v1693
  %1731 = vst.msk [vmem:[#allocation3 + $0x280] sm:$0xff] %vm755, %v1695
  %1732 = vst.msk [vmem:[#allocation3 + $0x2b8] sm:$0xff] %vm755, %v1697
  %1733 = vst.msk [vmem:[#allocation3 + $0x2f0] sm:$0xff] %vm755, %v1699
  %1734 = vst.msk [vmem:[#allocation3 + $0x328] sm:$0xff] %vm755, %v1701
  %1735 = vst.msk [vmem:[#allocation3 + $0x360] sm:$0xff] %vm755, %v1703
  %v1736 = vld [vmem:[%s1415 + $0x4] sm:$0xff]
  %v1737 = vld [vmem:[%s1415 + $0x14] sm:$0xff]
  %v1738 = vld [vmem:[%s1415 + $0x24] sm:$0xff]
  %v1739 = vld [vmem:[%s1415 + $0x34] sm:$0xff]
  %v1740 = vld [vmem:[%s1415 + $0x44] sm:$0xff]
  %v1741 = vld [vmem:[%s1415 + $0x54] sm:$0xff]
  %v1742 = vld [vmem:[%s1415 + $0x64] sm:$0xff]
  %v1743 = vld [vmem:[%s1415 + $0x74] sm:$0xff]
  %v1744 = vld [vmem:[%s1415 + $0xc4] sm:$0xff]
  %v1745 = vld [vmem:[%s1415 + $0xd4] sm:$0xff]
  %v1746 = vld [vmem:[%s1415 + $0xe4] sm:$0xff]
  %v1747 = vld [vmem:[%s1415 + $0xf4] sm:$0xff]
  %v1748 = vld [vmem:[%s1415 + $0x104] sm:$0xff]
  %v1749 = vld [vmem:[%s1415 + $0x114] sm:$0xff]
  %v1750 = vld [vmem:[%s1415 + $0x124] sm:$0xff]
  %v1751 = vld [vmem:[%s1415 + $0x134] sm:$0xff]
  %1768 = vrot.lane.b32.xlu0 %v1736, 64
  %v1769 = vpop.permute.xlu0 %1768
  %1770 = vrot.lane.b32.xlu0 %v1737, 64
  %v1771 = vpop.permute.xlu0 %1770
  %1772 = vrot.lane.b32.xlu0 %v1738, 64
  %v1773 = vpop.permute.xlu0 %1772
  %1774 = vrot.lane.b32.xlu0 %v1739, 64
  %v1775 = vpop.permute.xlu0 %1774
  %1776 = vrot.lane.b32.xlu0 %v1740, 64
  %v1777 = vpop.permute.xlu0 %1776
  %1778 = vrot.lane.b32.xlu0 %v1741, 64
  %v1779 = vpop.permute.xlu0 %1778
  %1780 = vrot.lane.b32.xlu0 %v1742, 64
  %v1781 = vpop.permute.xlu0 %1780
  %1782 = vrot.lane.b32.xlu0 %v1743, 64
  %v1783 = vpop.permute.xlu0 %1782
  %1784 = vrot.lane.b32.xlu0 %v1744, 64
  %v1785 = vpop.permute.xlu0 %1784
  %1786 = vrot.lane.b32.xlu0 %v1745, 64
  %v1787 = vpop.permute.xlu0 %1786
  %1788 = vrot.lane.b32.xlu0 %v1746, 64
  %v1789 = vpop.permute.xlu0 %1788
  %1790 = vrot.lane.b32.xlu0 %v1747, 64
  %v1791 = vpop.permute.xlu0 %1790
  %1792 = vrot.lane.b32.xlu0 %v1748, 64
  %v1793 = vpop.permute.xlu0 %1792
  %1794 = vrot.lane.b32.xlu0 %v1749, 64
  %v1795 = vpop.permute.xlu0 %1794
  %1796 = vrot.lane.b32.xlu0 %v1750, 64
  %v1797 = vpop.permute.xlu0 %1796
  %1798 = vrot.lane.b32.xlu0 %v1751, 64
  %v1799 = vpop.permute.xlu0 %1798
  %1816 = vst.msk [vmem:[#allocation3 + $0x18] sm:$0xff] %vm852, %v1769
  %1817 = vst.msk [vmem:[#allocation3 + $0x50] sm:$0xff] %vm852, %v1771
  %1818 = vst.msk [vmem:[#allocation3 + $0x88] sm:$0xff] %vm852, %v1773
  %1819 = vst.msk [vmem:[#allocation3 + $0xc0] sm:$0xff] %vm852, %v1775
  %1820 = vst.msk [vmem:[#allocation3 + $0xf8] sm:$0xff] %vm852, %v1777
  %1821 = vst.msk [vmem:[#allocation3 + $0x130] sm:$0xff] %vm852, %v1779
  %1822 = vst.msk [vmem:[#allocation3 + $0x168] sm:$0xff] %vm852, %v1781
  %1823 = vst.msk [vmem:[#allocation3 + $0x1a0] sm:$0xff] %vm852, %v1783
  %1824 = vst.msk [vmem:[#allocation3 + $0x1d8] sm:$0xff] %vm852, %v1785
  %1825 = vst.msk [vmem:[#allocation3 + $0x210] sm:$0xff] %vm852, %v1787
  %1826 = vst.msk [vmem:[#allocation3 + $0x248] sm:$0xff] %vm852, %v1789
  %1827 = vst.msk [vmem:[#allocation3 + $0x280] sm:$0xff] %vm852, %v1791
  %1828 = vst.msk [vmem:[#allocation3 + $0x2b8] sm:$0xff] %vm852, %v1793
  %1829 = vst.msk [vmem:[#allocation3 + $0x2f0] sm:$0xff] %vm852, %v1795
  %1830 = vst.msk [vmem:[#allocation3 + $0x328] sm:$0xff] %vm852, %v1797
  %1831 = vst.msk [vmem:[#allocation3 + $0x360] sm:$0xff] %vm852, %v1799
  %s1832 = scalar_lea.vmem [#allocation2], 48
  %v1833 = vld [vmem:[%s1832] sm:$0xff]
  %v1834 = vld [vmem:[%s1832 + $0x10] sm:$0xff]
  %v1835 = vld [vmem:[%s1832 + $0x20] sm:$0xff]
  %v1836 = vld [vmem:[%s1832 + $0x30] sm:$0xff]
  %v1837 = vld [vmem:[%s1832 + $0x40] sm:$0xff]
  %v1838 = vld [vmem:[%s1832 + $0x50] sm:$0xff]
  %v1839 = vld [vmem:[%s1832 + $0x60] sm:$0xff]
  %v1840 = vld [vmem:[%s1832 + $0x70] sm:$0xff]
  %v1841 = vld [vmem:[%s1832 + $0xc0] sm:$0xff]
  %v1842 = vld [vmem:[%s1832 + $0xd0] sm:$0xff]
  %v1843 = vld [vmem:[%s1832 + $0xe0] sm:$0xff]
  %v1844 = vld [vmem:[%s1832 + $0xf0] sm:$0xff]
  %v1845 = vld [vmem:[%s1832 + $0x100] sm:$0xff]
  %v1846 = vld [vmem:[%s1832 + $0x110] sm:$0xff]
  %v1847 = vld [vmem:[%s1832 + $0x120] sm:$0xff]
  %v1848 = vld [vmem:[%s1832 + $0x130] sm:$0xff]
  %1865 = vrot.lane.b32.xlu0 %v1833, 96
  %v1866 = vpop.permute.xlu0 %1865
  %1867 = vrot.lane.b32.xlu0 %v1834, 96
  %v1868 = vpop.permute.xlu0 %1867
  %1869 = vrot.lane.b32.xlu0 %v1835, 96
  %v1870 = vpop.permute.xlu0 %1869
  %1871 = vrot.lane.b32.xlu0 %v1836, 96
  %v1872 = vpop.permute.xlu0 %1871
  %1873 = vrot.lane.b32.xlu0 %v1837, 96
  %v1874 = vpop.permute.xlu0 %1873
  %1875 = vrot.lane.b32.xlu0 %v1838, 96
  %v1876 = vpop.permute.xlu0 %1875
  %1877 = vrot.lane.b32.xlu0 %v1839, 96
  %v1878 = vpop.permute.xlu0 %1877
  %1879 = vrot.lane.b32.xlu0 %v1840, 96
  %v1880 = vpop.permute.xlu0 %1879
  %1881 = vrot.lane.b32.xlu0 %v1841, 96
  %v1882 = vpop.permute.xlu0 %1881
  %1883 = vrot.lane.b32.xlu0 %v1842, 96
  %v1884 = vpop.permute.xlu0 %1883
  %1885 = vrot.lane.b32.xlu0 %v1843, 96
  %v1886 = vpop.permute.xlu0 %1885
  %1887 = vrot.lane.b32.xlu0 %v1844, 96
  %v1888 = vpop.permute.xlu0 %1887
  %1889 = vrot.lane.b32.xlu0 %v1845, 96
  %v1890 = vpop.permute.xlu0 %1889
  %1891 = vrot.lane.b32.xlu0 %v1846, 96
  %v1892 = vpop.permute.xlu0 %1891
  %1893 = vrot.lane.b32.xlu0 %v1847, 96
  %v1894 = vpop.permute.xlu0 %1893
  %1895 = vrot.lane.b32.xlu0 %v1848, 96
  %v1896 = vpop.permute.xlu0 %1895
  %1913 = vst.msk [vmem:[#allocation3 + $0x18] sm:$0xff] %vm949, %v1866
  %1914 = vst.msk [vmem:[#allocation3 + $0x50] sm:$0xff] %vm949, %v1868
  %1915 = vst.msk [vmem:[#allocation3 + $0x88] sm:$0xff] %vm949, %v1870
  %1916 = vst.msk [vmem:[#allocation3 + $0xc0] sm:$0xff] %vm949, %v1872
  %1917 = vst.msk [vmem:[#allocation3 + $0xf8] sm:$0xff] %vm949, %v1874
  %1918 = vst.msk [vmem:[#allocation3 + $0x130] sm:$0xff] %vm949, %v1876
  %1919 = vst.msk [vmem:[#allocation3 + $0x168] sm:$0xff] %vm949, %v1878
  %1920 = vst.msk [vmem:[#allocation3 + $0x1a0] sm:$0xff] %vm949, %v1880
  %1921 = vst.msk [vmem:[#allocation3 + $0x1d8] sm:$0xff] %vm949, %v1882
  %1922 = vst.msk [vmem:[#allocation3 + $0x210] sm:$0xff] %vm949, %v1884
  %1923 = vst.msk [vmem:[#allocation3 + $0x248] sm:$0xff] %vm949, %v1886
  %1924 = vst.msk [vmem:[#allocation3 + $0x280] sm:$0xff] %vm949, %v1888
  %1925 = vst.msk [vmem:[#allocation3 + $0x2b8] sm:$0xff] %vm949, %v1890
  %1926 = vst.msk [vmem:[#allocation3 + $0x2f0] sm:$0xff] %vm949, %v1892
  %1927 = vst.msk [vmem:[#allocation3 + $0x328] sm:$0xff] %vm949, %v1894
  %1928 = vst.msk [vmem:[#allocation3 + $0x360] sm:$0xff] %vm949, %v1896
  %v1929 = vld [vmem:[%s1832 + $0x1] sm:$0xff]
  %v1930 = vld [vmem:[%s1832 + $0x11] sm:$0xff]
  %v1931 = vld [vmem:[%s1832 + $0x21] sm:$0xff]
  %v1932 = vld [vmem:[%s1832 + $0x31] sm:$0xff]
  %v1933 = vld [vmem:[%s1832 + $0x41] sm:$0xff]
  %v1934 = vld [vmem:[%s1832 + $0x51] sm:$0xff]
  %v1935 = vld [vmem:[%s1832 + $0x61] sm:$0xff]
  %v1936 = vld [vmem:[%s1832 + $0x71] sm:$0xff]
  %v1937 = vld [vmem:[%s1832 + $0xc1] sm:$0xff]
  %v1938 = vld [vmem:[%s1832 + $0xd1] sm:$0xff]
  %v1939 = vld [vmem:[%s1832 + $0xe1] sm:$0xff]
  %v1940 = vld [vmem:[%s1832 + $0xf1] sm:$0xff]
  %v1941 = vld [vmem:[%s1832 + $0x101] sm:$0xff]
  %v1942 = vld [vmem:[%s1832 + $0x111] sm:$0xff]
  %v1943 = vld [vmem:[%s1832 + $0x121] sm:$0xff]
  %v1944 = vld [vmem:[%s1832 + $0x131] sm:$0xff]
  %1945 = vst.msk [vmem:[#allocation3 + $0x20] sm:$0xff] %vm593, %v1929
  %1946 = vst.msk [vmem:[#allocation3 + $0x58] sm:$0xff] %vm593, %v1930
  %1947 = vst.msk [vmem:[#allocation3 + $0x90] sm:$0xff] %vm593, %v1931
  %1948 = vst.msk [vmem:[#allocation3 + $0xc8] sm:$0xff] %vm593, %v1932
  %1949 = vst.msk [vmem:[#allocation3 + $0x100] sm:$0xff] %vm593, %v1933
  %1950 = vst.msk [vmem:[#allocation3 + $0x138] sm:$0xff] %vm593, %v1934
  %1951 = vst.msk [vmem:[#allocation3 + $0x170] sm:$0xff] %vm593, %v1935
  %1952 = vst.msk [vmem:[#allocation3 + $0x1a8] sm:$0xff] %vm593, %v1936
  %1953 = vst.msk [vmem:[#allocation3 + $0x1e0] sm:$0xff] %vm593, %v1937
  %1954 = vst.msk [vmem:[#allocation3 + $0x218] sm:$0xff] %vm593, %v1938
  %1955 = vst.msk [vmem:[#allocation3 + $0x250] sm:$0xff] %vm593, %v1939
  %1956 = vst.msk [vmem:[#allocation3 + $0x288] sm:$0xff] %vm593, %v1940
  %1957 = vst.msk [vmem:[#allocation3 + $0x2c0] sm:$0xff] %vm593, %v1941
  %1958 = vst.msk [vmem:[#allocation3 + $0x2f8] sm:$0xff] %vm593, %v1942
  %1959 = vst.msk [vmem:[#allocation3 + $0x330] sm:$0xff] %vm593, %v1943
  %1960 = vst.msk [vmem:[#allocation3 + $0x368] sm:$0xff] %vm593, %v1944
  %v1961 = vld [vmem:[%s1832 + $0x2] sm:$0xff]
  %v1962 = vld [vmem:[%s1832 + $0x12] sm:$0xff]
  %v1963 = vld [vmem:[%s1832 + $0x22] sm:$0xff]
  %v1964 = vld [vmem:[%s1832 + $0x32] sm:$0xff]
  %v1965 = vld [vmem:[%s1832 + $0x42] sm:$0xff]
  %v1966 = vld [vmem:[%s1832 + $0x52] sm:$0xff]
  %v1967 = vld [vmem:[%s1832 + $0x62] sm:$0xff]
  %v1968 = vld [vmem:[%s1832 + $0x72] sm:$0xff]
  %v1969 = vld [vmem:[%s1832 + $0xc2] sm:$0xff]
  %v1970 = vld [vmem:[%s1832 + $0xd2] sm:$0xff]
  %v1971 = vld [vmem:[%s1832 + $0xe2] sm:$0xff]
  %v1972 = vld [vmem:[%s1832 + $0xf2] sm:$0xff]
  %v1973 = vld [vmem:[%s1832 + $0x102] sm:$0xff]
  %v1974 = vld [vmem:[%s1832 + $0x112] sm:$0xff]
  %v1975 = vld [vmem:[%s1832 + $0x122] sm:$0xff]
  %v1976 = vld [vmem:[%s1832 + $0x132] sm:$0xff]
  %1993 = vrot.lane.b32.xlu0 %v1961, 32
  %v1994 = vpop.permute.xlu0 %1993
  %1995 = vrot.lane.b32.xlu0 %v1962, 32
  %v1996 = vpop.permute.xlu0 %1995
  %1997 = vrot.lane.b32.xlu0 %v1963, 32
  %v1998 = vpop.permute.xlu0 %1997
  %1999 = vrot.lane.b32.xlu0 %v1964, 32
  %v2000 = vpop.permute.xlu0 %1999
  %2001 = vrot.lane.b32.xlu0 %v1965, 32
  %v2002 = vpop.permute.xlu0 %2001
  %2003 = vrot.lane.b32.xlu0 %v1966, 32
  %v2004 = vpop.permute.xlu0 %2003
  %2005 = vrot.lane.b32.xlu0 %v1967, 32
  %v2006 = vpop.permute.xlu0 %2005
  %2007 = vrot.lane.b32.xlu0 %v1968, 32
  %v2008 = vpop.permute.xlu0 %2007
  %2009 = vrot.lane.b32.xlu0 %v1969, 32
  %v2010 = vpop.permute.xlu0 %2009
  %2011 = vrot.lane.b32.xlu0 %v1970, 32
  %v2012 = vpop.permute.xlu0 %2011
  %2013 = vrot.lane.b32.xlu0 %v1971, 32
  %v2014 = vpop.permute.xlu0 %2013
  %2015 = vrot.lane.b32.xlu0 %v1972, 32
  %v2016 = vpop.permute.xlu0 %2015
  %2017 = vrot.lane.b32.xlu0 %v1973, 32
  %v2018 = vpop.permute.xlu0 %2017
  %2019 = vrot.lane.b32.xlu0 %v1974, 32
  %v2020 = vpop.permute.xlu0 %2019
  %2021 = vrot.lane.b32.xlu0 %v1975, 32
  %v2022 = vpop.permute.xlu0 %2021
  %2023 = vrot.lane.b32.xlu0 %v1976, 32
  %v2024 = vpop.permute.xlu0 %2023
  %2041 = vst.msk [vmem:[#allocation3 + $0x20] sm:$0xff] %vm755, %v1994
  %2042 = vst.msk [vmem:[#allocation3 + $0x58] sm:$0xff] %vm755, %v1996
  %2043 = vst.msk [vmem:[#allocation3 + $0x90] sm:$0xff] %vm755, %v1998
  %2044 = vst.msk [vmem:[#allocation3 + $0xc8] sm:$0xff] %vm755, %v2000
  %2045 = vst.msk [vmem:[#allocation3 + $0x100] sm:$0xff] %vm755, %v2002
  %2046 = vst.msk [vmem:[#allocation3 + $0x138] sm:$0xff] %vm755, %v2004
  %2047 = vst.msk [vmem:[#allocation3 + $0x170] sm:$0xff] %vm755, %v2006
  %2048 = vst.msk [vmem:[#allocation3 + $0x1a8] sm:$0xff] %vm755, %v2008
  %2049 = vst.msk [vmem:[#allocation3 + $0x1e0] sm:$0xff] %vm755, %v2010
  %2050 = vst.msk [vmem:[#allocation3 + $0x218] sm:$0xff] %vm755, %v2012
  %2051 = vst.msk [vmem:[#allocation3 + $0x250] sm:$0xff] %vm755, %v2014
  %2052 = vst.msk [vmem:[#allocation3 + $0x288] sm:$0xff] %vm755, %v2016
  %2053 = vst.msk [vmem:[#allocation3 + $0x2c0] sm:$0xff] %vm755, %v2018
  %2054 = vst.msk [vmem:[#allocation3 + $0x2f8] sm:$0xff] %vm755, %v2020
  %2055 = vst.msk [vmem:[#allocation3 + $0x330] sm:$0xff] %vm755, %v2022
  %2056 = vst.msk [vmem:[#allocation3 + $0x368] sm:$0xff] %vm755, %v2024
  %v2057 = vld [vmem:[%s1832 + $0x3] sm:$0xff]
  %v2058 = vld [vmem:[%s1832 + $0x13] sm:$0xff]
  %v2059 = vld [vmem:[%s1832 + $0x23] sm:$0xff]
  %v2060 = vld [vmem:[%s1832 + $0x33] sm:$0xff]
  %v2061 = vld [vmem:[%s1832 + $0x43] sm:$0xff]
  %v2062 = vld [vmem:[%s1832 + $0x53] sm:$0xff]
  %v2063 = vld [vmem:[%s1832 + $0x63] sm:$0xff]
  %v2064 = vld [vmem:[%s1832 + $0x73] sm:$0xff]
  %v2065 = vld [vmem:[%s1832 + $0xc3] sm:$0xff]
  %v2066 = vld [vmem:[%s1832 + $0xd3] sm:$0xff]
  %v2067 = vld [vmem:[%s1832 + $0xe3] sm:$0xff]
  %v2068 = vld [vmem:[%s1832 + $0xf3] sm:$0xff]
  %v2069 = vld [vmem:[%s1832 + $0x103] sm:$0xff]
  %v2070 = vld [vmem:[%s1832 + $0x113] sm:$0xff]
  %v2071 = vld [vmem:[%s1832 + $0x123] sm:$0xff]
  %v2072 = vld [vmem:[%s1832 + $0x133] sm:$0xff]
  %2089 = vrot.lane.b32.xlu0 %v2057, 64
  %v2090 = vpop.permute.xlu0 %2089
  %2091 = vrot.lane.b32.xlu0 %v2058, 64
  %v2092 = vpop.permute.xlu0 %2091
  %2093 = vrot.lane.b32.xlu0 %v2059, 64
  %v2094 = vpop.permute.xlu0 %2093
  %2095 = vrot.lane.b32.xlu0 %v2060, 64
  %v2096 = vpop.permute.xlu0 %2095
  %2097 = vrot.lane.b32.xlu0 %v2061, 64
  %v2098 = vpop.permute.xlu0 %2097
  %2099 = vrot.lane.b32.xlu0 %v2062, 64
  %v2100 = vpop.permute.xlu0 %2099
  %2101 = vrot.lane.b32.xlu0 %v2063, 64
  %v2102 = vpop.permute.xlu0 %2101
  %2103 = vrot.lane.b32.xlu0 %v2064, 64
  %v2104 = vpop.permute.xlu0 %2103
  %2105 = vrot.lane.b32.xlu0 %v2065, 64
  %v2106 = vpop.permute.xlu0 %2105
  %2107 = vrot.lane.b32.xlu0 %v2066, 64
  %v2108 = vpop.permute.xlu0 %2107
  %2109 = vrot.lane.b32.xlu0 %v2067, 64
  %v2110 = vpop.permute.xlu0 %2109
  %2111 = vrot.lane.b32.xlu0 %v2068, 64
  %v2112 = vpop.permute.xlu0 %2111
  %2113 = vrot.lane.b32.xlu0 %v2069, 64
  %v2114 = vpop.permute.xlu0 %2113
  %2115 = vrot.lane.b32.xlu0 %v2070, 64
  %v2116 = vpop.permute.xlu0 %2115
  %2117 = vrot.lane.b32.xlu0 %v2071, 64
  %v2118 = vpop.permute.xlu0 %2117
  %2119 = vrot.lane.b32.xlu0 %v2072, 64
  %v2120 = vpop.permute.xlu0 %2119
  %2137 = vst.msk [vmem:[#allocation3 + $0x20] sm:$0xff] %vm852, %v2090
  %2138 = vst.msk [vmem:[#allocation3 + $0x58] sm:$0xff] %vm852, %v2092
  %2139 = vst.msk [vmem:[#allocation3 + $0x90] sm:$0xff] %vm852, %v2094
  %2140 = vst.msk [vmem:[#allocation3 + $0xc8] sm:$0xff] %vm852, %v2096
  %2141 = vst.msk [vmem:[#allocation3 + $0x100] sm:$0xff] %vm852, %v2098
  %2142 = vst.msk [vmem:[#allocation3 + $0x138] sm:$0xff] %vm852, %v2100
  %2143 = vst.msk [vmem:[#allocation3 + $0x170] sm:$0xff] %vm852, %v2102
  %2144 = vst.msk [vmem:[#allocation3 + $0x1a8] sm:$0xff] %vm852, %v2104
  %2145 = vst.msk [vmem:[#allocation3 + $0x1e0] sm:$0xff] %vm852, %v2106
  %2146 = vst.msk [vmem:[#allocation3 + $0x218] sm:$0xff] %vm852, %v2108
  %2147 = vst.msk [vmem:[#allocation3 + $0x250] sm:$0xff] %vm852, %v2110
  %2148 = vst.msk [vmem:[#allocation3 + $0x288] sm:$0xff] %vm852, %v2112
  %2149 = vst.msk [vmem:[#allocation3 + $0x2c0] sm:$0xff] %vm852, %v2114
  %2150 = vst.msk [vmem:[#allocation3 + $0x2f8] sm:$0xff] %vm852, %v2116
  %2151 = vst.msk [vmem:[#allocation3 + $0x330] sm:$0xff] %vm852, %v2118
  %2152 = vst.msk [vmem:[#allocation3 + $0x368] sm:$0xff] %vm852, %v2120
  %v2153 = vld [vmem:[%s1832 + $0x4] sm:$0xff]
  %v2154 = vld [vmem:[%s1832 + $0x14] sm:$0xff]
  %v2155 = vld [vmem:[%s1832 + $0x24] sm:$0xff]
  %v2156 = vld [vmem:[%s1832 + $0x34] sm:$0xff]
  %v2157 = vld [vmem:[%s1832 + $0x44] sm:$0xff]
  %v2158 = vld [vmem:[%s1832 + $0x54] sm:$0xff]
  %v2159 = vld [vmem:[%s1832 + $0x64] sm:$0xff]
  %v2160 = vld [vmem:[%s1832 + $0x74] sm:$0xff]
  %v2161 = vld [vmem:[%s1832 + $0xc4] sm:$0xff]
  %v2162 = vld [vmem:[%s1832 + $0xd4] sm:$0xff]
  %v2163 = vld [vmem:[%s1832 + $0xe4] sm:$0xff]
  %v2164 = vld [vmem:[%s1832 + $0xf4] sm:$0xff]
  %v2165 = vld [vmem:[%s1832 + $0x104] sm:$0xff]
  %v2166 = vld [vmem:[%s1832 + $0x114] sm:$0xff]
  %v2167 = vld [vmem:[%s1832 + $0x124] sm:$0xff]
  %v2168 = vld [vmem:[%s1832 + $0x134] sm:$0xff]
  %2185 = vrot.lane.b32.xlu0 %v2153, 96
  %v2186 = vpop.permute.xlu0 %2185
  %2187 = vrot.lane.b32.xlu0 %v2154, 96
  %v2188 = vpop.permute.xlu0 %2187
  %2189 = vrot.lane.b32.xlu0 %v2155, 96
  %v2190 = vpop.permute.xlu0 %2189
  %2191 = vrot.lane.b32.xlu0 %v2156, 96
  %v2192 = vpop.permute.xlu0 %2191
  %2193 = vrot.lane.b32.xlu0 %v2157, 96
  %v2194 = vpop.permute.xlu0 %2193
  %2195 = vrot.lane.b32.xlu0 %v2158, 96
  %v2196 = vpop.permute.xlu0 %2195
  %2197 = vrot.lane.b32.xlu0 %v2159, 96
  %v2198 = vpop.permute.xlu0 %2197
  %2199 = vrot.lane.b32.xlu0 %v2160, 96
  %v2200 = vpop.permute.xlu0 %2199
  %2201 = vrot.lane.b32.xlu0 %v2161, 96
  %v2202 = vpop.permute.xlu0 %2201
  %2203 = vrot.lane.b32.xlu0 %v2162, 96
  %v2204 = vpop.permute.xlu0 %2203
  %2205 = vrot.lane.b32.xlu0 %v2163, 96
  %v2206 = vpop.permute.xlu0 %2205
  %2207 = vrot.lane.b32.xlu0 %v2164, 96
  %v2208 = vpop.permute.xlu0 %2207
  %2209 = vrot.lane.b32.xlu0 %v2165, 96
  %v2210 = vpop.permute.xlu0 %2209
  %2211 = vrot.lane.b32.xlu0 %v2166, 96
  %v2212 = vpop.permute.xlu0 %2211
  %2213 = vrot.lane.b32.xlu0 %v2167, 96
  %v2214 = vpop.permute.xlu0 %2213
  %2215 = vrot.lane.b32.xlu0 %v2168, 96
  %v2216 = vpop.permute.xlu0 %2215
  %2233 = vst.msk [vmem:[#allocation3 + $0x20] sm:$0xff] %vm949, %v2186
  %2234 = vst.msk [vmem:[#allocation3 + $0x58] sm:$0xff] %vm949, %v2188
  %2235 = vst.msk [vmem:[#allocation3 + $0x90] sm:$0xff] %vm949, %v2190
  %2236 = vst.msk [vmem:[#allocation3 + $0xc8] sm:$0xff] %vm949, %v2192
  %2237 = vst.msk [vmem:[#allocation3 + $0x100] sm:$0xff] %vm949, %v2194
  %2238 = vst.msk [vmem:[#allocation3 + $0x138] sm:$0xff] %vm949, %v2196
  %2239 = vst.msk [vmem:[#allocation3 + $0x170] sm:$0xff] %vm949, %v2198
  %2240 = vst.msk [vmem:[#allocation3 + $0x1a8] sm:$0xff] %vm949, %v2200
  %2241 = vst.msk [vmem:[#allocation3 + $0x1e0] sm:$0xff] %vm949, %v2202
  %2242 = vst.msk [vmem:[#allocation3 + $0x218] sm:$0xff] %vm949, %v2204
  %2243 = vst.msk [vmem:[#allocation3 + $0x250] sm:$0xff] %vm949, %v2206
  %2244 = vst.msk [vmem:[#allocation3 + $0x288] sm:$0xff] %vm949, %v2208
  %2245 = vst.msk [vmem:[#allocation3 + $0x2c0] sm:$0xff] %vm949, %v2210
  %2246 = vst.msk [vmem:[#allocation3 + $0x2f8] sm:$0xff] %vm949, %v2212
  %2247 = vst.msk [vmem:[#allocation3 + $0x330] sm:$0xff] %vm949, %v2214
  %2248 = vst.msk [vmem:[#allocation3 + $0x368] sm:$0xff] %vm949, %v2216
  %s2249 = scalar_lea.vmem [#allocation2], 64
  %v2250 = vld [vmem:[%s2249] sm:$0xff]
  %v2251 = vld [vmem:[%s2249 + $0x10] sm:$0xff]
  %v2252 = vld [vmem:[%s2249 + $0x20] sm:$0xff]
  %v2253 = vld [vmem:[%s2249 + $0x30] sm:$0xff]
  %v2254 = vld [vmem:[%s2249 + $0x40] sm:$0xff]
  %v2255 = vld [vmem:[%s2249 + $0x50] sm:$0xff]
  %v2256 = vld [vmem:[%s2249 + $0x60] sm:$0xff]
  %v2257 = vld [vmem:[%s2249 + $0x70] sm:$0xff]
  %v2258 = vld [vmem:[%s2249 + $0xc0] sm:$0xff]
  %v2259 = vld [vmem:[%s2249 + $0xd0] sm:$0xff]
  %v2260 = vld [vmem:[%s2249 + $0xe0] sm:$0xff]
  %v2261 = vld [vmem:[%s2249 + $0xf0] sm:$0xff]
  %v2262 = vld [vmem:[%s2249 + $0x100] sm:$0xff]
  %v2263 = vld [vmem:[%s2249 + $0x110] sm:$0xff]
  %v2264 = vld [vmem:[%s2249 + $0x120] sm:$0xff]
  %v2265 = vld [vmem:[%s2249 + $0x130] sm:$0xff]
  %2266 = vst.msk [vmem:[#allocation3 + $0x28] sm:$0xff] %vm593, %v2250
  %2267 = vst.msk [vmem:[#allocation3 + $0x60] sm:$0xff] %vm593, %v2251
  %2268 = vst.msk [vmem:[#allocation3 + $0x98] sm:$0xff] %vm593, %v2252
  %2269 = vst.msk [vmem:[#allocation3 + $0xd0] sm:$0xff] %vm593, %v2253
  %2270 = vst.msk [vmem:[#allocation3 + $0x108] sm:$0xff] %vm593, %v2254
  %2271 = vst.msk [vmem:[#allocation3 + $0x140] sm:$0xff] %vm593, %v2255
  %2272 = vst.msk [vmem:[#allocation3 + $0x178] sm:$0xff] %vm593, %v2256
  %2273 = vst.msk [vmem:[#allocation3 + $0x1b0] sm:$0xff] %vm593, %v2257
  %2274 = vst.msk [vmem:[#allocation3 + $0x1e8] sm:$0xff] %vm593, %v2258
  %2275 = vst.msk [vmem:[#allocation3 + $0x220] sm:$0xff] %vm593, %v2259
  %2276 = vst.msk [vmem:[#allocation3 + $0x258] sm:$0xff] %vm593, %v2260
  %2277 = vst.msk [vmem:[#allocation3 + $0x290] sm:$0xff] %vm593, %v2261
  %2278 = vst.msk [vmem:[#allocation3 + $0x2c8] sm:$0xff] %vm593, %v2262
  %2279 = vst.msk [vmem:[#allocation3 + $0x300] sm:$0xff] %vm593, %v2263
  %2280 = vst.msk [vmem:[#allocation3 + $0x338] sm:$0xff] %vm593, %v2264
  %2281 = vst.msk [vmem:[#allocation3 + $0x370] sm:$0xff] %vm593, %v2265
  %v2282 = vld [vmem:[%s2249 + $0x1] sm:$0xff]
  %v2283 = vld [vmem:[%s2249 + $0x11] sm:$0xff]
  %v2284 = vld [vmem:[%s2249 + $0x21] sm:$0xff]
  %v2285 = vld [vmem:[%s2249 + $0x31] sm:$0xff]
  %v2286 = vld [vmem:[%s2249 + $0x41] sm:$0xff]
  %v2287 = vld [vmem:[%s2249 + $0x51] sm:$0xff]
  %v2288 = vld [vmem:[%s2249 + $0x61] sm:$0xff]
  %v2289 = vld [vmem:[%s2249 + $0x71] sm:$0xff]
  %v2290 = vld [vmem:[%s2249 + $0xc1] sm:$0xff]
  %v2291 = vld [vmem:[%s2249 + $0xd1] sm:$0xff]
  %v2292 = vld [vmem:[%s2249 + $0xe1] sm:$0xff]
  %v2293 = vld [vmem:[%s2249 + $0xf1] sm:$0xff]
  %v2294 = vld [vmem:[%s2249 + $0x101] sm:$0xff]
  %v2295 = vld [vmem:[%s2249 + $0x111] sm:$0xff]
  %v2296 = vld [vmem:[%s2249 + $0x121] sm:$0xff]
  %v2297 = vld [vmem:[%s2249 + $0x131] sm:$0xff]
  %2314 = vrot.lane.b32.xlu0 %v2282, 32
  %v2315 = vpop.permute.xlu0 %2314
  %2316 = vrot.lane.b32.xlu0 %v2283, 32
  %v2317 = vpop.permute.xlu0 %2316
  %2318 = vrot.lane.b32.xlu0 %v2284, 32
  %v2319 = vpop.permute.xlu0 %2318
  %2320 = vrot.lane.b32.xlu0 %v2285, 32
  %v2321 = vpop.permute.xlu0 %2320
  %2322 = vrot.lane.b32.xlu0 %v2286, 32
  %v2323 = vpop.permute.xlu0 %2322
  %2324 = vrot.lane.b32.xlu0 %v2287, 32
  %v2325 = vpop.permute.xlu0 %2324
  %2326 = vrot.lane.b32.xlu0 %v2288, 32
  %v2327 = vpop.permute.xlu0 %2326
  %2328 = vrot.lane.b32.xlu0 %v2289, 32
  %v2329 = vpop.permute.xlu0 %2328
  %2330 = vrot.lane.b32.xlu0 %v2290, 32
  %v2331 = vpop.permute.xlu0 %2330
  %2332 = vrot.lane.b32.xlu0 %v2291, 32
  %v2333 = vpop.permute.xlu0 %2332
  %2334 = vrot.lane.b32.xlu0 %v2292, 32
  %v2335 = vpop.permute.xlu0 %2334
  %2336 = vrot.lane.b32.xlu0 %v2293, 32
  %v2337 = vpop.permute.xlu0 %2336
  %2338 = vrot.lane.b32.xlu0 %v2294, 32
  %v2339 = vpop.permute.xlu0 %2338
  %2340 = vrot.lane.b32.xlu0 %v2295, 32
  %v2341 = vpop.permute.xlu0 %2340
  %2342 = vrot.lane.b32.xlu0 %v2296, 32
  %v2343 = vpop.permute.xlu0 %2342
  %2344 = vrot.lane.b32.xlu0 %v2297, 32
  %v2345 = vpop.permute.xlu0 %2344
  %2362 = vst.msk [vmem:[#allocation3 + $0x28] sm:$0xff] %vm755, %v2315
  %2363 = vst.msk [vmem:[#allocation3 + $0x60] sm:$0xff] %vm755, %v2317
  %2364 = vst.msk [vmem:[#allocation3 + $0x98] sm:$0xff] %vm755, %v2319
  %2365 = vst.msk [vmem:[#allocation3 + $0xd0] sm:$0xff] %vm755, %v2321
  %2366 = vst.msk [vmem:[#allocation3 + $0x108] sm:$0xff] %vm755, %v2323
  %2367 = vst.msk [vmem:[#allocation3 + $0x140] sm:$0xff] %vm755, %v2325
  %2368 = vst.msk [vmem:[#allocation3 + $0x178] sm:$0xff] %vm755, %v2327
  %2369 = vst.msk [vmem:[#allocation3 + $0x1b0] sm:$0xff] %vm755, %v2329
  %2370 = vst.msk [vmem:[#allocation3 + $0x1e8] sm:$0xff] %vm755, %v2331
  %2371 = vst.msk [vmem:[#allocation3 + $0x220] sm:$0xff] %vm755, %v2333
  %2372 = vst.msk [vmem:[#allocation3 + $0x258] sm:$0xff] %vm755, %v2335
  %2373 = vst.msk [vmem:[#allocation3 + $0x290] sm:$0xff] %vm755, %v2337
  %2374 = vst.msk [vmem:[#allocation3 + $0x2c8] sm:$0xff] %vm755, %v2339
  %2375 = vst.msk [vmem:[#allocation3 + $0x300] sm:$0xff] %vm755, %v2341
  %2376 = vst.msk [vmem:[#allocation3 + $0x338] sm:$0xff] %vm755, %v2343
  %2377 = vst.msk [vmem:[#allocation3 + $0x370] sm:$0xff] %vm755, %v2345
  %v2378 = vld [vmem:[%s2249 + $0x2] sm:$0xff]
  %v2379 = vld [vmem:[%s2249 + $0x12] sm:$0xff]
  %v2380 = vld [vmem:[%s2249 + $0x22] sm:$0xff]
  %v2381 = vld [vmem:[%s2249 + $0x32] sm:$0xff]
  %v2382 = vld [vmem:[%s2249 + $0x42] sm:$0xff]
  %v2383 = vld [vmem:[%s2249 + $0x52] sm:$0xff]
  %v2384 = vld [vmem:[%s2249 + $0x62] sm:$0xff]
  %v2385 = vld [vmem:[%s2249 + $0x72] sm:$0xff]
  %v2386 = vld [vmem:[%s2249 + $0xc2] sm:$0xff]
  %v2387 = vld [vmem:[%s2249 + $0xd2] sm:$0xff]
  %v2388 = vld [vmem:[%s2249 + $0xe2] sm:$0xff]
  %v2389 = vld [vmem:[%s2249 + $0xf2] sm:$0xff]
  %v2390 = vld [vmem:[%s2249 + $0x102] sm:$0xff]
  %v2391 = vld [vmem:[%s2249 + $0x112] sm:$0xff]
  %v2392 = vld [vmem:[%s2249 + $0x122] sm:$0xff]
  %v2393 = vld [vmem:[%s2249 + $0x132] sm:$0xff]
  %2410 = vrot.lane.b32.xlu0 %v2378, 64
  %v2411 = vpop.permute.xlu0 %2410
  %2412 = vrot.lane.b32.xlu0 %v2379, 64
  %v2413 = vpop.permute.xlu0 %2412
  %2414 = vrot.lane.b32.xlu0 %v2380, 64
  %v2415 = vpop.permute.xlu0 %2414
  %2416 = vrot.lane.b32.xlu0 %v2381, 64
  %v2417 = vpop.permute.xlu0 %2416
  %2418 = vrot.lane.b32.xlu0 %v2382, 64
  %v2419 = vpop.permute.xlu0 %2418
  %2420 = vrot.lane.b32.xlu0 %v2383, 64
  %v2421 = vpop.permute.xlu0 %2420
  %2422 = vrot.lane.b32.xlu0 %v2384, 64
  %v2423 = vpop.permute.xlu0 %2422
  %2424 = vrot.lane.b32.xlu0 %v2385, 64
  %v2425 = vpop.permute.xlu0 %2424
  %2426 = vrot.lane.b32.xlu0 %v2386, 64
  %v2427 = vpop.permute.xlu0 %2426
  %2428 = vrot.lane.b32.xlu0 %v2387, 64
  %v2429 = vpop.permute.xlu0 %2428
  %2430 = vrot.lane.b32.xlu0 %v2388, 64
  %v2431 = vpop.permute.xlu0 %2430
  %2432 = vrot.lane.b32.xlu0 %v2389, 64
  %v2433 = vpop.permute.xlu0 %2432
  %2434 = vrot.lane.b32.xlu0 %v2390, 64
  %v2435 = vpop.permute.xlu0 %2434
  %2436 = vrot.lane.b32.xlu0 %v2391, 64
  %v2437 = vpop.permute.xlu0 %2436
  %2438 = vrot.lane.b32.xlu0 %v2392, 64
  %v2439 = vpop.permute.xlu0 %2438
  %2440 = vrot.lane.b32.xlu0 %v2393, 64
  %v2441 = vpop.permute.xlu0 %2440
  %2458 = vst.msk [vmem:[#allocation3 + $0x28] sm:$0xff] %vm852, %v2411
  %2459 = vst.msk [vmem:[#allocation3 + $0x60] sm:$0xff] %vm852, %v2413
  %2460 = vst.msk [vmem:[#allocation3 + $0x98] sm:$0xff] %vm852, %v2415
  %2461 = vst.msk [vmem:[#allocation3 + $0xd0] sm:$0xff] %vm852, %v2417
  %2462 = vst.msk [vmem:[#allocation3 + $0x108] sm:$0xff] %vm852, %v2419
  %2463 = vst.msk [vmem:[#allocation3 + $0x140] sm:$0xff] %vm852, %v2421
  %2464 = vst.msk [vmem:[#allocation3 + $0x178] sm:$0xff] %vm852, %v2423
  %2465 = vst.msk [vmem:[#allocation3 + $0x1b0] sm:$0xff] %vm852, %v2425
  %2466 = vst.msk [vmem:[#allocation3 + $0x1e8] sm:$0xff] %vm852, %v2427
  %2467 = vst.msk [vmem:[#allocation3 + $0x220] sm:$0xff] %vm852, %v2429
  %2468 = vst.msk [vmem:[#allocation3 + $0x258] sm:$0xff] %vm852, %v2431
  %2469 = vst.msk [vmem:[#allocation3 + $0x290] sm:$0xff] %vm852, %v2433
  %2470 = vst.msk [vmem:[#allocation3 + $0x2c8] sm:$0xff] %vm852, %v2435
  %2471 = vst.msk [vmem:[#allocation3 + $0x300] sm:$0xff] %vm852, %v2437
  %2472 = vst.msk [vmem:[#allocation3 + $0x338] sm:$0xff] %vm852, %v2439
  %2473 = vst.msk [vmem:[#allocation3 + $0x370] sm:$0xff] %vm852, %v2441
  %v2474 = vld [vmem:[%s2249 + $0x3] sm:$0xff]
  %v2475 = vld [vmem:[%s2249 + $0x13] sm:$0xff]
  %v2476 = vld [vmem:[%s2249 + $0x23] sm:$0xff]
  %v2477 = vld [vmem:[%s2249 + $0x33] sm:$0xff]
  %v2478 = vld [vmem:[%s2249 + $0x43] sm:$0xff]
  %v2479 = vld [vmem:[%s2249 + $0x53] sm:$0xff]
  %v2480 = vld [vmem:[%s2249 + $0x63] sm:$0xff]
  %v2481 = vld [vmem:[%s2249 + $0x73] sm:$0xff]
  %v2482 = vld [vmem:[%s2249 + $0xc3] sm:$0xff]
  %v2483 = vld [vmem:[%s2249 + $0xd3] sm:$0xff]
  %v2484 = vld [vmem:[%s2249 + $0xe3] sm:$0xff]
  %v2485 = vld [vmem:[%s2249 + $0xf3] sm:$0xff]
  %v2486 = vld [vmem:[%s2249 + $0x103] sm:$0xff]
  %v2487 = vld [vmem:[%s2249 + $0x113] sm:$0xff]
  %v2488 = vld [vmem:[%s2249 + $0x123] sm:$0xff]
  %v2489 = vld [vmem:[%s2249 + $0x133] sm:$0xff]
  %2506 = vrot.lane.b32.xlu0 %v2474, 96
  %v2507 = vpop.permute.xlu0 %2506
  %2508 = vrot.lane.b32.xlu0 %v2475, 96
  %v2509 = vpop.permute.xlu0 %2508
  %2510 = vrot.lane.b32.xlu0 %v2476, 96
  %v2511 = vpop.permute.xlu0 %2510
  %2512 = vrot.lane.b32.xlu0 %v2477, 96
  %v2513 = vpop.permute.xlu0 %2512
  %2514 = vrot.lane.b32.xlu0 %v2478, 96
  %v2515 = vpop.permute.xlu0 %2514
  %2516 = vrot.lane.b32.xlu0 %v2479, 96
  %v2517 = vpop.permute.xlu0 %2516
  %2518 = vrot.lane.b32.xlu0 %v2480, 96
  %v2519 = vpop.permute.xlu0 %2518
  %2520 = vrot.lane.b32.xlu0 %v2481, 96
  %v2521 = vpop.permute.xlu0 %2520
  %2522 = vrot.lane.b32.xlu0 %v2482, 96
  %v2523 = vpop.permute.xlu0 %2522
  %2524 = vrot.lane.b32.xlu0 %v2483, 96
  %v2525 = vpop.permute.xlu0 %2524
  %2526 = vrot.lane.b32.xlu0 %v2484, 96
  %v2527 = vpop.permute.xlu0 %2526
  %2528 = vrot.lane.b32.xlu0 %v2485, 96
  %v2529 = vpop.permute.xlu0 %2528
  %2530 = vrot.lane.b32.xlu0 %v2486, 96
  %v2531 = vpop.permute.xlu0 %2530
  %2532 = vrot.lane.b32.xlu0 %v2487, 96
  %v2533 = vpop.permute.xlu0 %2532
  %2534 = vrot.lane.b32.xlu0 %v2488, 96
  %v2535 = vpop.permute.xlu0 %2534
  %2536 = vrot.lane.b32.xlu0 %v2489, 96
  %v2537 = vpop.permute.xlu0 %2536
  %2554 = vst.msk [vmem:[#allocation3 + $0x28] sm:$0xff] %vm949, %v2507
  %2555 = vst.msk [vmem:[#allocation3 + $0x60] sm:$0xff] %vm949, %v2509
  %2556 = vst.msk [vmem:[#allocation3 + $0x98] sm:$0xff] %vm949, %v2511
  %2557 = vst.msk [vmem:[#allocation3 + $0xd0] sm:$0xff] %vm949, %v2513
  %2558 = vst.msk [vmem:[#allocation3 + $0x108] sm:$0xff] %vm949, %v2515
  %2559 = vst.msk [vmem:[#allocation3 + $0x140] sm:$0xff] %vm949, %v2517
  %2560 = vst.msk [vmem:[#allocation3 + $0x178] sm:$0xff] %vm949, %v2519
  %2561 = vst.msk [vmem:[#allocation3 + $0x1b0] sm:$0xff] %vm949, %v2521
  %2562 = vst.msk [vmem:[#allocation3 + $0x1e8] sm:$0xff] %vm949, %v2523
  %2563 = vst.msk [vmem:[#allocation3 + $0x220] sm:$0xff] %vm949, %v2525
  %2564 = vst.msk [vmem:[#allocation3 + $0x258] sm:$0xff] %vm949, %v2527
  %2565 = vst.msk [vmem:[#allocation3 + $0x290] sm:$0xff] %vm949, %v2529
  %2566 = vst.msk [vmem:[#allocation3 + $0x2c8] sm:$0xff] %vm949, %v2531
  %2567 = vst.msk [vmem:[#allocation3 + $0x300] sm:$0xff] %vm949, %v2533
  %2568 = vst.msk [vmem:[#allocation3 + $0x338] sm:$0xff] %vm949, %v2535
  %2569 = vst.msk [vmem:[#allocation3 + $0x370] sm:$0xff] %vm949, %v2537
  %v2570 = vld [vmem:[%s2249 + $0x4] sm:$0xff]
  %v2571 = vld [vmem:[%s2249 + $0x14] sm:$0xff]
  %v2572 = vld [vmem:[%s2249 + $0x24] sm:$0xff]
  %v2573 = vld [vmem:[%s2249 + $0x34] sm:$0xff]
  %v2574 = vld [vmem:[%s2249 + $0x44] sm:$0xff]
  %v2575 = vld [vmem:[%s2249 + $0x54] sm:$0xff]
  %v2576 = vld [vmem:[%s2249 + $0x64] sm:$0xff]
  %v2577 = vld [vmem:[%s2249 + $0x74] sm:$0xff]
  %v2578 = vld [vmem:[%s2249 + $0xc4] sm:$0xff]
  %v2579 = vld [vmem:[%s2249 + $0xd4] sm:$0xff]
  %v2580 = vld [vmem:[%s2249 + $0xe4] sm:$0xff]
  %v2581 = vld [vmem:[%s2249 + $0xf4] sm:$0xff]
  %v2582 = vld [vmem:[%s2249 + $0x104] sm:$0xff]
  %v2583 = vld [vmem:[%s2249 + $0x114] sm:$0xff]
  %v2584 = vld [vmem:[%s2249 + $0x124] sm:$0xff]
  %v2585 = vld [vmem:[%s2249 + $0x134] sm:$0xff]
  %2586 = vst.msk [vmem:[#allocation3 + $0x30] sm:$0xff] %vm593, %v2570
  %2587 = vst.msk [vmem:[#allocation3 + $0x68] sm:$0xff] %vm593, %v2571
  %2588 = vst.msk [vmem:[#allocation3 + $0xa0] sm:$0xff] %vm593, %v2572
  %2589 = vst.msk [vmem:[#allocation3 + $0xd8] sm:$0xff] %vm593, %v2573
  %2590 = vst.msk [vmem:[#allocation3 + $0x110] sm:$0xff] %vm593, %v2574
  %2591 = vst.msk [vmem:[#allocation3 + $0x148] sm:$0xff] %vm593, %v2575
  %2592 = vst.msk [vmem:[#allocation3 + $0x180] sm:$0xff] %vm593, %v2576
  %2593 = vst.msk [vmem:[#allocation3 + $0x1b8] sm:$0xff] %vm593, %v2577
  %2594 = vst.msk [vmem:[#allocation3 + $0x1f0] sm:$0xff] %vm593, %v2578
  %2595 = vst.msk [vmem:[#allocation3 + $0x228] sm:$0xff] %vm593, %v2579
  %2596 = vst.msk [vmem:[#allocation3 + $0x260] sm:$0xff] %vm593, %v2580
  %2597 = vst.msk [vmem:[#allocation3 + $0x298] sm:$0xff] %vm593, %v2581
  %2598 = vst.msk [vmem:[#allocation3 + $0x2d0] sm:$0xff] %vm593, %v2582
  %2599 = vst.msk [vmem:[#allocation3 + $0x308] sm:$0xff] %vm593, %v2583
  %2600 = vst.msk [vmem:[#allocation3 + $0x340] sm:$0xff] %vm593, %v2584
  %2601 = vst.msk [vmem:[#allocation3 + $0x378] sm:$0xff] %vm593, %v2585
  %v2602 = vld [vmem:[#allocation3] sm:$0xff]
  %v2603 = vld [vmem:[#allocation3 + $0x8] sm:$0xff]
  %v2604 = vld [vmem:[#allocation3 + $0x10] sm:$0xff]
  %v2605 = vld [vmem:[#allocation3 + $0x18] sm:$0xff]
  %v2606 = vld [vmem:[#allocation3 + $0x20] sm:$0xff]
  %v2607 = vld [vmem:[#allocation3 + $0x28] sm:$0xff]
  %v2608 = vld [vmem:[#allocation3 + $0x30] sm:$0xff]
  %v2609 = vld [vmem:[#allocation3 + $0x38] sm:$0xff]
  %v2610 = vld [vmem:[#allocation3 + $0x40] sm:$0xff]
  %v2611 = vld [vmem:[#allocation3 + $0x48] sm:$0xff]
  %v2612 = vld [vmem:[#allocation3 + $0x50] sm:$0xff]
  %v2613 = vld [vmem:[#allocation3 + $0x58] sm:$0xff]
  %v2614 = vld [vmem:[#allocation3 + $0x60] sm:$0xff]
  %v2615 = vld [vmem:[#allocation3 + $0x68] sm:$0xff]
  %v2616 = vld [vmem:[#allocation3 + $0x70] sm:$0xff]
  %v2617 = vld [vmem:[#allocation3 + $0x78] sm:$0xff]
  %v2618 = vld [vmem:[#allocation3 + $0x80] sm:$0xff]
  %v2619 = vld [vmem:[#allocation3 + $0x88] sm:$0xff]
  %v2620 = vld [vmem:[#allocation3 + $0x90] sm:$0xff]
  %v2621 = vld [vmem:[#allocation3 + $0x98] sm:$0xff]
  %v2622 = vld [vmem:[#allocation3 + $0xa0] sm:$0xff]
  %v2623 = vld [vmem:[#allocation3 + $0xa8] sm:$0xff]
  %v2624 = vld [vmem:[#allocation3 + $0xb0] sm:$0xff]
  %v2625 = vld [vmem:[#allocation3 + $0xb8] sm:$0xff]
  %v2626 = vld [vmem:[#allocation3 + $0xc0] sm:$0xff]
  %v2627 = vld [vmem:[#allocation3 + $0xc8] sm:$0xff]
  %v2628 = vld [vmem:[#allocation3 + $0xd0] sm:$0xff]
  %v2629 = vld [vmem:[#allocation3 + $0xd8] sm:$0xff]
  %v2630 = vld [vmem:[#allocation3 + $0xe0] sm:$0xff]
  %v2631 = vld [vmem:[#allocation3 + $0xe8] sm:$0xff]
  %v2632 = vld [vmem:[#allocation3 + $0xf0] sm:$0xff]
  %v2633 = vld [vmem:[#allocation3 + $0xf8] sm:$0xff]
  %v2634 = vld [vmem:[#allocation3 + $0x100] sm:$0xff]
  %v2635 = vld [vmem:[#allocation3 + $0x108] sm:$0xff]
  %v2636 = vld [vmem:[#allocation3 + $0x110] sm:$0xff]
  %v2637 = vld [vmem:[#allocation3 + $0x118] sm:$0xff]
  %v2638 = vld [vmem:[#allocation3 + $0x120] sm:$0xff]
  %v2639 = vld [vmem:[#allocation3 + $0x128] sm:$0xff]
  %v2640 = vld [vmem:[#allocation3 + $0x130] sm:$0xff]
  %v2641 = vld [vmem:[#allocation3 + $0x138] sm:$0xff]
  %v2642 = vld [vmem:[#allocation3 + $0x140] sm:$0xff]
  %v2643 = vld [vmem:[#allocation3 + $0x148] sm:$0xff]
  %v2644 = vld [vmem:[#allocation3 + $0x150] sm:$0xff]
  %v2645 = vld [vmem:[#allocation3 + $0x158] sm:$0xff]
  %v2646 = vld [vmem:[#allocation3 + $0x160] sm:$0xff]
  %v2647 = vld [vmem:[#allocation3 + $0x168] sm:$0xff]
  %v2648 = vld [vmem:[#allocation3 + $0x170] sm:$0xff]
  %v2649 = vld [vmem:[#allocation3 + $0x178] sm:$0xff]
  %v2650 = vld [vmem:[#allocation3 + $0x180] sm:$0xff]
  %v2651 = vld [vmem:[#allocation3 + $0x188] sm:$0xff]
  %v2652 = vld [vmem:[#allocation3 + $0x190] sm:$0xff]
  %v2653 = vld [vmem:[#allocation3 + $0x198] sm:$0xff]
  %v2654 = vld [vmem:[#allocation3 + $0x1a0] sm:$0xff]
  %v2655 = vld [vmem:[#allocation3 + $0x1a8] sm:$0xff]
  %v2656 = vld [vmem:[#allocation3 + $0x1b0] sm:$0xff]
  %v2657 = vld [vmem:[#allocation3 + $0x1b8] sm:$0xff]
  %v2658 = vld [vmem:[#allocation3 + $0x1c0] sm:$0xff]
  %v2659 = vld [vmem:[#allocation3 + $0x1c8] sm:$0xff]
  %v2660 = vld [vmem:[#allocation3 + $0x1d0] sm:$0xff]
  %v2661 = vld [vmem:[#allocation3 + $0x1d8] sm:$0xff]
  %v2662 = vld [vmem:[#allocation3 + $0x1e0] sm:$0xff]
  %v2663 = vld [vmem:[#allocation3 + $0x1e8] sm:$0xff]
  %v2664 = vld [vmem:[#allocation3 + $0x1f0] sm:$0xff]
  %v2665 = vld [vmem:[#allocation3 + $0x1f8] sm:$0xff]
  %v2666 = vld [vmem:[#allocation3 + $0x200] sm:$0xff]
  %v2667 = vld [vmem:[#allocation3 + $0x208] sm:$0xff]
  %v2668 = vld [vmem:[#allocation3 + $0x210] sm:$0xff]
  %v2669 = vld [vmem:[#allocation3 + $0x218] sm:$0xff]
  %v2670 = vld [vmem:[#allocation3 + $0x220] sm:$0xff]
  %v2671 = vld [vmem:[#allocation3 + $0x228] sm:$0xff]
  %v2672 = vld [vmem:[#allocation3 + $0x230] sm:$0xff]
  %v2673 = vld [vmem:[#allocation3 + $0x238] sm:$0xff]
  %v2674 = vld [vmem:[#allocation3 + $0x240] sm:$0xff]
  %v2675 = vld [vmem:[#allocation3 + $0x248] sm:$0xff]
  %v2676 = vld [vmem:[#allocation3 + $0x250] sm:$0xff]
  %v2677 = vld [vmem:[#allocation3 + $0x258] sm:$0xff]
  %v2678 = vld [vmem:[#allocation3 + $0x260] sm:$0xff]
  %v2679 = vld [vmem:[#allocation3 + $0x268] sm:$0xff]
  %v2680 = vld [vmem:[#allocation3 + $0x270] sm:$0xff]
  %v2681 = vld [vmem:[#allocation3 + $0x278] sm:$0xff]
  %v2682 = vld [vmem:[#allocation3 + $0x280] sm:$0xff]
  %v2683 = vld [vmem:[#allocation3 + $0x288] sm:$0xff]
  %v2684 = vld [vmem:[#allocation3 + $0x290] sm:$0xff]
  %v2685 = vld [vmem:[#allocation3 + $0x298] sm:$0xff]
  %v2686 = vld [vmem:[#allocation3 + $0x2a0] sm:$0xff]
  %v2687 = vld [vmem:[#allocation3 + $0x2a8] sm:$0xff]
  %v2688 = vld [vmem:[#allocation3 + $0x2b0] sm:$0xff]
  %v2689 = vld [vmem:[#allocation3 + $0x2b8] sm:$0xff]
  %v2690 = vld [vmem:[#allocation3 + $0x2c0] sm:$0xff]
  %v2691 = vld [vmem:[#allocation3 + $0x2c8] sm:$0xff]
  %v2692 = vld [vmem:[#allocation3 + $0x2d0] sm:$0xff]
  %v2693 = vld [vmem:[#allocation3 + $0x2d8] sm:$0xff]
  %v2694 = vld [vmem:[#allocation3 + $0x2e0] sm:$0xff]
  %v2695 = vld [vmem:[#allocation3 + $0x2e8] sm:$0xff]
  %v2696 = vld [vmem:[#allocation3 + $0x2f0] sm:$0xff]
  %v2697 = vld [vmem:[#allocation3 + $0x2f8] sm:$0xff]
  %v2698 = vld [vmem:[#allocation3 + $0x300] sm:$0xff]
  %v2699 = vld [vmem:[#allocation3 + $0x308] sm:$0xff]
  %v2700 = vld [vmem:[#allocation3 + $0x310] sm:$0xff]
  %v2701 = vld [vmem:[#allocation3 + $0x318] sm:$0xff]
  %v2702 = vld [vmem:[#allocation3 + $0x320] sm:$0xff]
  %v2703 = vld [vmem:[#allocation3 + $0x328] sm:$0xff]
  %v2704 = vld [vmem:[#allocation3 + $0x330] sm:$0xff]
  %v2705 = vld [vmem:[#allocation3 + $0x338] sm:$0xff]
  %v2706 = vld [vmem:[#allocation3 + $0x340] sm:$0xff]
  %v2707 = vld [vmem:[#allocation3 + $0x348] sm:$0xff]
  %v2708 = vld [vmem:[#allocation3 + $0x350] sm:$0xff]
  %v2709 = vld [vmem:[#allocation3 + $0x358] sm:$0xff]
  %v2710 = vld [vmem:[#allocation3 + $0x360] sm:$0xff]
  %v2711 = vld [vmem:[#allocation3 + $0x368] sm:$0xff]
  %v2712 = vld [vmem:[#allocation3 + $0x370] sm:$0xff]
  %v2713 = vld [vmem:[#allocation3 + $0x378] sm:$0xff]
  %v2714 = vld [vmem:[%s3] sm:$0xff]
  %v2715 = vld [vmem:[%s3 + $0x8] sm:$0xff]
  %v2716 = vld [vmem:[%s3 + $0x10] sm:$0xff]
  %v2717 = vld [vmem:[%s3 + $0x18] sm:$0xff]
  %v2718 = vld [vmem:[%s3 + $0x20] sm:$0xff]
  %v2719 = vld [vmem:[%s3 + $0x28] sm:$0xff]
  %v2720 = vld [vmem:[%s3 + $0x30] sm:$0xff]
  %v2721 = vld [vmem:[%s3 + $0x38] sm:$0xff]
  %v2722 = vld [vmem:[%s3 + $0x40] sm:$0xff]
  %v2723 = vld [vmem:[%s3 + $0x48] sm:$0xff]
  %v2724 = vld [vmem:[%s3 + $0x50] sm:$0xff]
  %v2725 = vld [vmem:[%s3 + $0x58] sm:$0xff]
  %v2726 = vld [vmem:[%s3 + $0x60] sm:$0xff]
  %v2727 = vld [vmem:[%s3 + $0x68] sm:$0xff]
  %v2728 = vld [vmem:[%s3 + $0x70] sm:$0xff]
  %v2729 = vld [vmem:[%s3 + $0x78] sm:$0xff]
  %v2730 = vld [vmem:[%s3 + $0x80] sm:$0xff]
  %v2731 = vld [vmem:[%s3 + $0x88] sm:$0xff]
  %v2732 = vld [vmem:[%s3 + $0x90] sm:$0xff]
  %v2733 = vld [vmem:[%s3 + $0x98] sm:$0xff]
  %v2734 = vld [vmem:[%s3 + $0xa0] sm:$0xff]
  %v2735 = vld [vmem:[%s3 + $0xa8] sm:$0xff]
  %v2736 = vld [vmem:[%s3 + $0xb0] sm:$0xff]
  %v2737 = vld [vmem:[%s3 + $0xb8] sm:$0xff]
  %v2738 = vld [vmem:[%s3 + $0xc0] sm:$0xff]
  %v2739 = vld [vmem:[%s3 + $0xc8] sm:$0xff]
  %v2740 = vld [vmem:[%s3 + $0xd0] sm:$0xff]
  %v2741 = vld [vmem:[%s3 + $0xd8] sm:$0xff]
  %v2742 = vld [vmem:[%s3 + $0xe0] sm:$0xff]
  %v2743 = vld [vmem:[%s3 + $0xe8] sm:$0xff]
  %v2744 = vld [vmem:[%s3 + $0xf0] sm:$0xff]
  %v2745 = vld [vmem:[%s3 + $0xf8] sm:$0xff]
  %v2746 = vld [vmem:[%s3 + $0x100] sm:$0xff]
  %v2747 = vld [vmem:[%s3 + $0x108] sm:$0xff]
  %v2748 = vld [vmem:[%s3 + $0x110] sm:$0xff]
  %v2749 = vld [vmem:[%s3 + $0x118] sm:$0xff]
  %v2750 = vld [vmem:[%s3 + $0x120] sm:$0xff]
  %v2751 = vld [vmem:[%s3 + $0x128] sm:$0xff]
  %v2752 = vld [vmem:[%s3 + $0x130] sm:$0xff]
  %v2753 = vld [vmem:[%s3 + $0x138] sm:$0xff]
  %v2754 = vld [vmem:[%s3 + $0x140] sm:$0xff]
  %v2755 = vld [vmem:[%s3 + $0x148] sm:$0xff]
  %v2756 = vld [vmem:[%s3 + $0x150] sm:$0xff]
  %v2757 = vld [vmem:[%s3 + $0x158] sm:$0xff]
  %v2758 = vld [vmem:[%s3 + $0x160] sm:$0xff]
  %v2759 = vld [vmem:[%s3 + $0x168] sm:$0xff]
  %v2760 = vld [vmem:[%s3 + $0x170] sm:$0xff]
  %v2761 = vld [vmem:[%s3 + $0x178] sm:$0xff]
  %v2762 = vld [vmem:[%s3 + $0x180] sm:$0xff]
  %v2763 = vld [vmem:[%s3 + $0x188] sm:$0xff]
  %v2764 = vld [vmem:[%s3 + $0x190] sm:$0xff]
  %v2765 = vld [vmem:[%s3 + $0x198] sm:$0xff]
  %v2766 = vld [vmem:[%s3 + $0x1a0] sm:$0xff]
  %v2767 = vld [vmem:[%s3 + $0x1a8] sm:$0xff]
  %v2768 = vld [vmem:[%s3 + $0x1b0] sm:$0xff]
  %v2769 = vld [vmem:[%s3 + $0x1b8] sm:$0xff]
  %v2770 = vld [vmem:[%s3 + $0x1c0] sm:$0xff]
  %v2771 = vld [vmem:[%s3 + $0x1c8] sm:$0xff]
  %v2772 = vld [vmem:[%s3 + $0x1d0] sm:$0xff]
  %v2773 = vld [vmem:[%s3 + $0x1d8] sm:$0xff]
  %v2774 = vld [vmem:[%s3 + $0x1e0] sm:$0xff]
  %v2775 = vld [vmem:[%s3 + $0x1e8] sm:$0xff]
  %v2776 = vld [vmem:[%s3 + $0x1f0] sm:$0xff]
  %v2777 = vld [vmem:[%s3 + $0x1f8] sm:$0xff]
  %v2778 = vld [vmem:[%s3 + $0x200] sm:$0xff]
  %v2779 = vld [vmem:[%s3 + $0x208] sm:$0xff]
  %v2780 = vld [vmem:[%s3 + $0x210] sm:$0xff]
  %v2781 = vld [vmem:[%s3 + $0x218] sm:$0xff]
  %v2782 = vld [vmem:[%s3 + $0x220] sm:$0xff]
  %v2783 = vld [vmem:[%s3 + $0x228] sm:$0xff]
  %v2784 = vld [vmem:[%s3 + $0x230] sm:$0xff]
  %v2785 = vld [vmem:[%s3 + $0x238] sm:$0xff]
  %v2786 = vld [vmem:[%s3 + $0x240] sm:$0xff]
  %v2787 = vld [vmem:[%s3 + $0x248] sm:$0xff]
  %v2788 = vld [vmem:[%s3 + $0x250] sm:$0xff]
  %v2789 = vld [vmem:[%s3 + $0x258] sm:$0xff]
  %v2790 = vld [vmem:[%s3 + $0x260] sm:$0xff]
  %v2791 = vld [vmem:[%s3 + $0x268] sm:$0xff]
  %v2792 = vld [vmem:[%s3 + $0x270] sm:$0xff]
  %v2793 = vld [vmem:[%s3 + $0x278] sm:$0xff]
  %v2794 = vld [vmem:[%s3 + $0x280] sm:$0xff]
  %v2795 = vld [vmem:[%s3 + $0x288] sm:$0xff]
  %v2796 = vld [vmem:[%s3 + $0x290] sm:$0xff]
  %v2797 = vld [vmem:[%s3 + $0x298] sm:$0xff]
  %v2798 = vld [vmem:[%s3 + $0x2a0] sm:$0xff]
  %v2799 = vld [vmem:[%s3 + $0x2a8] sm:$0xff]
  %v2800 = vld [vmem:[%s3 + $0x2b0] sm:$0xff]
  %v2801 = vld [vmem:[%s3 + $0x2b8] sm:$0xff]
  %v2802 = vld [vmem:[%s3 + $0x2c0] sm:$0xff]
  %v2803 = vld [vmem:[%s3 + $0x2c8] sm:$0xff]
  %v2804 = vld [vmem:[%s3 + $0x2d0] sm:$0xff]
  %v2805 = vld [vmem:[%s3 + $0x2d8] sm:$0xff]
  %v2806 = vld [vmem:[%s3 + $0x2e0] sm:$0xff]
  %v2807 = vld [vmem:[%s3 + $0x2e8] sm:$0xff]
  %v2808 = vld [vmem:[%s3 + $0x2f0] sm:$0xff]
  %v2809 = vld [vmem:[%s3 + $0x2f8] sm:$0xff]
  %v2810 = vld [vmem:[%s3 + $0x300] sm:$0xff]
  %v2811 = vld [vmem:[%s3 + $0x308] sm:$0xff]
  %v2812 = vld [vmem:[%s3 + $0x310] sm:$0xff]
  %v2813 = vld [vmem:[%s3 + $0x318] sm:$0xff]
  %v2814 = vld [vmem:[%s4] sm:$0x1]
  %v2816 = vlaneseq
  %v2817 = vshrl.u32 %v2816, 7
  %v2818 = vsub.s32 0, %v2817
  %v2819 = vrot.slane %v2814, %v2818
  %v2822 = vsel %vm593, %v2608, 0
  %v2825 = vsel %vm593, %v2615, 0
  %v2828 = vsel %vm593, %v2622, 0
  %v2831 = vsel %vm593, %v2629, 0
  %v2834 = vsel %vm593, %v2636, 0
  %v2837 = vsel %vm593, %v2643, 0
  %v2840 = vsel %vm593, %v2650, 0
  %v2843 = vsel %vm593, %v2657, 0
  %v2846 = vsel %vm593, %v2664, 0
  %v2849 = vsel %vm593, %v2671, 0
  %v2852 = vsel %vm593, %v2678, 0
  %v2855 = vsel %vm593, %v2685, 0
  %v2858 = vsel %vm593, %v2692, 0
  %v2861 = vsel %vm593, %v2699, 0
  %v2864 = vsel %vm593, %v2706, 0
  %v2867 = vsel %vm593, %v2713, 0
  %2869 = vmatprep.subr.mxu0 0.0
  %2870 = vmatpush1.msra.mxu0 %v2729
  %2871 = vmatprep.subr.mxu0 0.0
  %2872 = vmatpush1.msra.mxu0 %v2728
  %2873 = vmatprep.subr.mxu0 0.0
  %2874 = vmatpush1.msra.mxu0 %v2727
  %2875 = vmatprep.subr.mxu0 0.0
  %2876 = vmatpush1.msra.mxu0 %v2726
  %2877 = vmatprep.subr.mxu0 0.0
  %2878 = vmatpush1.msra.mxu0 %v2725
  %2879 = vmatprep.subr.mxu0 0.0
  %2880 = vmatpush1.msra.mxu0 %v2724
  %2881 = vmatprep.subr.mxu0 0.0
  %2882 = vmatpush1.msra.mxu0 %v2723
  %2883 = vmatprep.subr.mxu0 0.0
  %2884 = vmatpush1.msra.mxu0 %v2722
  %2885 = vmatprep.subr.mxu0 0.0
  %2886 = vmatpush1.msra.mxu0 %v2721
  %2887 = vmatprep.subr.mxu0 0.0
  %2888 = vmatpush1.msra.mxu0 %v2720
  %2889 = vmatprep.subr.mxu0 0.0
  %2890 = vmatpush1.msra.mxu0 %v2719
  %2891 = vmatprep.subr.mxu0 0.0
  %2892 = vmatpush1.msra.mxu0 %v2718
  %2893 = vmatprep.subr.mxu0 0.0
  %2894 = vmatpush1.msra.mxu0 %v2717
  %2895 = vmatprep.subr.mxu0 0.0
  %2896 = vmatpush1.msra.mxu0 %v2716
  %2897 = vmatprep.subr.mxu0 0.0
  %2898 = vmatpush1.msra.mxu0 %v2715
  %2899 = vmatprep.subr.mxu0 0.0
  %2900 = vmatpush1.msra.mxu0 %v2714
  %2901 = vmatprep.subr.mxu0 0.0
  %2902 = vmatpush2.msra.mxu0 %v2745
  %2903 = vmatprep.subr.mxu0 0.0
  %2904 = vmatpush2.msra.mxu0 %v2744
  %2905 = vmatprep.subr.mxu0 0.0
  %2906 = vmatpush2.msra.mxu0 %v2743
  %2907 = vmatprep.subr.mxu0 0.0
  %2908 = vmatpush2.msra.mxu0 %v2742
  %2909 = vmatprep.subr.mxu0 0.0
  %2910 = vmatpush2.msra.mxu0 %v2741
  %2911 = vmatprep.subr.mxu0 0.0
  %2912 = vmatpush2.msra.mxu0 %v2740
  %2913 = vmatprep.subr.mxu0 0.0
  %2914 = vmatpush2.msra.mxu0 %v2739
  %2915 = vmatprep.subr.mxu0 0.0
  %2916 = vmatpush2.msra.mxu0 %v2738
  %2917 = vmatprep.subr.mxu0 0.0
  %2918 = vmatpush2.msra.mxu0 %v2737
  %2919 = vmatprep.subr.mxu0 0.0
  %2920 = vmatpush2.msra.mxu0 %v2736
  %2921 = vmatprep.subr.mxu0 0.0
  %2922 = vmatpush2.msra.mxu0 %v2735
  %2923 = vmatprep.subr.mxu0 0.0
  %2924 = vmatpush2.msra.mxu0 %v2734
  %2925 = vmatprep.subr.mxu0 0.0
  %2926 = vmatpush2.msra.mxu0 %v2733
  %2927 = vmatprep.subr.mxu0 0.0
  %2928 = vmatpush2.msra.mxu0 %v2732
  %2929 = vmatprep.subr.mxu0 0.0
  %2930 = vmatpush2.msra.mxu0 %v2731
  %2931 = vmatprep.subr.mxu0 0.0
  %2932 = vmatpush2.msra.mxu0 %v2730
  %2933 = vmatprep.mubr.f32.mxu0 %v2603
  %2934 = vmatmul.mubr.f32.gmra.mxu0 %v2602
  %v2935 = vpop.f32.mrf.mxu0
  %v2936 = vadd.f32 %v2819, %v2935
  %v2937 = vpop.f32.mrf.mxu0
  %2938 = vmatprep.mubr.f32.mxu0 %v2610
  %2939 = vmatmul.mubr.f32.gmra.mxu0 %v2609
  %v2940 = vpop.f32.mrf.mxu0
  %v2941 = vadd.f32 %v2819, %v2940
  %v2942 = vpop.f32.mrf.mxu0
  %2943 = vmatprep.mubr.f32.mxu0 %v2617
  %2944 = vmatmul.mubr.f32.gmra.mxu0 %v2616
  %v2945 = vpop.f32.mrf.mxu0
  %v2946 = vadd.f32 %v2819, %v2945
  %v2947 = vpop.f32.mrf.mxu0
  %2948 = vmatprep.mubr.f32.mxu0 %v2624
  %2949 = vmatmul.mubr.f32.gmra.mxu0 %v2623
  %v2950 = vpop.f32.mrf.mxu0
  %v2951 = vadd.f32 %v2819, %v2950
  %v2952 = vpop.f32.mrf.mxu0
  %2953 = vmatprep.mubr.f32.mxu0 %v2631
  %2954 = vmatmul.mubr.f32.gmra.mxu0 %v2630
  %v2955 = vpop.f32.mrf.mxu0
  %v2956 = vadd.f32 %v2819, %v2955
  %v2957 = vpop.f32.mrf.mxu0
  %2958 = vmatprep.mubr.f32.mxu0 %v2638
  %2959 = vmatmul.mubr.f32.gmra.mxu0 %v2637
  %v2960 = vpop.f32.mrf.mxu0
  %v2961 = vadd.f32 %v2819, %v2960
  %v2962 = vpop.f32.mrf.mxu0
  %2963 = vmatprep.mubr.f32.mxu0 %v2645
  %2964 = vmatmul.mubr.f32.gmra.mxu0 %v2644
  %v2965 = vpop.f32.mrf.mxu0
  %v2966 = vadd.f32 %v2819, %v2965
  %v2967 = vpop.f32.mrf.mxu0
  %2968 = vmatprep.mubr.f32.mxu0 %v2652
  %2969 = vmatmul.mubr.f32.gmra.mxu0 %v2651
  %v2970 = vpop.f32.mrf.mxu0
  %v2971 = vadd.f32 %v2819, %v2970
  %v2972 = vpop.f32.mrf.mxu0
  %2973 = vmatprep.mubr.f32.mxu0 %v2659
  %2974 = vmatmul.mubr.f32.gmra.mxu0 %v2658
  %v2975 = vpop.f32.mrf.mxu0
  %v2976 = vadd.f32 %v2819, %v2975
  %v2977 = vpop.f32.mrf.mxu0
  %2978 = vmatprep.mubr.f32.mxu0 %v2666
  %2979 = vmatmul.mubr.f32.gmra.mxu0 %v2665
  %v2980 = vpop.f32.mrf.mxu0
  %v2981 = vadd.f32 %v2819, %v2980
  %v2982 = vpop.f32.mrf.mxu0
  %2983 = vmatprep.mubr.f32.mxu0 %v2673
  %2984 = vmatmul.mubr.f32.gmra.mxu0 %v2672
  %v2985 = vpop.f32.mrf.mxu0
  %v2986 = vadd.f32 %v2819, %v2985
  %v2987 = vpop.f32.mrf.mxu0
  %2988 = vmatprep.mubr.f32.mxu0 %v2680
  %2989 = vmatmul.mubr.f32.gmra.mxu0 %v2679
  %v2990 = vpop.f32.mrf.mxu0
  %v2991 = vadd.f32 %v2819, %v2990
  %v2992 = vpop.f32.mrf.mxu0
  %2993 = vmatprep.mubr.f32.mxu0 %v2687
  %2994 = vmatmul.mubr.f32.gmra.mxu0 %v2686
  %v2995 = vpop.f32.mrf.mxu0
  %v2996 = vadd.f32 %v2819, %v2995
  %v2997 = vpop.f32.mrf.mxu0
  %2998 = vmatprep.mubr.f32.mxu0 %v2694
  %2999 = vmatmul.mubr.f32.gmra.mxu0 %v2693
  %v3000 = vpop.f32.mrf.mxu0
  %v3001 = vadd.f32 %v2819, %v3000
  %v3002 = vpop.f32.mrf.mxu0
  %3003 = vmatprep.mubr.f32.mxu0 %v2701
  %3004 = vmatmul.mubr.f32.gmra.mxu0 %v2700
  %v3005 = vpop.f32.mrf.mxu0
  %v3006 = vadd.f32 %v2819, %v3005
  %v3007 = vpop.f32.mrf.mxu0
  %3008 = vmatprep.mubr.f32.mxu0 %v2708
  %3009 = vmatmul.mubr.f32.gmra.mxu0 %v2707
  %v3010 = vpop.f32.mrf.mxu0
  %v3011 = vadd.f32 %v2819, %v3010
  %v3012 = vpop.f32.mrf.mxu0
  %3013 = vdwg.mxu0
  %3014 = vmatprep.subr.mxu0 0.0
  %3015 = vmatpush1.msra.mxu0 %v2761
  %3016 = vmatprep.subr.mxu0 0.0
  %3017 = vmatpush1.msra.mxu0 %v2760
  %3018 = vmatprep.subr.mxu0 0.0
  %3019 = vmatpush1.msra.mxu0 %v2759
  %3020 = vmatprep.subr.mxu0 0.0
  %3021 = vmatpush1.msra.mxu0 %v2758
  %3022 = vmatprep.subr.mxu0 0.0
  %3023 = vmatpush1.msra.mxu0 %v2757
  %3024 = vmatprep.subr.mxu0 0.0
  %3025 = vmatpush1.msra.mxu0 %v2756
  %3026 = vmatprep.subr.mxu0 0.0
  %3027 = vmatpush1.msra.mxu0 %v2755
  %3028 = vmatprep.subr.mxu0 0.0
  %3029 = vmatpush1.msra.mxu0 %v2754
  %3030 = vmatprep.subr.mxu0 0.0
  %3031 = vmatpush1.msra.mxu0 %v2753
  %3032 = vmatprep.subr.mxu0 0.0
  %3033 = vmatpush1.msra.mxu0 %v2752
  %3034 = vmatprep.subr.mxu0 0.0
  %3035 = vmatpush1.msra.mxu0 %v2751
  %3036 = vmatprep.subr.mxu0 0.0
  %3037 = vmatpush1.msra.mxu0 %v2750
  %3038 = vmatprep.subr.mxu0 0.0
  %3039 = vmatpush1.msra.mxu0 %v2749
  %3040 = vmatprep.subr.mxu0 0.0
  %3041 = vmatpush1.msra.mxu0 %v2748
  %3042 = vmatprep.subr.mxu0 0.0
  %3043 = vmatpush1.msra.mxu0 %v2747
  %3044 = vmatprep.subr.mxu0 0.0
  %3045 = vmatpush1.msra.mxu0 %v2746
  %3046 = vmatprep.subr.mxu0 0.0
  %3047 = vmatpush2.msra.mxu0 %v2777
  %3048 = vmatprep.subr.mxu0 0.0
  %3049 = vmatpush2.msra.mxu0 %v2776
  %3050 = vmatprep.subr.mxu0 0.0
  %3051 = vmatpush2.msra.mxu0 %v2775
  %3052 = vmatprep.subr.mxu0 0.0
  %3053 = vmatpush2.msra.mxu0 %v2774
  %3054 = vmatprep.subr.mxu0 0.0
  %3055 = vmatpush2.msra.mxu0 %v2773
  %3056 = vmatprep.subr.mxu0 0.0
  %3057 = vmatpush2.msra.mxu0 %v2772
  %3058 = vmatprep.subr.mxu0 0.0
  %3059 = vmatpush2.msra.mxu0 %v2771
  %3060 = vmatprep.subr.mxu0 0.0
  %3061 = vmatpush2.msra.mxu0 %v2770
  %3062 = vmatprep.subr.mxu0 0.0
  %3063 = vmatpush2.msra.mxu0 %v2769
  %3064 = vmatprep.subr.mxu0 0.0
  %3065 = vmatpush2.msra.mxu0 %v2768
  %3066 = vmatprep.subr.mxu0 0.0
  %3067 = vmatpush2.msra.mxu0 %v2767
  %3068 = vmatprep.subr.mxu0 0.0
  %3069 = vmatpush2.msra.mxu0 %v2766
  %3070 = vmatprep.subr.mxu0 0.0
  %3071 = vmatpush2.msra.mxu0 %v2765
  %3072 = vmatprep.subr.mxu0 0.0
  %3073 = vmatpush2.msra.mxu0 %v2764
  %3074 = vmatprep.subr.mxu0 0.0
  %3075 = vmatpush2.msra.mxu0 %v2763
  %3076 = vmatprep.subr.mxu0 0.0
  %3077 = vmatpush2.msra.mxu0 %v2762
  %3078 = vmatprep.mubr.f32.mxu0 %v2605
  %3079 = vmatmul.mubr.f32.gmra.mxu0 %v2604
  %v3080 = vpop.f32.mrf.mxu0
  %v3081 = vadd.f32 %v2936, %v3080
  %v3082 = vpop.f32.mrf.mxu0
  %3083 = vmatprep.mubr.f32.mxu0 %v2612
  %3084 = vmatmul.mubr.f32.gmra.mxu0 %v2611
  %v3085 = vpop.f32.mrf.mxu0
  %v3086 = vadd.f32 %v2941, %v3085
  %v3087 = vpop.f32.mrf.mxu0
  %3088 = vmatprep.mubr.f32.mxu0 %v2619
  %3089 = vmatmul.mubr.f32.gmra.mxu0 %v2618
  %v3090 = vpop.f32.mrf.mxu0
  %v3091 = vadd.f32 %v2946, %v3090
  %v3092 = vpop.f32.mrf.mxu0
  %3093 = vmatprep.mubr.f32.mxu0 %v2626
  %3094 = vmatmul.mubr.f32.gmra.mxu0 %v2625
  %v3095 = vpop.f32.mrf.mxu0
  %v3096 = vadd.f32 %v2951, %v3095
  %v3097 = vpop.f32.mrf.mxu0
  %3098 = vmatprep.mubr.f32.mxu0 %v2633
  %3099 = vmatmul.mubr.f32.gmra.mxu0 %v2632
  %v3100 = vpop.f32.mrf.mxu0
  %v3101 = vadd.f32 %v2956, %v3100
  %v3102 = vpop.f32.mrf.mxu0
  %3103 = vmatprep.mubr.f32.mxu0 %v2640
  %3104 = vmatmul.mubr.f32.gmra.mxu0 %v2639
  %v3105 = vpop.f32.mrf.mxu0
  %v3106 = vadd.f32 %v2961, %v3105
  %v3107 = vpop.f32.mrf.mxu0
  %3108 = vmatprep.mubr.f32.mxu0 %v2647
  %3109 = vmatmul.mubr.f32.gmra.mxu0 %v2646
  %v3110 = vpop.f32.mrf.mxu0
  %v3111 = vadd.f32 %v2966, %v3110
  %v3112 = vpop.f32.mrf.mxu0
  %3113 = vmatprep.mubr.f32.mxu0 %v2654
  %3114 = vmatmul.mubr.f32.gmra.mxu0 %v2653
  %v3115 = vpop.f32.mrf.mxu0
  %v3116 = vadd.f32 %v2971, %v3115
  %v3117 = vpop.f32.mrf.mxu0
  %3118 = vmatprep.mubr.f32.mxu0 %v2661
  %3119 = vmatmul.mubr.f32.gmra.mxu0 %v2660
  %v3120 = vpop.f32.mrf.mxu0
  %v3121 = vadd.f32 %v2976, %v3120
  %v3122 = vpop.f32.mrf.mxu0
  %3123 = vmatprep.mubr.f32.mxu0 %v2668
  %3124 = vmatmul.mubr.f32.gmra.mxu0 %v2667
  %v3125 = vpop.f32.mrf.mxu0
  %v3126 = vadd.f32 %v2981, %v3125
  %v3127 = vpop.f32.mrf.mxu0
  %3128 = vmatprep.mubr.f32.mxu0 %v2675
  %3129 = vmatmul.mubr.f32.gmra.mxu0 %v2674
  %v3130 = vpop.f32.mrf.mxu0
  %v3131 = vadd.f32 %v2986, %v3130
  %v3132 = vpop.f32.mrf.mxu0
  %3133 = vmatprep.mubr.f32.mxu0 %v2682
  %3134 = vmatmul.mubr.f32.gmra.mxu0 %v2681
  %v3135 = vpop.f32.mrf.mxu0
  %v3136 = vadd.f32 %v2991, %v3135
  %v3137 = vpop.f32.mrf.mxu0
  %3138 = vmatprep.mubr.f32.mxu0 %v2689
  %3139 = vmatmul.mubr.f32.gmra.mxu0 %v2688
  %v3140 = vpop.f32.mrf.mxu0
  %v3141 = vadd.f32 %v2996, %v3140
  %v3142 = vpop.f32.mrf.mxu0
  %3143 = vmatprep.mubr.f32.mxu0 %v2696
  %3144 = vmatmul.mubr.f32.gmra.mxu0 %v2695
  %v3145 = vpop.f32.mrf.mxu0
  %v3146 = vadd.f32 %v3001, %v3145
  %v3147 = vpop.f32.mrf.mxu0
  %3148 = vmatprep.mubr.f32.mxu0 %v2703
  %3149 = vmatmul.mubr.f32.gmra.mxu0 %v2702
  %v3150 = vpop.f32.mrf.mxu0
  %v3151 = vadd.f32 %v3006, %v3150
  %v3152 = vpop.f32.mrf.mxu0
  %3153 = vmatprep.mubr.f32.mxu0 %v2710
  %3154 = vmatmul.mubr.f32.gmra.mxu0 %v2709
  %v3155 = vpop.f32.mrf.mxu0
  %v3156 = vadd.f32 %v3011, %v3155
  %v3157 = vpop.f32.mrf.mxu0
  %3158 = vdwg.mxu0
  %3159 = vmatprep.subr.mxu0 0.0
  %3160 = vmatpush1.msra.mxu0 %v2793
  %3161 = vmatprep.subr.mxu0 0.0
  %3162 = vmatpush1.msra.mxu0 %v2792
  %3163 = vmatprep.subr.mxu0 0.0
  %3164 = vmatpush1.msra.mxu0 %v2791
  %3165 = vmatprep.subr.mxu0 0.0
  %3166 = vmatpush1.msra.mxu0 %v2790
  %3167 = vmatprep.subr.mxu0 0.0
  %3168 = vmatpush1.msra.mxu0 %v2789
  %3169 = vmatprep.subr.mxu0 0.0
  %3170 = vmatpush1.msra.mxu0 %v2788
  %3171 = vmatprep.subr.mxu0 0.0
  %3172 = vmatpush1.msra.mxu0 %v2787
  %3173 = vmatprep.subr.mxu0 0.0
  %3174 = vmatpush1.msra.mxu0 %v2786
  %3175 = vmatprep.subr.mxu0 0.0
  %3176 = vmatpush1.msra.mxu0 %v2785
  %3177 = vmatprep.subr.mxu0 0.0
  %3178 = vmatpush1.msra.mxu0 %v2784
  %3179 = vmatprep.subr.mxu0 0.0
  %3180 = vmatpush1.msra.mxu0 %v2783
  %3181 = vmatprep.subr.mxu0 0.0
  %3182 = vmatpush1.msra.mxu0 %v2782
  %3183 = vmatprep.subr.mxu0 0.0
  %3184 = vmatpush1.msra.mxu0 %v2781
  %3185 = vmatprep.subr.mxu0 0.0
  %3186 = vmatpush1.msra.mxu0 %v2780
  %3187 = vmatprep.subr.mxu0 0.0
  %3188 = vmatpush1.msra.mxu0 %v2779
  %3189 = vmatprep.subr.mxu0 0.0
  %3190 = vmatpush1.msra.mxu0 %v2778
  %3191 = vmatprep.subr.mxu0 0.0
  %3192 = vmatpush2.msra.mxu0 %v2809
  %3193 = vmatprep.subr.mxu0 0.0
  %3194 = vmatpush2.msra.mxu0 %v2808
  %3195 = vmatprep.subr.mxu0 0.0
  %3196 = vmatpush2.msra.mxu0 %v2807
  %3197 = vmatprep.subr.mxu0 0.0
  %3198 = vmatpush2.msra.mxu0 %v2806
  %3199 = vmatprep.subr.mxu0 0.0
  %3200 = vmatpush2.msra.mxu0 %v2805
  %3201 = vmatprep.subr.mxu0 0.0
  %3202 = vmatpush2.msra.mxu0 %v2804
  %3203 = vmatprep.subr.mxu0 0.0
  %3204 = vmatpush2.msra.mxu0 %v2803
  %3205 = vmatprep.subr.mxu0 0.0
  %3206 = vmatpush2.msra.mxu0 %v2802
  %3207 = vmatprep.subr.mxu0 0.0
  %3208 = vmatpush2.msra.mxu0 %v2801
  %3209 = vmatprep.subr.mxu0 0.0
  %3210 = vmatpush2.msra.mxu0 %v2800
  %3211 = vmatprep.subr.mxu0 0.0
  %3212 = vmatpush2.msra.mxu0 %v2799
  %3213 = vmatprep.subr.mxu0 0.0
  %3214 = vmatpush2.msra.mxu0 %v2798
  %3215 = vmatprep.subr.mxu0 0.0
  %3216 = vmatpush2.msra.mxu0 %v2797
  %3217 = vmatprep.subr.mxu0 0.0
  %3218 = vmatpush2.msra.mxu0 %v2796
  %3219 = vmatprep.subr.mxu0 0.0
  %3220 = vmatpush2.msra.mxu0 %v2795
  %3221 = vmatprep.subr.mxu0 0.0
  %3222 = vmatpush2.msra.mxu0 %v2794
  %3223 = vmatprep.mubr.f32.mxu0 %v2607
  %3224 = vmatmul.mubr.f32.gmra.mxu0 %v2606
  %v3225 = vpop.f32.mrf.mxu0
  %v3226 = vadd.f32 %v3081, %v3225
  %v3227 = vpop.f32.mrf.mxu0
  %3228 = vmatprep.mubr.f32.mxu0 %v2614
  %3229 = vmatmul.mubr.f32.gmra.mxu0 %v2613
  %v3230 = vpop.f32.mrf.mxu0
  %v3231 = vadd.f32 %v3086, %v3230
  %v3232 = vpop.f32.mrf.mxu0
  %3233 = vmatprep.mubr.f32.mxu0 %v2621
  %3234 = vmatmul.mubr.f32.gmra.mxu0 %v2620
  %v3235 = vpop.f32.mrf.mxu0
  %v3236 = vadd.f32 %v3091, %v3235
  %v3237 = vpop.f32.mrf.mxu0
  %3238 = vmatprep.mubr.f32.mxu0 %v2628
  %3239 = vmatmul.mubr.f32.gmra.mxu0 %v2627
  %v3240 = vpop.f32.mrf.mxu0
  %v3241 = vadd.f32 %v3096, %v3240
  %v3242 = vpop.f32.mrf.mxu0
  %3243 = vmatprep.mubr.f32.mxu0 %v2635
  %3244 = vmatmul.mubr.f32.gmra.mxu0 %v2634
  %v3245 = vpop.f32.mrf.mxu0
  %v3246 = vadd.f32 %v3101, %v3245
  %v3247 = vpop.f32.mrf.mxu0
  %3248 = vmatprep.mubr.f32.mxu0 %v2642
  %3249 = vmatmul.mubr.f32.gmra.mxu0 %v2641
  %v3250 = vpop.f32.mrf.mxu0
  %v3251 = vadd.f32 %v3106, %v3250
  %v3252 = vpop.f32.mrf.mxu0
  %3253 = vmatprep.mubr.f32.mxu0 %v2649
  %3254 = vmatmul.mubr.f32.gmra.mxu0 %v2648
  %v3255 = vpop.f32.mrf.mxu0
  %v3256 = vadd.f32 %v3111, %v3255
  %v3257 = vpop.f32.mrf.mxu0
  %3258 = vmatprep.mubr.f32.mxu0 %v2656
  %3259 = vmatmul.mubr.f32.gmra.mxu0 %v2655
  %v3260 = vpop.f32.mrf.mxu0
  %v3261 = vadd.f32 %v3116, %v3260
  %v3262 = vpop.f32.mrf.mxu0
  %3263 = vmatprep.mubr.f32.mxu0 %v2663
  %3264 = vmatmul.mubr.f32.gmra.mxu0 %v2662
  %v3265 = vpop.f32.mrf.mxu0
  %v3266 = vadd.f32 %v3121, %v3265
  %v3267 = vpop.f32.mrf.mxu0
  %3268 = vmatprep.mubr.f32.mxu0 %v2670
  %3269 = vmatmul.mubr.f32.gmra.mxu0 %v2669
  %v3270 = vpop.f32.mrf.mxu0
  %v3271 = vadd.f32 %v3126, %v3270
  %v3272 = vpop.f32.mrf.mxu0
  %3273 = vmatprep.mubr.f32.mxu0 %v2677
  %3274 = vmatmul.mubr.f32.gmra.mxu0 %v2676
  %v3275 = vpop.f32.mrf.mxu0
  %v3276 = vadd.f32 %v3131, %v3275
  %v3277 = vpop.f32.mrf.mxu0
  %3278 = vmatprep.mubr.f32.mxu0 %v2684
  %3279 = vmatmul.mubr.f32.gmra.mxu0 %v2683
  %v3280 = vpop.f32.mrf.mxu0
  %v3281 = vadd.f32 %v3136, %v3280
  %v3282 = vpop.f32.mrf.mxu0
  %3283 = vmatprep.mubr.f32.mxu0 %v2691
  %3284 = vmatmul.mubr.f32.gmra.mxu0 %v2690
  %v3285 = vpop.f32.mrf.mxu0
  %v3286 = vadd.f32 %v3141, %v3285
  %v3287 = vpop.f32.mrf.mxu0
  %3288 = vmatprep.mubr.f32.mxu0 %v2698
  %3289 = vmatmul.mubr.f32.gmra.mxu0 %v2697
  %v3290 = vpop.f32.mrf.mxu0
  %v3291 = vadd.f32 %v3146, %v3290
  %v3292 = vpop.f32.mrf.mxu0
  %3293 = vmatprep.mubr.f32.mxu0 %v2705
  %3294 = vmatmul.mubr.f32.gmra.mxu0 %v2704
  %v3295 = vpop.f32.mrf.mxu0
  %v3296 = vadd.f32 %v3151, %v3295
  %v3297 = vpop.f32.mrf.mxu0
  %3298 = vmatprep.mubr.f32.mxu0 %v2712
  %3299 = vmatmul.mubr.f32.gmra.mxu0 %v2711
  %v3300 = vpop.f32.mrf.mxu0
  %v3301 = vadd.f32 %v3156, %v3300
  %v3302 = vpop.f32.mrf.mxu0
  %3303 = vdwg.mxu0
  %3304 = vmatprep.subr.mxu0 0.0
  %3305 = vmatpush1.msra.mxu0 0.0
  %3306 = vmatprep.subr.mxu0 0.0
  %3307 = vmatpush1.msra.mxu0 0.0
  %3308 = vmatprep.subr.mxu0 0.0
  %3309 = vmatpush1.msra.mxu0 0.0
  %3310 = vmatprep.subr.mxu0 0.0
  %3311 = vmatpush1.msra.mxu0 0.0
  %3312 = vmatprep.subr.mxu0 0.0
  %3313 = vmatpush1.msra.mxu0 0.0
  %3314 = vmatprep.subr.mxu0 0.0
  %3315 = vmatpush1.msra.mxu0 0.0
  %3316 = vmatprep.subr.mxu0 0.0
  %3317 = vmatpush1.msra.mxu0 0.0
  %3318 = vmatprep.subr.mxu0 0.0
  %3319 = vmatpush1.msra.mxu0 0.0
  %3320 = vmatprep.subr.mxu0 0.0
  %3321 = vmatpush1.msra.mxu0 0.0
  %3322 = vmatprep.subr.mxu0 0.0
  %3323 = vmatpush1.msra.mxu0 0.0
  %3324 = vmatprep.subr.mxu0 0.0
  %3325 = vmatpush1.msra.mxu0 0.0
  %3326 = vmatprep.subr.mxu0 0.0
  %3327 = vmatpush1.msra.mxu0 0.0
  %3328 = vmatprep.subr.mxu0 0.0
  %3329 = vmatpush1.msra.mxu0 %v2813
  %3330 = vmatprep.subr.mxu0 0.0
  %3331 = vmatpush1.msra.mxu0 %v2812
  %3332 = vmatprep.subr.mxu0 0.0
  %3333 = vmatpush1.msra.mxu0 %v2811
  %3334 = vmatprep.subr.mxu0 0.0
  %3335 = vmatpush1.msra.mxu0 %v2810
  %3336 = vmatprep.subr.mxu0 0.0
  %3337 = vmatpush2.msra.mxu0 0.0
  %3338 = vmatprep.subr.mxu0 0.0
  %3339 = vmatpush2.msra.mxu0 0.0
  %3340 = vmatprep.subr.mxu0 0.0
  %3341 = vmatpush2.msra.mxu0 0.0
  %3342 = vmatprep.subr.mxu0 0.0
  %3343 = vmatpush2.msra.mxu0 0.0
  %3344 = vmatprep.subr.mxu0 0.0
  %3345 = vmatpush2.msra.mxu0 0.0
  %3346 = vmatprep.subr.mxu0 0.0
  %3347 = vmatpush2.msra.mxu0 0.0
  %3348 = vmatprep.subr.mxu0 0.0
  %3349 = vmatpush2.msra.mxu0 0.0
  %3350 = vmatprep.subr.mxu0 0.0
  %3351 = vmatpush2.msra.mxu0 0.0
  %3352 = vmatprep.subr.mxu0 0.0
  %3353 = vmatpush2.msra.mxu0 0.0
  %3354 = vmatprep.subr.mxu0 0.0
  %3355 = vmatpush2.msra.mxu0 0.0
  %3356 = vmatprep.subr.mxu0 0.0
  %3357 = vmatpush2.msra.mxu0 0.0
  %3358 = vmatprep.subr.mxu0 0.0
  %3359 = vmatpush2.msra.mxu0 0.0
  %3360 = vmatprep.subr.mxu0 0.0
  %3361 = vmatpush2.msra.mxu0 0.0
  %3362 = vmatprep.subr.mxu0 0.0
  %3363 = vmatpush2.msra.mxu0 0.0
  %3364 = vmatprep.subr.mxu0 0.0
  %3365 = vmatpush2.msra.mxu0 0.0
  %3366 = vmatprep.subr.mxu0 0.0
  %3367 = vmatpush2.msra.mxu0 0.0
  %3368 = vmatprep.mubr.f32.mxu0 0.0
  %3369 = vmatmul.mubr.f32.gmra.mxu0 %v2822
  %v3370 = vpop.f32.mrf.mxu0
  %v3371 = vadd.f32 %v3226, %v3370
  %v3372 = vpop.f32.mrf.mxu0
  %3373 = vmatprep.mubr.f32.mxu0 0.0
  %3374 = vmatmul.mubr.f32.gmra.mxu0 %v2825
  %v3375 = vpop.f32.mrf.mxu0
  %v3376 = vadd.f32 %v3231, %v3375
  %v3377 = vpop.f32.mrf.mxu0
  %3378 = vmatprep.mubr.f32.mxu0 0.0
  %3379 = vmatmul.mubr.f32.gmra.mxu0 %v2828
  %v3380 = vpop.f32.mrf.mxu0
  %v3381 = vadd.f32 %v3236, %v3380
  %v3382 = vpop.f32.mrf.mxu0
  %3383 = vmatprep.mubr.f32.mxu0 0.0
  %3384 = vmatmul.mubr.f32.gmra.mxu0 %v2831
  %v3385 = vpop.f32.mrf.mxu0
  %v3386 = vadd.f32 %v3241, %v3385
  %v3387 = vpop.f32.mrf.mxu0
  %3388 = vmatprep.mubr.f32.mxu0 0.0
  %3389 = vmatmul.mubr.f32.gmra.mxu0 %v2834
  %v3390 = vpop.f32.mrf.mxu0
  %v3391 = vadd.f32 %v3246, %v3390
  %v3392 = vpop.f32.mrf.mxu0
  %3393 = vmatprep.mubr.f32.mxu0 0.0
  %3394 = vmatmul.mubr.f32.gmra.mxu0 %v2837
  %v3395 = vpop.f32.mrf.mxu0
  %v3396 = vadd.f32 %v3251, %v3395
  %v3397 = vpop.f32.mrf.mxu0
  %3398 = vmatprep.mubr.f32.mxu0 0.0
  %3399 = vmatmul.mubr.f32.gmra.mxu0 %v2840
  %v3400 = vpop.f32.mrf.mxu0
  %v3401 = vadd.f32 %v3256, %v3400
  %v3402 = vpop.f32.mrf.mxu0
  %3403 = vmatprep.mubr.f32.mxu0 0.0
  %3404 = vmatmul.mubr.f32.gmra.mxu0 %v2843
  %v3405 = vpop.f32.mrf.mxu0
  %v3406 = vadd.f32 %v3261, %v3405
  %v3407 = vpop.f32.mrf.mxu0
  %3408 = vmatprep.mubr.f32.mxu0 0.0
  %3409 = vmatmul.mubr.f32.gmra.mxu0 %v2846
  %v3410 = vpop.f32.mrf.mxu0
  %v3411 = vadd.f32 %v3266, %v3410
  %v3412 = vpop.f32.mrf.mxu0
  %3413 = vmatprep.mubr.f32.mxu0 0.0
  %3414 = vmatmul.mubr.f32.gmra.mxu0 %v2849
  %v3415 = vpop.f32.mrf.mxu0
  %v3416 = vadd.f32 %v3271, %v3415
  %v3417 = vpop.f32.mrf.mxu0
  %3418 = vmatprep.mubr.f32.mxu0 0.0
  %3419 = vmatmul.mubr.f32.gmra.mxu0 %v2852
  %v3420 = vpop.f32.mrf.mxu0
  %v3421 = vadd.f32 %v3276, %v3420
  %v3422 = vpop.f32.mrf.mxu0
  %3423 = vmatprep.mubr.f32.mxu0 0.0
  %3424 = vmatmul.mubr.f32.gmra.mxu0 %v2855
  %v3425 = vpop.f32.mrf.mxu0
  %v3426 = vadd.f32 %v3281, %v3425
  %v3427 = vpop.f32.mrf.mxu0
  %3428 = vmatprep.mubr.f32.mxu0 0.0
  %3429 = vmatmul.mubr.f32.gmra.mxu0 %v2858
  %v3430 = vpop.f32.mrf.mxu0
  %v3431 = vadd.f32 %v3286, %v3430
  %v3432 = vpop.f32.mrf.mxu0
  %3433 = vmatprep.mubr.f32.mxu0 0.0
  %3434 = vmatmul.mubr.f32.gmra.mxu0 %v2861
  %v3435 = vpop.f32.mrf.mxu0
  %v3436 = vadd.f32 %v3291, %v3435
  %v3437 = vpop.f32.mrf.mxu0
  %3438 = vmatprep.mubr.f32.mxu0 0.0
  %3439 = vmatmul.mubr.f32.gmra.mxu0 %v2864
  %v3440 = vpop.f32.mrf.mxu0
  %v3441 = vadd.f32 %v3296, %v3440
  %v3442 = vpop.f32.mrf.mxu0
  %3443 = vmatprep.mubr.f32.mxu0 0.0
  %3444 = vmatmul.mubr.f32.gmra.mxu0 %v2867
  %v3445 = vpop.f32.mrf.mxu0
  %v3446 = vadd.f32 %v3301, %v3445
  %v3447 = vpop.f32.mrf.mxu0
  %3448 = vdwg.mxu0
  %v3449 = vmax.f32 %v3371, 0.0
  %v3450 = vmax.f32 %v3376, 0.0
  %v3451 = vmax.f32 %v3381, 0.0
  %v3452 = vmax.f32 %v3386, 0.0
  %v3453 = vmax.f32 %v3391, 0.0
  %v3454 = vmax.f32 %v3396, 0.0
  %v3455 = vmax.f32 %v3401, 0.0
  %v3456 = vmax.f32 %v3406, 0.0
  %v3457 = vmax.f32 %v3411, 0.0
  %v3458 = vmax.f32 %v3416, 0.0
  %v3459 = vmax.f32 %v3421, 0.0
  %v3460 = vmax.f32 %v3426, 0.0
  %v3461 = vmax.f32 %v3431, 0.0
  %v3462 = vmax.f32 %v3436, 0.0
  %v3463 = vmax.f32 %v3441, 0.0
  %v3464 = vmax.f32 %v3446, 0.0
  %3465 = vst [vmem:[%s5] sm:$0xff] %v3449
  %3466 = vst [vmem:[%s5 + $0x8] sm:$0xff] %v3450
  %3467 = vst [vmem:[%s5 + $0x10] sm:$0xff] %v3451
  %3468 = vst [vmem:[%s5 + $0x18] sm:$0xff] %v3452
  %3469 = vst [vmem:[%s5 + $0x20] sm:$0xff] %v3453
  %3470 = vst [vmem:[%s5 + $0x28] sm:$0xff] %v3454
  %3471 = vst [vmem:[%s5 + $0x30] sm:$0xff] %v3455
  %3472 = vst [vmem:[%s5 + $0x38] sm:$0xff] %v3456
  %3473 = vst [vmem:[%s5 + $0x40] sm:$0xff] %v3457
  %3474 = vst [vmem:[%s5 + $0x48] sm:$0xff] %v3458
  %3475 = vst [vmem:[%s5 + $0x50] sm:$0xff] %v3459
  %3476 = vst [vmem:[%s5 + $0x58] sm:$0xff] %v3460
  %3477 = vst [vmem:[%s5 + $0x60] sm:$0xff] %v3461
  %3478 = vst [vmem:[%s5 + $0x68] sm:$0xff] %v3462
  %3479 = vst [vmem:[%s5 + $0x70] sm:$0xff] %v3463
  %3480 = vst [vmem:[%s5 + $0x78] sm:$0xff] %v3464
  // Predicated region
  $region22: #{sequential_forward.1} parent=0 // pred_check
    _
  $region23: #{sequential_forward.1} parent=0 // pred_check_branch
    %3482 = sbr.rel (0) target = $region25
  $region24: #{sequential_forward.1} parent=0 // pred_region
    _
  $region25: #{sequential_forward.1} parent=0 // pred_fallthru
    _
  // Predicated region
  $region26: #{sequential_forward.1} parent=0 // pred_check
    _
  $region27: #{sequential_forward.1} parent=0 // pred_check_branch
    %3484 = sbr.rel (0) target = $region29
  $region28: #{sequential_forward.1} parent=0 // pred_region
    _
  $region29: #{sequential_forward.1} parent=0 // pred_fallthru
    _

</llo_original>
